<compile_context>
chip_gen: v7x
topology: tpu7x:2x2x1
jax: 0.10.0
libtpu: 0.0.40
codegen_flags: <defaults>
</compile_context>

<pallas_src>
import functools

import jax
import jax.numpy as jnp
import numpy as np
from jax.experimental import pallas as pl
from jax.experimental.pallas import tpu as pltpu


def _round_up(x, m):
    return ((x + m - 1) // m) * m


# ----------------------------- Pallas kernel ------------------------------ #
def user_encoder_kernel(
    user_emb_ref,     # (TB, D)      bf16
    hist_cat_ref,     # (TB, L, 2D)  bf16  [item_emb | rate_emb] (wrapper concat)
    hist_mask_ref,    # (TB, L)      f32   additive -1e8 padding mask
    nbrs_emb_ref,     # (TB, N, D)   bf16
    nbrs_mask_ref,    # (TB, N)      f32
    w_ref,            # (10*D, D)    bf16  packed weight slab (resident)
    b_ref,            # (8, D)       f32   packed bias / row-vector slab
    sc_ref,           # (2,)         f32   [item_attn2.b, user_attn2.b] in SMEM
    out_ref,          # (TB, D)      f32
):
    TB, L, D2 = hist_cat_ref.shape
    D = D2 // 2
    f32 = jnp.float32
    bf16 = jnp.bfloat16

    user_emb = user_emb_ref[...]                                        # (TB, D) bf16

    # ---- rate_lin(cat([hist_item_emb, hist_rate_emb], -1)):
    #      single fused K=2D bf16 matmul (concat was done in the wrapper). ----
    x = hist_cat_ref[...].reshape(TB * L, 2 * D)
    hist = (
        jnp.dot(x, w_ref[0:2 * D, :], preferred_element_type=f32)
        + b_ref[0:1, :]
    ).reshape(TB, L, D)                                                 # f32

    def attn(items, mask, w1_items, w1_user, b1_row, w2_row, b2_scalar):
        # items: (TB, T, D) f32 or bf16; mask: (TB, T) f32 additive.
        T = items.shape[1]
        items_lo = items.astype(bf16)                    # MXU inputs in bf16
        # attn1(cat([items, user])) with the user half hoisted out of T.
        u_proj = jnp.dot(user_emb, w1_user, preferred_element_type=f32)  # (TB, D)
        h = jnp.dot(items_lo.reshape(TB * T, D), w1_items,
                    preferred_element_type=f32).reshape(TB, T, D)
        h = jnp.maximum(h + u_proj[:, None, :] + b1_row.reshape(1, 1, D), 0.0)
        # attn2 (D -> 1) as an f32 lane reduction; scalar bias from SMEM.
        s = jnp.sum(h * w2_row.reshape(1, 1, D), axis=-1) + b2_scalar + mask
        # softmax over T (dim=1 in the PyTorch code); EUP reciprocal.
        m = jnp.max(s, axis=1, keepdims=True)
        e = jnp.exp(s - m)
        a = e * pl.reciprocal(jnp.sum(e, axis=1, keepdims=True), approx=True)
        # Weighted sum as VPU broadcast-multiply + sublane reduce over T
        # (the previous M=1 'bqt,btd' MXU contraction was a regression here).
        return jnp.sum(a[:, :, None] * items.astype(f32), axis=1)       # (TB, D)

    h_item = attn(hist, hist_mask_ref[...],
                  w_ref[2 * D:3 * D, :], w_ref[3 * D:4 * D, :],
                  b_ref[1, :], b_ref[5, :], sc_ref[0])
    h_social = attn(nbrs_emb_ref[...], nbrs_mask_ref[...],
                    w_ref[4 * D:5 * D, :], w_ref[5 * D:6 * D, :],
                    b_ref[2, :], b_ref[6, :], sc_ref[1])

    # ---- fuse_lin + ReLU, then self_lin: two K=D dots + add each
    #      (no in-kernel lane-axis concat). ----
    h_fuse = jnp.maximum(
        jnp.dot(h_item.astype(bf16), w_ref[6 * D:7 * D, :],
                preferred_element_type=f32)
        + jnp.dot(h_social.astype(bf16), w_ref[7 * D:8 * D, :],
                  preferred_element_type=f32)
        + b_ref[3:4, :],
        0.0,
    )
    out = (
        jnp.dot(h_fuse.astype(bf16), w_ref[8 * D:9 * D, :],
                preferred_element_type=f32)
        + jnp.dot(user_emb, w_ref[9 * D:10 * D, :],
                  preferred_element_type=f32)
        + b_ref[4:5, :]
    )
    out_ref[...] = out.astype(out_ref.dtype)


# ------------------------------- wrapper ----------------------------------- #
@functools.partial(jax.jit, static_argnames=("tile_b",))
def user_encoder_rate(params, user, user_hist, user_nbrs, *, tile_b=256):
    D = params["user_embs"].shape[1]
    f32, bf16 = jnp.float32, jnp.bfloat16

    # ---- glue: embedding gathers, lane concat and padding masks (XLA). ----
    user_emb = params["user_embs"][user].astype(bf16)                    # (B, D)
    hist_item_ids = user_hist[:, :, 0].astype(jnp.int32)                 # (B, L)
    hist_rate_ids = user_hist[:, :, 1]
    hist_cat_emb = jnp.concatenate(
        [params["item_embs"][hist_item_ids],
         params["rate_embs"][hist_rate_ids]], axis=-1).astype(bf16)      # (B, L, 2D)
    nbrs_ids = user_nbrs.astype(jnp.int32)                               # (B, N)
    nbrs_emb = params["user_embs"][nbrs_ids].astype(bf16)                # (B, N, D)
    hist_mask = jnp.where(hist_item_ids == 0, f32(-1e8), f32(0.0))       # (B, L)
    nbrs_mask = jnp.where(nbrs_ids == 0, f32(-1e8), f32(0.0))            # (B, N)

    B, L = hist_item_ids.shape
    N = nbrs_ids.shape[1]

    # ---- batch tile: 16-aligned (bf16 sublane packing), clamped to a per-step
    #      VMEM budget so it fits v7x's 64 MiB (32 MiB scoped) as well. ----
    align = 16
    tb = _round_up(min(tile_b, _round_up(B, align)), align)
    budget = 24 * 1024 * 1024
    while tb > align:
        per_step = tb * ((2 * L * D + N * D + D) * 2      # bf16 3D/2D inputs
                         + (L + N + D) * 4)               # f32 masks + output
        if 2 * per_step <= budget:                        # double-buffered
            break
        tb = _round_up(tb // 2, align)
    Bp = _round_up(B, tb)
    pad = Bp - B
    if pad:
        user_emb = jnp.pad(user_emb, ((0, pad), (0, 0)))
        hist_cat_emb = jnp.pad(hist_cat_emb, ((0, pad), (0, 0), (0, 0)))
        hist_mask = jnp.pad(hist_mask, ((0, pad), (0, 0)))
        nbrs_emb = jnp.pad(nbrs_emb, ((0, pad), (0, 0), (0, 0)))
        nbrs_mask = jnp.pad(nbrs_mask, ((0, pad), (0, 0)))

    # ---- pack parameters: one bf16 weight slab, one f32 bias slab, SMEM
    #      scalars.  Weight slab rows (PyTorch (out,in) -> transposed (in,out)):
    #        [0:2D)  rate_lin      [2D:3D) item_attn1(items) [3D:4D) item_attn1(user)
    #        [4D:5D) user_attn1(items) [5D:6D) user_attn1(user)
    #        [6D:7D) fuse_lin(h_item)  [7D:8D) fuse_lin(h_social)
    #        [8D:9D) self_lin(h_fuse)  [9D:10D) self_lin(user)
    def t(w):
        return jnp.asarray(w, f32).T

    w_slab = jnp.concatenate(
        [t(params["rate_lin.w"]), t(params["item_attn1.w"]),
         t(params["user_attn1.w"]), t(params["fuse_lin.w"]),
         t(params["self_lin.w"])], axis=0).astype(bf16)                  # (10D, D)
    b_slab = jnp.stack(
        [params["rate_lin.b"], params["item_attn1.b"], params["user_attn1.b"],
         params["fuse_lin.b"], params["self_lin.b"],
         params["item_attn2.w"].reshape(-1), params["user_attn2.w"].reshape(-1),
         jnp.zeros((D,), f32)], axis=0).astype(f32)                      # (8, D)
    scalars = jnp.concatenate(
        [params["item_attn2.b"].reshape(1),
         params["user_attn2.b"].reshape(1)]).astype(f32)                 # (2,)

    grid = (Bp // tb,)
    out = pl.pallas_call(
        user_encoder_kernel,
        out_shape=jax.ShapeDtypeStruct((Bp, D), f32),
        grid_spec=pltpu.PrefetchScalarGridSpec(
            num_scalar_prefetch=0,
            grid=grid,
            in_specs=[
                pl.BlockSpec((tb, D), lambda i: (i, 0)),
                pl.BlockSpec((tb, L, 2 * D), lambda i: (i, 0, 0)),
                pl.BlockSpec((tb, L), lambda i: (i, 0)),
                pl.BlockSpec((tb, N, D), lambda i: (i, 0, 0)),
                pl.BlockSpec((tb, N), lambda i: (i, 0)),
                # Parameter slabs: constant index_map -> resident across steps.
                pl.BlockSpec((10 * D, D), lambda i: (0, 0)),
                pl.BlockSpec((8, D), lambda i: (0, 0)),
                pl.BlockSpec(memory_space=pltpu.MemorySpace.SMEM),
            ],
            out_specs=pl.BlockSpec((tb, D), lambda i: (i, 0)),
        ),
        compiler_params=pltpu.CompilerParams(
            dimension_semantics=("parallel",),
            vmem_limit_bytes=32 * 1024 * 1024,
        ),
    )(user_emb, hist_cat_emb, hist_mask, nbrs_emb, nbrs_mask,
      w_slab, b_slab, scalars)
    return out[:B]


# --------------------------- pure-JAX reference ---------------------------- #
def reference(params, user, user_hist, user_nbrs):
    user_emb = params["user_embs"][user]
    hist_item = user_hist[:, :, 0]
    hist_rate = user_hist[:, :, 1]
    hie = params["item_embs"][hist_item]
    hre = params["rate_embs"][hist_rate]
    hist = (jnp.concatenate([hie, hre], -1) @ params["rate_lin.w"].T
            + params["rate_lin.b"])

    def attn(items, mask, w1, b1, w2, b2):
        u = jnp.broadcast_to(user_emb[:, None, :], items.shape)
        h = jnp.concatenate([items, u], -1)
        h = jnp.maximum(h @ w1.T + b1, 0.0)
        s = (h @ w2.T)[..., 0] + b2[0] + mask
        a = jax.nn.softmax(s, axis=1)
        return jnp.sum(a[:, :, None] * items, axis=1)

    hist_mask = jnp.where(hist_item == 0, -1e8, 0.0).astype(jnp.float32)
    nbrs_mask = jnp.where(user_nbrs == 0, -1e8, 0.0).astype(jnp.float32)
    h_item = attn(hist, hist_mask, params["item_attn1.w"],
                  params["item_attn1.b"], params["item_attn2.w"],
                  params["item_attn2.b"])
    h_soc = attn(params["user_embs"][user_nbrs], nbrs_mask,
                 params["user_attn1.w"], params["user_attn1.b"],
                 params["user_attn2.w"], params["user_attn2.b"])
    h = jnp.maximum(jnp.concatenate([h_item, h_soc], -1) @ params["fuse_lin.w"].T
                    + params["fuse_lin.b"], 0.0)
    return (jnp.concatenate([h, user_emb], -1) @ params["self_lin.w"].T
            + params["self_lin.b"])


# ------------------------------- main -------------------------------------- #
if __name__ == "__main__":
    D = 32          # edim
    B = 4           # batch
    L = 8           # history length
    N = 8           # number of neighbors
    NUM_USERS, NUM_ITEMS, NUM_RATES = 50, 60, 6

    key = jax.random.PRNGKey(0)
    ks = jax.random.split(key, 32)

    def nrm(k, shape, scale=0.1):
        return (scale * jax.random.normal(k, shape)).astype(jnp.float32)

    params = {
        # embedding tables
        "user_embs": nrm(ks[0], (NUM_USERS, D)),
        "item_embs": nrm(ks[1], (NUM_ITEMS, D)),
        "rate_embs": nrm(ks[2], (NUM_RATES, D)),
        # nn.Linear layout: weight (out, in), bias (out,)
        "rate_lin.w": nrm(ks[3], (D, 2 * D)), "rate_lin.b": nrm(ks[4], (D,)),
        "item_attn1.w": nrm(ks[5], (D, 2 * D)), "item_attn1.b": nrm(ks[6], (D,)),
        "item_attn2.w": nrm(ks[7], (1, D)), "item_attn2.b": nrm(ks[8], (1,)),
        "user_attn1.w": nrm(ks[9], (D, 2 * D)), "user_attn1.b": nrm(ks[10], (D,)),
        "user_attn2.w": nrm(ks[11], (1, D)), "user_attn2.b": nrm(ks[12], (1,)),
        "fuse_lin.w": nrm(ks[13], (D, 2 * D)), "fuse_lin.b": nrm(ks[14], (D,)),
        "self_lin.w": nrm(ks[15], (D, 2 * D)), "self_lin.b": nrm(ks[16], (D,)),
    }

    user = jax.random.randint(ks[20], (B,), 1, NUM_USERS, dtype=jnp.int32)
    # history: [:, :, 0] = item ids (0 == padding), [:, :, 1] = rate ids
    hist_items = jax.random.randint(ks[21], (B, L), 0, NUM_ITEMS, dtype=jnp.int32)
    hist_rates = jax.random.randint(ks[22], (B, L), 0, NUM_RATES, dtype=jnp.int32)
    user_hist = jnp.stack([hist_items, hist_rates], axis=-1)          # (B, L, 2)
    user_nbrs = jax.random.randint(ks[23], (B, N), 0, NUM_USERS, dtype=jnp.int32)

    out = user_encoder_rate(params, user, user_hist, user_nbrs)
    out = jax.block_until_ready(out)

    ref = jax.block_until_ready(reference(params, user, user_hist, user_nbrs))
    np.testing.assert_allclose(np.asarray(out), np.asarray(ref),
                               rtol=2e-2, atol=2e-2)

    print("KERNEL_OK")
</pallas_src>

<mosaic_0001>
module attributes {stable_mosaic.version = 11 : i64} {
  func.func @user_encoder_kernel(%arg0: i32, %arg1: memref<16x32xbf16, #tpu.memory_space<vmem>>, %arg2: memref<16x8x64xbf16, #tpu.memory_space<vmem>>, %arg3: memref<16x8xf32, #tpu.memory_space<vmem>>, %arg4: memref<16x8x32xbf16, #tpu.memory_space<vmem>>, %arg5: memref<16x8xf32, #tpu.memory_space<vmem>>, %arg6: memref<320x32xbf16, #tpu.memory_space<vmem>>, %arg7: memref<8x32xf32, #tpu.memory_space<vmem>>, %arg8: memref<2xf32, #tpu.memory_space<smem>>, %arg9: memref<16x32xf32, #tpu.memory_space<vmem>>) attributes {dimension_semantics = [#tpu.dimension_semantics<parallel>], iteration_bounds = array<i64: 1>, scalar_prefetch = 0 : i64, scratch_operands = 0 : i64, tpu.core_type = #tpu.core_type<tc>, window_params = [{transform_indices = @transform_0, window_bounds = array<i64: 16, 32>}, {transform_indices = @transform_1, window_bounds = array<i64: 16, 8, 64>}, {transform_indices = @transform_2, window_bounds = array<i64: 16, 8>}, {transform_indices = @transform_3, window_bounds = array<i64: 16, 8, 32>}, {transform_indices = @transform_4, window_bounds = array<i64: 16, 8>}, {pipeline_mode = #tpu.pipeline_mode<synchronous>, transform_indices = @transform_5, window_bounds = array<i64: 320, 32>}, {pipeline_mode = #tpu.pipeline_mode<synchronous>, transform_indices = @transform_6, window_bounds = array<i64: 8, 32>}, {transform_indices = @transform_7, window_bounds = array<i64: 2>}, {transform_indices = @transform_8, window_bounds = array<i64: 16, 32>}]} {
    %c0 = arith.constant 0 : index
    %c0_0 = arith.constant 0 : index
    %0 = vector.load %arg1[%c0, %c0_0] : memref<16x32xbf16, #tpu.memory_space<vmem>>, vector<16x32xbf16>
    %c0_1 = arith.constant 0 : index
    %c0_2 = arith.constant 0 : index
    %c0_3 = arith.constant 0 : index
    %1 = vector.load %arg2[%c0_1, %c0_2, %c0_3] : memref<16x8x64xbf16, #tpu.memory_space<vmem>>, vector<16x8x64xbf16>
    %2 = vector.shape_cast %1 : vector<16x8x64xbf16> to vector<128x64xbf16>
    %c0_4 = arith.constant 0 : index
    %c0_5 = arith.constant 0 : index
    %3 = vector.load %arg6[%c0_4, %c0_5] : memref<320x32xbf16, #tpu.memory_space<vmem>>, vector<64x32xbf16>
    %cst = arith.constant dense<0.000000e+00> : vector<128x32xf32>
    %4 = tpu.matmul %2, %3, %cst {dimension_numbers = #tpu.dot_dimension_numbers<[1], [0], [0], [1], [0, 0, 1, 1], [], []>} : vector<128x64xbf16>, vector<64x32xbf16>, vector<128x32xf32> -> vector<128x32xf32>
    %c0_6 = arith.constant 0 : index
    %c0_7 = arith.constant 0 : index
    %5 = vector.load %arg7[%c0_6, %c0_7] : memref<8x32xf32, #tpu.memory_space<vmem>>, vector<1x32xf32>
    %6 = vector.broadcast %5 : vector<1x32xf32> to vector<128x32xf32>
    %7 = arith.addf %4, %6 : vector<128x32xf32>
    %8 = vector.shape_cast %7 : vector<128x32xf32> to vector<16x8x32xf32>
    %c0_8 = arith.constant 0 : index
    %c0_9 = arith.constant 0 : index
    %9 = vector.load %arg3[%c0_8, %c0_9] : memref<16x8xf32, #tpu.memory_space<vmem>>, vector<16x8xf32>
    %c64 = arith.constant 64 : index
    %c0_10 = arith.constant 0 : index
    %10 = vector.load %arg6[%c64, %c0_10] : memref<320x32xbf16, #tpu.memory_space<vmem>>, vector<32x32xbf16>
    %c96 = arith.constant 96 : index
    %c0_11 = arith.constant 0 : index
    %11 = vector.load %arg6[%c96, %c0_11] : memref<320x32xbf16, #tpu.memory_space<vmem>>, vector<32x32xbf16>
    %c1 = arith.constant 1 : index
    %c0_12 = arith.constant 0 : index
    %12 = vector.load %arg7[%c1, %c0_12] : memref<8x32xf32, #tpu.memory_space<vmem>>, vector<1x32xf32>
    %13 = vector.shape_cast %12 : vector<1x32xf32> to vector<32xf32>
    %c5 = arith.constant 5 : index
    %c0_13 = arith.constant 0 : index
    %14 = vector.load %arg7[%c5, %c0_13] : memref<8x32xf32, #tpu.memory_space<vmem>>, vector<1x32xf32>
    %15 = vector.shape_cast %14 : vector<1x32xf32> to vector<32xf32>
    %c0_14 = arith.constant 0 : index
    %16 = memref.load %arg8[%c0_14] : memref<2xf32, #tpu.memory_space<smem>>
    %17 = arith.truncf %8 : vector<16x8x32xf32> to vector<16x8x32xbf16>
    %cst_15 = arith.constant dense<0.000000e+00> : vector<16x32xf32>
    %18 = tpu.matmul %0, %11, %cst_15 {dimension_numbers = #tpu.dot_dimension_numbers<[1], [0], [0], [1], [0, 0, 1, 1], [], []>} : vector<16x32xbf16>, vector<32x32xbf16>, vector<16x32xf32> -> vector<16x32xf32>
    %19 = vector.shape_cast %17 : vector<16x8x32xbf16> to vector<128x32xbf16>
    %cst_16 = arith.constant dense<0.000000e+00> : vector<128x32xf32>
    %20 = tpu.matmul %19, %10, %cst_16 {dimension_numbers = #tpu.dot_dimension_numbers<[1], [0], [0], [1], [0, 0, 1, 1], [], []>} : vector<128x32xbf16>, vector<32x32xbf16>, vector<128x32xf32> -> vector<128x32xf32>
    %21 = vector.shape_cast %20 : vector<128x32xf32> to vector<16x8x32xf32>
    %22 = vector.shape_cast %18 : vector<16x32xf32> to vector<16x1x32xf32>
    %23 = vector.broadcast %22 : vector<16x1x32xf32> to vector<16x8x32xf32>
    %24 = arith.addf %21, %23 : vector<16x8x32xf32>
    %25 = vector.shape_cast %13 : vector<32xf32> to vector<1x1x32xf32>
    %26 = vector.broadcast %25 : vector<1x1x32xf32> to vector<16x8x32xf32>
    %27 = arith.addf %24, %26 : vector<16x8x32xf32>
    %cst_17 = arith.constant 0.000000e+00 : f32
    %28 = vector.broadcast %cst_17 : f32 to vector<16x8x32xf32>
    %29 = arith.maximumf %27, %28 : vector<16x8x32xf32>
    %30 = vector.shape_cast %15 : vector<32xf32> to vector<1x1x32xf32>
    %31 = vector.broadcast %30 : vector<1x1x32xf32> to vector<16x8x32xf32>
    %32 = arith.mulf %29, %31 : vector<16x8x32xf32>
    %cst_18 = arith.constant dense<0.000000e+00> : vector<16x8xf32>
    %33 = vector.multi_reduction <add>, %32, %cst_18 [2] : vector<16x8x32xf32> to vector<16x8xf32>
    %34 = vector.broadcast %16 : f32 to vector<16x8xf32>
    %35 = arith.addf %33, %34 : vector<16x8xf32>
    %36 = arith.addf %35, %9 : vector<16x8xf32>
    %cst_19 = arith.constant dense<0xFF800000> : vector<16xf32>
    %37 = vector.multi_reduction <maximumf>, %36, %cst_19 [1] : vector<16x8xf32> to vector<16xf32>
    %38 = vector.shape_cast %37 : vector<16xf32> to vector<16x1xf32>
    %39 = vector.broadcast %38 : vector<16x1xf32> to vector<16x8xf32>
    %40 = arith.subf %36, %39 : vector<16x8xf32>
    %41 = math.exp %40 : vector<16x8xf32>
    %cst_20 = arith.constant dense<0.000000e+00> : vector<16xf32>
    %42 = vector.multi_reduction <add>, %41, %cst_20 [1] : vector<16x8xf32> to vector<16xf32>
    %43 = vector.shape_cast %42 : vector<16xf32> to vector<16x1xf32>
    %44 = tpu.reciprocal %43 {approx = true} : vector<16x1xf32> -> vector<16x1xf32>
    %45 = vector.broadcast %44 : vector<16x1xf32> to vector<16x8xf32>
    %46 = arith.mulf %41, %45 : vector<16x8xf32>
    %47 = vector.shape_cast %46 : vector<16x8xf32> to vector<16x8x1xf32>
    %48 = vector.broadcast %47 : vector<16x8x1xf32> to vector<16x8x32xf32>
    %49 = arith.mulf %48, %8 : vector<16x8x32xf32>
    %cst_21 = arith.constant dense<0.000000e+00> : vector<16x32xf32>
    %50 = vector.multi_reduction <add>, %49, %cst_21 [1] : vector<16x8x32xf32> to vector<16x32xf32>
    %c0_22 = arith.constant 0 : index
    %c0_23 = arith.constant 0 : index
    %c0_24 = arith.constant 0 : index
    %51 = vector.load %arg4[%c0_22, %c0_23, %c0_24] : memref<16x8x32xbf16, #tpu.memory_space<vmem>>, vector<16x8x32xbf16>
    %c0_25 = arith.constant 0 : index
    %c0_26 = arith.constant 0 : index
    %52 = vector.load %arg5[%c0_25, %c0_26] : memref<16x8xf32, #tpu.memory_space<vmem>>, vector<16x8xf32>
    %c128 = arith.constant 128 : index
    %c0_27 = arith.constant 0 : index
    %53 = vector.load %arg6[%c128, %c0_27] : memref<320x32xbf16, #tpu.memory_space<vmem>>, vector<32x32xbf16>
    %c160 = arith.constant 160 : index
    %c0_28 = arith.constant 0 : index
    %54 = vector.load %arg6[%c160, %c0_28] : memref<320x32xbf16, #tpu.memory_space<vmem>>, vector<32x32xbf16>
    %c2 = arith.constant 2 : index
    %c0_29 = arith.constant 0 : index
    %55 = vector.load %arg7[%c2, %c0_29] : memref<8x32xf32, #tpu.memory_space<vmem>>, vector<1x32xf32>
    %56 = vector.shape_cast %55 : vector<1x32xf32> to vector<32xf32>
    %c6 = arith.constant 6 : index
    %c0_30 = arith.constant 0 : index
    %57 = vector.load %arg7[%c6, %c0_30] : memref<8x32xf32, #tpu.memory_space<vmem>>, vector<1x32xf32>
    %58 = vector.shape_cast %57 : vector<1x32xf32> to vector<32xf32>
    %c1_31 = arith.constant 1 : index
    %59 = memref.load %arg8[%c1_31] : memref<2xf32, #tpu.memory_space<smem>>
    %cst_32 = arith.constant dense<0.000000e+00> : vector<16x32xf32>
    %60 = tpu.matmul %0, %54, %cst_32 {dimension_numbers = #tpu.dot_dimension_numbers<[1], [0], [0], [1], [0, 0, 1, 1], [], []>} : vector<16x32xbf16>, vector<32x32xbf16>, vector<16x32xf32> -> vector<16x32xf32>
    %61 = vector.shape_cast %51 : vector<16x8x32xbf16> to vector<128x32xbf16>
    %cst_33 = arith.constant dense<0.000000e+00> : vector<128x32xf32>
    %62 = tpu.matmul %61, %53, %cst_33 {dimension_numbers = #tpu.dot_dimension_numbers<[1], [0], [0], [1], [0, 0, 1, 1], [], []>} : vector<128x32xbf16>, vector<32x32xbf16>, vector<128x32xf32> -> vector<128x32xf32>
    %63 = vector.shape_cast %62 : vector<128x32xf32> to vector<16x8x32xf32>
    %64 = vector.shape_cast %60 : vector<16x32xf32> to vector<16x1x32xf32>
    %65 = vector.broadcast %64 : vector<16x1x32xf32> to vector<16x8x32xf32>
    %66 = arith.addf %63, %65 : vector<16x8x32xf32>
    %67 = vector.shape_cast %56 : vector<32xf32> to vector<1x1x32xf32>
    %68 = vector.broadcast %67 : vector<1x1x32xf32> to vector<16x8x32xf32>
    %69 = arith.addf %66, %68 : vector<16x8x32xf32>
    %cst_34 = arith.constant 0.000000e+00 : f32
    %70 = vector.broadcast %cst_34 : f32 to vector<16x8x32xf32>
    %71 = arith.maximumf %69, %70 : vector<16x8x32xf32>
    %72 = vector.shape_cast %58 : vector<32xf32> to vector<1x1x32xf32>
    %73 = vector.broadcast %72 : vector<1x1x32xf32> to vector<16x8x32xf32>
    %74 = arith.mulf %71, %73 : vector<16x8x32xf32>
    %cst_35 = arith.constant dense<0.000000e+00> : vector<16x8xf32>
    %75 = vector.multi_reduction <add>, %74, %cst_35 [2] : vector<16x8x32xf32> to vector<16x8xf32>
    %76 = vector.broadcast %59 : f32 to vector<16x8xf32>
    %77 = arith.addf %75, %76 : vector<16x8xf32>
    %78 = arith.addf %77, %52 : vector<16x8xf32>
    %cst_36 = arith.constant dense<0xFF800000> : vector<16xf32>
    %79 = vector.multi_reduction <maximumf>, %78, %cst_36 [1] : vector<16x8xf32> to vector<16xf32>
    %80 = vector.shape_cast %79 : vector<16xf32> to vector<16x1xf32>
    %81 = vector.broadcast %80 : vector<16x1xf32> to vector<16x8xf32>
    %82 = arith.subf %78, %81 : vector<16x8xf32>
    %83 = math.exp %82 : vector<16x8xf32>
    %cst_37 = arith.constant dense<0.000000e+00> : vector<16xf32>
    %84 = vector.multi_reduction <add>, %83, %cst_37 [1] : vector<16x8xf32> to vector<16xf32>
    %85 = vector.shape_cast %84 : vector<16xf32> to vector<16x1xf32>
    %86 = tpu.reciprocal %85 {approx = true} : vector<16x1xf32> -> vector<16x1xf32>
    %87 = vector.broadcast %86 : vector<16x1xf32> to vector<16x8xf32>
    %88 = arith.mulf %83, %87 : vector<16x8xf32>
    %89 = vector.shape_cast %88 : vector<16x8xf32> to vector<16x8x1xf32>
    %90 = arith.extf %51 : vector<16x8x32xbf16> to vector<16x8x32xf32>
    %91 = vector.broadcast %89 : vector<16x8x1xf32> to vector<16x8x32xf32>
    %92 = arith.mulf %91, %90 : vector<16x8x32xf32>
    %cst_38 = arith.constant dense<0.000000e+00> : vector<16x32xf32>
    %93 = vector.multi_reduction <add>, %92, %cst_38 [1] : vector<16x8x32xf32> to vector<16x32xf32>
    %94 = arith.truncf %50 : vector<16x32xf32> to vector<16x32xbf16>
    %c192 = arith.constant 192 : index
    %c0_39 = arith.constant 0 : index
    %95 = vector.load %arg6[%c192, %c0_39] : memref<320x32xbf16, #tpu.memory_space<vmem>>, vector<32x32xbf16>
    %cst_40 = arith.constant dense<0.000000e+00> : vector<16x32xf32>
    %96 = tpu.matmul %94, %95, %cst_40 {dimension_numbers = #tpu.dot_dimension_numbers<[1], [0], [0], [1], [0, 0, 1, 1], [], []>} : vector<16x32xbf16>, vector<32x32xbf16>, vector<16x32xf32> -> vector<16x32xf32>
    %97 = arith.truncf %93 : vector<16x32xf32> to vector<16x32xbf16>
    %c224 = arith.constant 224 : index
    %c0_41 = arith.constant 0 : index
    %98 = vector.load %arg6[%c224, %c0_41] : memref<320x32xbf16, #tpu.memory_space<vmem>>, vector<32x32xbf16>
    %cst_42 = arith.constant dense<0.000000e+00> : vector<16x32xf32>
    %99 = tpu.matmul %97, %98, %cst_42 {dimension_numbers = #tpu.dot_dimension_numbers<[1], [0], [0], [1], [0, 0, 1, 1], [], []>} : vector<16x32xbf16>, vector<32x32xbf16>, vector<16x32xf32> -> vector<16x32xf32>
    %100 = arith.addf %96, %99 : vector<16x32xf32>
    %c3 = arith.constant 3 : index
    %c0_43 = arith.constant 0 : index
    %101 = vector.load %arg7[%c3, %c0_43] : memref<8x32xf32, #tpu.memory_space<vmem>>, vector<1x32xf32>
    %102 = vector.broadcast %101 : vector<1x32xf32> to vector<16x32xf32>
    %103 = arith.addf %100, %102 : vector<16x32xf32>
    %cst_44 = arith.constant 0.000000e+00 : f32
    %104 = vector.broadcast %cst_44 : f32 to vector<16x32xf32>
    %105 = arith.maximumf %103, %104 : vector<16x32xf32>
    %106 = arith.truncf %105 : vector<16x32xf32> to vector<16x32xbf16>
    %c256 = arith.constant 256 : index
    %c0_45 = arith.constant 0 : index
    %107 = vector.load %arg6[%c256, %c0_45] : memref<320x32xbf16, #tpu.memory_space<vmem>>, vector<32x32xbf16>
    %cst_46 = arith.constant dense<0.000000e+00> : vector<16x32xf32>
    %108 = tpu.matmul %106, %107, %cst_46 {dimension_numbers = #tpu.dot_dimension_numbers<[1], [0], [0], [1], [0, 0, 1, 1], [], []>} : vector<16x32xbf16>, vector<32x32xbf16>, vector<16x32xf32> -> vector<16x32xf32>
    %c288 = arith.constant 288 : index
    %c0_47 = arith.constant 0 : index
    %109 = vector.load %arg6[%c288, %c0_47] : memref<320x32xbf16, #tpu.memory_space<vmem>>, vector<32x32xbf16>
    %cst_48 = arith.constant dense<0.000000e+00> : vector<16x32xf32>
    %110 = tpu.matmul %0, %109, %cst_48 {dimension_numbers = #tpu.dot_dimension_numbers<[1], [0], [0], [1], [0, 0, 1, 1], [], []>} : vector<16x32xbf16>, vector<32x32xbf16>, vector<16x32xf32> -> vector<16x32xf32>
    %111 = arith.addf %108, %110 : vector<16x32xf32>
    %c4 = arith.constant 4 : index
    %c0_49 = arith.constant 0 : index
    %112 = vector.load %arg7[%c4, %c0_49] : memref<8x32xf32, #tpu.memory_space<vmem>>, vector<1x32xf32>
    %113 = vector.broadcast %112 : vector<1x32xf32> to vector<16x32xf32>
    %114 = arith.addf %111, %113 : vector<16x32xf32>
    %c0_50 = arith.constant 0 : index
    %c0_51 = arith.constant 0 : index
    %115 = vector.load %arg9[%c0_50, %c0_51] : memref<16x32xf32, #tpu.memory_space<vmem>>, vector<16x32xf32>
    tpu.vector_store %arg9[%c0_50, %c0_51], %114 {strides = array<i32>} : memref<16x32xf32, #tpu.memory_space<vmem>>, vector<16x32xf32>,
    return
  }
  func.func @transform_0(%arg0: i32) -> (i32, i32) {
    %c0_i32 = arith.constant 0 : i32
    %c0_i32_0 = arith.constant 0 : i32
    return %arg0, %c0_i32 : i32, i32
  }
  func.func @transform_1(%arg0: i32) -> (i32, i32, i32) {
    %c0_i32 = arith.constant 0 : i32
    %c0_i32_0 = arith.constant 0 : i32
    %c0_i32_1 = arith.constant 0 : i32
    return %arg0, %c0_i32, %c0_i32_0 : i32, i32, i32
  }
  func.func @transform_2(%arg0: i32) -> (i32, i32) {
    %c0_i32 = arith.constant 0 : i32
    %c0_i32_0 = arith.constant 0 : i32
    return %arg0, %c0_i32 : i32, i32
  }
  func.func @transform_3(%arg0: i32) -> (i32, i32, i32) {
    %c0_i32 = arith.constant 0 : i32
    %c0_i32_0 = arith.constant 0 : i32
    %c0_i32_1 = arith.constant 0 : i32
    return %arg0, %c0_i32, %c0_i32_0 : i32, i32, i32
  }
  func.func @transform_4(%arg0: i32) -> (i32, i32) {
    %c0_i32 = arith.constant 0 : i32
    %c0_i32_0 = arith.constant 0 : i32
    return %arg0, %c0_i32 : i32, i32
  }
  func.func @transform_5(%arg0: i32) -> (i32, i32) {
    %c0_i32 = arith.constant 0 : i32
    %c0_i32_0 = arith.constant 0 : i32
    %c0_i32_1 = arith.constant 0 : i32
    return %c0_i32, %c0_i32_0 : i32, i32
  }
  func.func @transform_6(%arg0: i32) -> (i32, i32) {
    %c0_i32 = arith.constant 0 : i32
    %c0_i32_0 = arith.constant 0 : i32
    %c0_i32_1 = arith.constant 0 : i32
    return %c0_i32, %c0_i32_0 : i32, i32
  }
  func.func @transform_7(%arg0: i32) -> i32 {
    %c0_i32 = arith.constant 0 : i32
    %c0_i32_0 = arith.constant 0 : i32
    return %c0_i32 : i32
  }
  func.func @transform_8(%arg0: i32) -> (i32, i32) {
    %c0_i32 = arith.constant 0 : i32
    %c0_i32_0 = arith.constant 0 : i32
    return %arg0, %c0_i32 : i32, i32
  }
}

</mosaic_0001>

<llo_original>
// kernel: user_encoder_rate.1
$region0: #{user_encoder_rate.1}
  #allocation0 [shape = 'u32[]', space=smem, size = 0x4, offset = 0x4, fixed_abs, tag = 'smem constant byte address 0x4 - core index']
  #allocation1 [shape = 'u32[144,128]{1,0:T(1,128)}', space=vmem, size = 0x12000, scoped, tag = 'internal scratch']
  %s0 = inlined_call_operand.vmem [shape: bf16[16,32], index: 0, kind: input, shape index: {}]
  %s1 = inlined_call_operand.vmem [shape: bf16[16,8,64], index: 1, kind: input, shape index: {}]
  %s2 = inlined_call_operand.vmem [shape: f32[16,8], index: 2, kind: input, shape index: {}]
  %s3 = inlined_call_operand.vmem [shape: bf16[16,8,32], index: 3, kind: input, shape index: {}]
  %s4 = inlined_call_operand.vmem [shape: f32[16,8], index: 4, kind: input, shape index: {}]
  %s5 = inlined_call_operand.vmem [shape: bf16[320,32], index: 5, kind: input, shape index: {}]
  %s6 = inlined_call_operand.vmem [shape: f32[8,32], index: 6, kind: input, shape index: {}]
  %s7 = inlined_call_operand.vmem [shape: f32[2], index: 7, kind: input, shape index: {}]
  %s8 = inlined_call_operand.vmem [shape: f32[16,32], index: 8, kind: output, shape index: {}]
  %s9 = sld [smem:[#allocation0]]
  $region46: #{user_encoder_rate.1} parent=0
    _
  %s11 = ssub.s32 1, %s9
  %s12 = scalar_select 0, %s11, %s9
  $region1: #{user_encoder_rate.1} parent=0
    #allocation2 [shape = 'u8[512]{0}', space=smem, size = 0x200, scoped, tag = 'input window, operand 7, single buffered']
    #allocation3 [shape = 's32[1]{0}', space=sflag, size = 0x4, scoped, tag = 'scoped memory for user_encoder_rate.1']
    %13 = vsyncpa [#allocation3], 0
    // Predicated region
    $region2: #{user_encoder_rate.1} parent=1 // pred_check
      _
    $region3: #{user_encoder_rate.1} parent=1 // pred_check_branch
      %15 = sbr.rel (0) target = $region5
    $region4: #{user_encoder_rate.1} parent=1 // pred_region
      _
    $region5: #{user_encoder_rate.1} parent=1 // pred_fallthru
      _
    // Predicated region
    $region6: #{user_encoder_rate.1} parent=1 // pred_check
      _
    $region7: #{user_encoder_rate.1} parent=1 // pred_check_branch
      %17 = sbr.rel (0) target = $region9
    $region8: #{user_encoder_rate.1} parent=1 // pred_region
      _
    $region9: #{user_encoder_rate.1} parent=1 // pred_fallthru
      _
    // Predicated region
    $region10: #{user_encoder_rate.1} parent=1 // pred_check
      _
    $region11: #{user_encoder_rate.1} parent=1 // pred_check_branch
      %19 = sbr.rel (0) target = $region13
    $region12: #{user_encoder_rate.1} parent=1 // pred_region
      _
    $region13: #{user_encoder_rate.1} parent=1 // pred_fallthru
      _
    // Predicated region
    $region14: #{user_encoder_rate.1} parent=1 // pred_check
      _
    $region15: #{user_encoder_rate.1} parent=1 // pred_check_branch
      %21 = sbr.rel (0) target = $region17
    $region16: #{user_encoder_rate.1} parent=1 // pred_region
      _
    $region17: #{user_encoder_rate.1} parent=1 // pred_fallthru
      _
    // Predicated region
    $region18: #{user_encoder_rate.1} parent=1 // pred_check
      _
    $region19: #{user_encoder_rate.1} parent=1 // pred_check_branch
      %23 = sbr.rel (0) target = $region21
    $region20: #{user_encoder_rate.1} parent=1 // pred_region
      _
    $region21: #{user_encoder_rate.1} parent=1 // pred_fallthru
      _
    // Predicated region
    $region22: #{user_encoder_rate.1} parent=1 // pred_check
      _
    $region23: #{user_encoder_rate.1} parent=1 // pred_check_branch
      %25 = sbr.rel (0) target = $region25
    $region24: #{user_encoder_rate.1} parent=1 // pred_region
      _
    $region25: #{user_encoder_rate.1} parent=1 // pred_fallthru
      _
    // Predicated region
    $region26: #{user_encoder_rate.1} parent=1 // pred_check
      _
    $region27: #{user_encoder_rate.1} parent=1 // pred_check_branch
      %27 = sbr.rel (0) target = $region29
    $region28: #{user_encoder_rate.1} parent=1 // pred_region
      _
    $region29: #{user_encoder_rate.1} parent=1 // pred_fallthru
      _
    // Predicated region
    $region30: #{user_encoder_rate.1} parent=1 // pred_check
      _
    $region31: #{user_encoder_rate.1} parent=1 // pred_check_branch
      %29 = sbr.rel (0) target = $region33
    $region32: #{user_encoder_rate.1} parent=1 // pred_region
      %s31 = ssub.s32 16, 16
      %32 = vsyncadd [#allocation3], %s31
      %s34 = sshll.u32 %s7, 4
      %s35 = int_to_ptr.vmem [resolvable:$true] %s34
      %37 = dma.vmem_to_smem %s35, 16, [#allocation2], [#allocation3]
    $region33: #{user_encoder_rate.1} parent=1 // pred_fallthru
      _
    // Predicated region
    $region34: #{user_encoder_rate.1} parent=1 // pred_check
      _
    $region35: #{user_encoder_rate.1} parent=1 // pred_check_branch
      %39 = sbr.rel (0) target = $region37
    $region36: #{user_encoder_rate.1} parent=1 // pred_region
      %40 = dma.done [#allocation3], 16
    $region37: #{user_encoder_rate.1} parent=1 // pred_fallthru
      _
    %41 = sfence
    %v43 = vld [vmem:[%s0] sm:$0xf]
    %v44 = vld [vmem:[%s0 + $0x4] sm:$0xf]
    %v45 = vld [vmem:[%s1] sm:$0xf]
    %v46 = vld [vmem:[%s1 + $0x4] sm:$0xf]
    %v47 = vld [vmem:[%s1 + $0x8] sm:$0xf]
    %v48 = vld [vmem:[%s1 + $0xc] sm:$0xf]
    %v49 = vld [vmem:[%s1 + $0x10] sm:$0xf]
    %v50 = vld [vmem:[%s1 + $0x14] sm:$0xf]
    %v51 = vld [vmem:[%s1 + $0x18] sm:$0xf]
    %v52 = vld [vmem:[%s1 + $0x1c] sm:$0xf]
    %v53 = vld [vmem:[%s1 + $0x20] sm:$0xf]
    %v54 = vld [vmem:[%s1 + $0x24] sm:$0xf]
    %v55 = vld [vmem:[%s1 + $0x28] sm:$0xf]
    %v56 = vld [vmem:[%s1 + $0x2c] sm:$0xf]
    %v57 = vld [vmem:[%s1 + $0x30] sm:$0xf]
    %v58 = vld [vmem:[%s1 + $0x34] sm:$0xf]
    %v59 = vld [vmem:[%s1 + $0x38] sm:$0xf]
    %v60 = vld [vmem:[%s1 + $0x3c] sm:$0xf]
    %v61 = vld [vmem:[%s5] sm:$0xf]
    %v62 = vld [vmem:[%s5 + $0x4] sm:$0xf]
    %v63 = vld [vmem:[%s5 + $0x8] sm:$0xf]
    %v64 = vld [vmem:[%s5 + $0xc] sm:$0xf]
    %v65 = vld [vmem:[%s5 + $0x10] sm:$0xf]
    %v66 = vld [vmem:[%s5 + $0x14] sm:$0xf]
    %v67 = vld [vmem:[%s5 + $0x18] sm:$0xf]
    %v68 = vld [vmem:[%s5 + $0x1c] sm:$0xf]
    %v69 = vld [vmem:[%s6] sm:$0x1]
    %v70 = vlaneseq
    %v71 = vshrl.u32 %v70, 7
    %v72 = vsub.s32 0, %v71
    %v73 = vrot.slane %v69, %v72
    %v90 = vunpack.c.l.b16 %v45
    %v91 = vunpack.c.l.b16 %v46
    %v92 = vunpack.c.l.b16 %v47
    %v93 = vunpack.c.l.b16 %v48
    %v94 = vunpack.c.l.b16 %v49
    %v95 = vunpack.c.l.b16 %v50
    %v96 = vunpack.c.l.b16 %v51
    %v97 = vunpack.c.l.b16 %v52
    %v98 = vunpack.c.l.b16 %v53
    %v99 = vunpack.c.l.b16 %v54
    %v100 = vunpack.c.l.b16 %v55
    %v101 = vunpack.c.l.b16 %v56
    %v102 = vunpack.c.l.b16 %v57
    %v103 = vunpack.c.l.b16 %v58
    %v104 = vunpack.c.l.b16 %v59
    %v105 = vunpack.c.l.b16 %v60
    %v106 = vpack.c.b16 %v91, %v90
    %v107 = vpack.c.b16 %v93, %v92
    %v108 = vpack.c.b16 %v95, %v94
    %v109 = vpack.c.b16 %v97, %v96
    %v110 = vpack.c.b16 %v99, %v98
    %v111 = vpack.c.b16 %v101, %v100
    %v112 = vpack.c.b16 %v103, %v102
    %v113 = vpack.c.b16 %v105, %v104
    %v122 = vunpack.c.l.b16 %v61
    %v123 = vunpack.c.l.b16 %v62
    %v124 = vunpack.c.l.b16 %v63
    %v125 = vunpack.c.l.b16 %v64
    %v126 = vunpack.c.l.b16 %v65
    %v127 = vunpack.c.l.b16 %v66
    %v128 = vunpack.c.l.b16 %v67
    %v129 = vunpack.c.l.b16 %v68
    %v130 = vpack.c.b16 %v123, %v122
    %v131 = vpack.c.b16 %v125, %v124
    %v132 = vpack.c.b16 %v127, %v126
    %v133 = vpack.c.b16 %v129, %v128
    %vm138 = vcmask 523264
    %v140 = vsel %vm138, %v106, 0
    %v143 = vsel %vm138, %v107, 0
    %v146 = vsel %vm138, %v108, 0
    %v149 = vsel %vm138, %v109, 0
    %v152 = vsel %vm138, %v110, 0
    %v155 = vsel %vm138, %v111, 0
    %v158 = vsel %vm138, %v112, 0
    %v161 = vsel %vm138, %v113, 0
    %163 = vmatprep.subr.bf16.mxu0 0
    %164 = vmatpush1.bf16.msra.mxu0 %v130
    %165 = vmatprep.subr.bf16.mxu0 0
    %166 = vmatpush1.bf16.msra.mxu0 %v131
    %167 = vmatprep.subr.bf16.mxu0 0
    %168 = vmatpush1.bf16.msra.mxu0 %v132
    %169 = vmatprep.subr.bf16.mxu0 0
    %170 = vmatpush1.bf16.msra.mxu0 %v133
    %171 = vmatprep.subr.bf16.mxu0 0
    %172 = vmatpush1.bf16.msra.mxu0 0
    %173 = vmatprep.subr.bf16.mxu0 0
    %174 = vmatpush1.bf16.msra.mxu0 0
    %175 = vmatprep.subr.bf16.mxu0 0
    %176 = vmatpush1.bf16.msra.mxu0 0
    %177 = vmatprep.subr.bf16.mxu0 0
    %178 = vmatpush1.bf16.msra.mxu0 0
    %179 = vmatprep.subr.bf16.mxu0 0
    %180 = vmatpush1.bf16.msra.mxu0 0
    %181 = vmatprep.subr.bf16.mxu0 0
    %182 = vmatpush1.bf16.msra.mxu0 0
    %183 = vmatprep.subr.bf16.mxu0 0
    %184 = vmatpush1.bf16.msra.mxu0 0
    %185 = vmatprep.subr.bf16.mxu0 0
    %186 = vmatpush1.bf16.msra.mxu0 0
    %187 = vmatprep.subr.bf16.mxu0 0
    %188 = vmatpush1.bf16.msra.mxu0 0
    %189 = vmatprep.subr.bf16.mxu0 0
    %190 = vmatpush1.bf16.msra.mxu0 0
    %191 = vmatprep.subr.bf16.mxu0 0
    %192 = vmatpush1.bf16.msra.mxu0 0
    %193 = vmatprep.subr.bf16.mxu0 0
    %194 = vmatpush1.bf16.msra.mxu0 0
    %195 = vmatprep.mubr.bf16.mxu0 0
    %196 = vmatmul.mubr.bf16.gmra.mrb[0].mxu0 %v140
    %v197 = vpop.f32.mrb[0].mxu0
    %v198 = vadd.f32 %v73, %v197
    %v199 = vpop.f32.mrb[0].mxu0
    %v200 = vpop.f32.mrb[0].mxu0
    %v201 = vadd.f32 %v73, %v200
    %v202 = vpop.f32.mrb[0].mxu0
    %203 = vmatprep.mubr.bf16.mxu0 0
    %204 = vmatmul.mubr.bf16.gmra.mrb[0].mxu0 %v143
    %v205 = vpop.f32.mrb[0].mxu0
    %v206 = vadd.f32 %v73, %v205
    %v207 = vpop.f32.mrb[0].mxu0
    %v208 = vpop.f32.mrb[0].mxu0
    %v209 = vadd.f32 %v73, %v208
    %v210 = vpop.f32.mrb[0].mxu0
    %211 = vmatprep.mubr.bf16.mxu0 0
    %212 = vmatmul.mubr.bf16.gmra.mrb[0].mxu0 %v146
    %v213 = vpop.f32.mrb[0].mxu0
    %v214 = vadd.f32 %v73, %v213
    %v215 = vpop.f32.mrb[0].mxu0
    %v216 = vpop.f32.mrb[0].mxu0
    %v217 = vadd.f32 %v73, %v216
    %v218 = vpop.f32.mrb[0].mxu0
    %219 = vmatprep.mubr.bf16.mxu0 0
    %220 = vmatmul.mubr.bf16.gmra.mrb[0].mxu0 %v149
    %v221 = vpop.f32.mrb[0].mxu0
    %v222 = vadd.f32 %v73, %v221
    %v223 = vpop.f32.mrb[0].mxu0
    %v224 = vpop.f32.mrb[0].mxu0
    %v225 = vadd.f32 %v73, %v224
    %v226 = vpop.f32.mrb[0].mxu0
    %227 = vmatprep.mubr.bf16.mxu0 0
    %228 = vmatmul.mubr.bf16.gmra.mrb[0].mxu0 %v152
    %v229 = vpop.f32.mrb[0].mxu0
    %v230 = vadd.f32 %v73, %v229
    %v231 = vpop.f32.mrb[0].mxu0
    %v232 = vpop.f32.mrb[0].mxu0
    %v233 = vadd.f32 %v73, %v232
    %v234 = vpop.f32.mrb[0].mxu0
    %235 = vmatprep.mubr.bf16.mxu0 0
    %236 = vmatmul.mubr.bf16.gmra.mrb[0].mxu0 %v155
    %v237 = vpop.f32.mrb[0].mxu0
    %v238 = vadd.f32 %v73, %v237
    %v239 = vpop.f32.mrb[0].mxu0
    %v240 = vpop.f32.mrb[0].mxu0
    %v241 = vadd.f32 %v73, %v240
    %v242 = vpop.f32.mrb[0].mxu0
    %243 = vmatprep.mubr.bf16.mxu0 0
    %244 = vmatmul.mubr.bf16.gmra.mrb[0].mxu0 %v158
    %v245 = vpop.f32.mrb[0].mxu0
    %v246 = vadd.f32 %v73, %v245
    %v247 = vpop.f32.mrb[0].mxu0
    %v248 = vpop.f32.mrb[0].mxu0
    %v249 = vadd.f32 %v73, %v248
    %v250 = vpop.f32.mrb[0].mxu0
    %251 = vmatprep.mubr.bf16.mxu0 0
    %252 = vmatmul.mubr.bf16.gmra.mrb[0].mxu0 %v161
    %v253 = vpop.f32.mrb[0].mxu0
    %v254 = vadd.f32 %v73, %v253
    %v255 = vpop.f32.mrb[0].mxu0
    %v256 = vpop.f32.mrb[0].mxu0
    %v257 = vadd.f32 %v73, %v256
    %v258 = vpop.f32.mrb[0].mxu0
    %259 = vdwg.mxu0
    %v260 = vld [vmem:[%s2] sm:$0xff]
    %v261 = vld [vmem:[%s2 + $0x8] sm:$0xff]
    %v262 = vld [vmem:[%s5 + $0x20] sm:$0xf]
    %v263 = vld [vmem:[%s5 + $0x24] sm:$0xf]
    %v264 = vld [vmem:[%s5 + $0x28] sm:$0xf]
    %v265 = vld [vmem:[%s5 + $0x2c] sm:$0xf]
    %v266 = vld [vmem:[%s5 + $0x30] sm:$0xf]
    %v267 = vld [vmem:[%s5 + $0x34] sm:$0xf]
    %v268 = vld [vmem:[%s5 + $0x38] sm:$0xf]
    %v269 = vld [vmem:[%s5 + $0x3c] sm:$0xf]
    %v270 = vld [vmem:[%s6 + $0x1] sm:$0x1]
    %v271 = vld [vmem:[%s6 + $0x5] sm:$0x1]
    %s272 = sld [smem:[#allocation2]]
    %v273 = vpack.c.bf16 %v198, %v198
    %v274 = vpack.c.bf16 %v201, %v201
    %v275 = vpack.c.bf16 %v206, %v206
    %v276 = vpack.c.bf16 %v209, %v209
    %v277 = vpack.c.bf16 %v214, %v214
    %v278 = vpack.c.bf16 %v217, %v217
    %v279 = vpack.c.bf16 %v222, %v222
    %v280 = vpack.c.bf16 %v225, %v225
    %v281 = vpack.c.bf16 %v230, %v230
    %v282 = vpack.c.bf16 %v233, %v233
    %v283 = vpack.c.bf16 %v238, %v238
    %v284 = vpack.c.bf16 %v241, %v241
    %v285 = vpack.c.bf16 %v246, %v246
    %v286 = vpack.c.bf16 %v249, %v249
    %v287 = vpack.c.bf16 %v254, %v254
    %v288 = vpack.c.bf16 %v257, %v257
    %v291 = vunpack.c.l.b16 %v43
    %v292 = vunpack.c.l.b16 %v44
    %v293 = vpack.c.b16 %v292, %v291
    %v298 = vunpack.c.l.b16 %v266
    %v299 = vunpack.c.l.b16 %v267
    %v300 = vunpack.c.l.b16 %v268
    %v301 = vunpack.c.l.b16 %v269
    %v302 = vpack.c.b16 %v299, %v298
    %v303 = vpack.c.b16 %v301, %v300
    %vm306 = vcmask 261120
    %v308 = vsel %vm306, %v293, 0
    %310 = vmatprep.subr.bf16.mxu0 0
    %311 = vmatpush1.bf16.msra.mxu0 %v302
    %312 = vmatprep.subr.bf16.mxu0 0
    %313 = vmatpush1.bf16.msra.mxu0 %v303
    %314 = vmatprep.subr.bf16.mxu0 0
    %315 = vmatpush1.bf16.msra.mxu0 0
    %316 = vmatprep.subr.bf16.mxu0 0
    %317 = vmatpush1.bf16.msra.mxu0 0
    %318 = vmatprep.subr.bf16.mxu0 0
    %319 = vmatpush1.bf16.msra.mxu0 0
    %320 = vmatprep.subr.bf16.mxu0 0
    %321 = vmatpush1.bf16.msra.mxu0 0
    %322 = vmatprep.subr.bf16.mxu0 0
    %323 = vmatpush1.bf16.msra.mxu0 0
    %324 = vmatprep.subr.bf16.mxu0 0
    %325 = vmatpush1.bf16.msra.mxu0 0
    %326 = vmatprep.subr.bf16.mxu0 0
    %327 = vmatpush1.bf16.msra.mxu0 0
    %328 = vmatprep.subr.bf16.mxu0 0
    %329 = vmatpush1.bf16.msra.mxu0 0
    %330 = vmatprep.subr.bf16.mxu0 0
    %331 = vmatpush1.bf16.msra.mxu0 0
    %332 = vmatprep.subr.bf16.mxu0 0
    %333 = vmatpush1.bf16.msra.mxu0 0
    %334 = vmatprep.subr.bf16.mxu0 0
    %335 = vmatpush1.bf16.msra.mxu0 0
    %336 = vmatprep.subr.bf16.mxu0 0
    %337 = vmatpush1.bf16.msra.mxu0 0
    %338 = vmatprep.subr.bf16.mxu0 0
    %339 = vmatpush1.bf16.msra.mxu0 0
    %340 = vmatprep.subr.bf16.mxu0 0
    %341 = vmatpush1.bf16.msra.mxu0 0
    %342 = vmatprep.mubr.bf16.mxu0 0
    %343 = vmatmul.mubr.bf16.gmra.mrb[0].mxu0 %v308
    %v344 = vpop.f32.mrb[0].mxu0
    %v345 = vadd.f32 0.0, %v344
    %v346 = vpop.f32.mrb[0].mxu0
    %v347 = vpop.f32.mrb[0].mxu0
    %v348 = vadd.f32 0.0, %v347
    %v349 = vpop.f32.mrb[0].mxu0
    %350 = vdwg.mxu0
    %v367 = vunpack.c.l.b16 %v273
    %v368 = vunpack.c.l.b16 %v274
    %v369 = vunpack.c.l.b16 %v275
    %v370 = vunpack.c.l.b16 %v276
    %v371 = vunpack.c.l.b16 %v277
    %v372 = vunpack.c.l.b16 %v278
    %v373 = vunpack.c.l.b16 %v279
    %v374 = vunpack.c.l.b16 %v280
    %v375 = vunpack.c.l.b16 %v281
    %v376 = vunpack.c.l.b16 %v282
    %v377 = vunpack.c.l.b16 %v283
    %v378 = vunpack.c.l.b16 %v284
    %v379 = vunpack.c.l.b16 %v285
    %v380 = vunpack.c.l.b16 %v286
    %v381 = vunpack.c.l.b16 %v287
    %v382 = vunpack.c.l.b16 %v288
    %v383 = vpack.c.b16 %v368, %v367
    %v384 = vpack.c.b16 %v370, %v369
    %v385 = vpack.c.b16 %v372, %v371
    %v386 = vpack.c.b16 %v374, %v373
    %v387 = vpack.c.b16 %v376, %v375
    %v388 = vpack.c.b16 %v378, %v377
    %v389 = vpack.c.b16 %v380, %v379
    %v390 = vpack.c.b16 %v382, %v381
    %v395 = vunpack.c.l.b16 %v262
    %v396 = vunpack.c.l.b16 %v263
    %v397 = vunpack.c.l.b16 %v264
    %v398 = vunpack.c.l.b16 %v265
    %v399 = vpack.c.b16 %v396, %v395
    %v400 = vpack.c.b16 %v398, %v397
    %v404 = vsel %vm306, %v383, 0
    %v407 = vsel %vm306, %v384, 0
    %v410 = vsel %vm306, %v385, 0
    %v413 = vsel %vm306, %v386, 0
    %v416 = vsel %vm306, %v387, 0
    %v419 = vsel %vm306, %v388, 0
    %v422 = vsel %vm306, %v389, 0
    %v425 = vsel %vm306, %v390, 0
    %427 = vmatprep.subr.bf16.mxu0 0
    %428 = vmatpush1.bf16.msra.mxu0 %v399
    %429 = vmatprep.subr.bf16.mxu0 0
    %430 = vmatpush1.bf16.msra.mxu0 %v400
    %431 = vmatprep.subr.bf16.mxu0 0
    %432 = vmatpush1.bf16.msra.mxu0 0
    %433 = vmatprep.subr.bf16.mxu0 0
    %434 = vmatpush1.bf16.msra.mxu0 0
    %435 = vmatprep.subr.bf16.mxu0 0
    %436 = vmatpush1.bf16.msra.mxu0 0
    %437 = vmatprep.subr.bf16.mxu0 0
    %438 = vmatpush1.bf16.msra.mxu0 0
    %439 = vmatprep.subr.bf16.mxu0 0
    %440 = vmatpush1.bf16.msra.mxu0 0
    %441 = vmatprep.subr.bf16.mxu0 0
    %442 = vmatpush1.bf16.msra.mxu0 0
    %443 = vmatprep.subr.bf16.mxu0 0
    %444 = vmatpush1.bf16.msra.mxu0 0
    %445 = vmatprep.subr.bf16.mxu0 0
    %446 = vmatpush1.bf16.msra.mxu0 0
    %447 = vmatprep.subr.bf16.mxu0 0
    %448 = vmatpush1.bf16.msra.mxu0 0
    %449 = vmatprep.subr.bf16.mxu0 0
    %450 = vmatpush1.bf16.msra.mxu0 0
    %451 = vmatprep.subr.bf16.mxu0 0
    %452 = vmatpush1.bf16.msra.mxu0 0
    %453 = vmatprep.subr.bf16.mxu0 0
    %454 = vmatpush1.bf16.msra.mxu0 0
    %455 = vmatprep.subr.bf16.mxu0 0
    %456 = vmatpush1.bf16.msra.mxu0 0
    %457 = vmatprep.subr.bf16.mxu0 0
    %458 = vmatpush1.bf16.msra.mxu0 0
    %459 = vmatprep.mubr.bf16.mxu0 0
    %460 = vmatmul.mubr.bf16.gmra.mrb[0].mxu0 %v404
    %v461 = vpop.f32.mrb[0].mxu0
    %v462 = vadd.f32 0.0, %v461
    %v463 = vpop.f32.mrb[0].mxu0
    %v464 = vpop.f32.mrb[0].mxu0
    %v465 = vadd.f32 0.0, %v464
    %v466 = vpop.f32.mrb[0].mxu0
    %467 = vmatprep.mubr.bf16.mxu0 0
    %468 = vmatmul.mubr.bf16.gmra.mrb[0].mxu0 %v407
    %v469 = vpop.f32.mrb[0].mxu0
    %v470 = vadd.f32 0.0, %v469
    %v471 = vpop.f32.mrb[0].mxu0
    %v472 = vpop.f32.mrb[0].mxu0
    %v473 = vadd.f32 0.0, %v472
    %v474 = vpop.f32.mrb[0].mxu0
    %475 = vmatprep.mubr.bf16.mxu0 0
    %476 = vmatmul.mubr.bf16.gmra.mrb[0].mxu0 %v410
    %v477 = vpop.f32.mrb[0].mxu0
    %v478 = vadd.f32 0.0, %v477
    %v479 = vpop.f32.mrb[0].mxu0
    %v480 = vpop.f32.mrb[0].mxu0
    %v481 = vadd.f32 0.0, %v480
    %v482 = vpop.f32.mrb[0].mxu0
    %483 = vmatprep.mubr.bf16.mxu0 0
    %484 = vmatmul.mubr.bf16.gmra.mrb[0].mxu0 %v413
    %v485 = vpop.f32.mrb[0].mxu0
    %v486 = vadd.f32 0.0, %v485
    %v487 = vpop.f32.mrb[0].mxu0
    %v488 = vpop.f32.mrb[0].mxu0
    %v489 = vadd.f32 0.0, %v488
    %v490 = vpop.f32.mrb[0].mxu0
    %491 = vmatprep.mubr.bf16.mxu0 0
    %492 = vmatmul.mubr.bf16.gmra.mrb[0].mxu0 %v416
    %v493 = vpop.f32.mrb[0].mxu0
    %v494 = vadd.f32 0.0, %v493
    %v495 = vpop.f32.mrb[0].mxu0
    %v496 = vpop.f32.mrb[0].mxu0
    %v497 = vadd.f32 0.0, %v496
    %v498 = vpop.f32.mrb[0].mxu0
    %499 = vmatprep.mubr.bf16.mxu0 0
    %500 = vmatmul.mubr.bf16.gmra.mrb[0].mxu0 %v419
    %v501 = vpop.f32.mrb[0].mxu0
    %v502 = vadd.f32 0.0, %v501
    %v503 = vpop.f32.mrb[0].mxu0
    %v504 = vpop.f32.mrb[0].mxu0
    %v505 = vadd.f32 0.0, %v504
    %v506 = vpop.f32.mrb[0].mxu0
    %507 = vmatprep.mubr.bf16.mxu0 0
    %508 = vmatmul.mubr.bf16.gmra.mrb[0].mxu0 %v422
    %v509 = vpop.f32.mrb[0].mxu0
    %v510 = vadd.f32 0.0, %v509
    %v511 = vpop.f32.mrb[0].mxu0
    %v512 = vpop.f32.mrb[0].mxu0
    %v513 = vadd.f32 0.0, %v512
    %v514 = vpop.f32.mrb[0].mxu0
    %515 = vmatprep.mubr.bf16.mxu0 0
    %516 = vmatmul.mubr.bf16.gmra.mrb[0].mxu0 %v425
    %v517 = vpop.f32.mrb[0].mxu0
    %v518 = vadd.f32 0.0, %v517
    %v519 = vpop.f32.mrb[0].mxu0
    %v520 = vpop.f32.mrb[0].mxu0
    %v521 = vadd.f32 0.0, %v520
    %v522 = vpop.f32.mrb[0].mxu0
    %523 = vdwg.mxu0
    %v526 = vcombine.high %v345, %v345
    %v528 = vunpack.c.l.s4 1966171168
    %v529 = vunpack.c.0.s8 %v528
    %v530 = vlaneseq
    %v531 = vshrl.u32 %v530, 7
    %v532 = vsub.s32 %v529, %v531
    %v533 = vrot.slane %v345, %v532
    %v535 = vunpack.c.l.s4 1966171168
    %v536 = vunpack.c.0.s8 %v535
    %v537 = vlaneseq
    %v538 = vshrl.u32 %v537, 7
    %v539 = vsub.s32 %v536, %v538
    %v540 = vrot.slane %v526, %v539
    %v541 = vcombine.high %v533, %v533
    %v542 = vcombine.high %v540, %v540
    %v544 = vunpack.c.l.s4 1966171168
    %v545 = vunpack.c.0.s8 %v544
    %v546 = vlaneseq
    %v547 = vshrl.u32 %v546, 7
    %v548 = vsub.s32 %v545, %v547
    %v549 = vrot.slane %v533, %v548
    %v551 = vunpack.c.l.s4 1966171168
    %v552 = vunpack.c.0.s8 %v551
    %v553 = vlaneseq
    %v554 = vshrl.u32 %v553, 7
    %v555 = vsub.s32 %v552, %v554
    %v556 = vrot.slane %v540, %v555
    %v558 = vunpack.c.l.s4 1966171168
    %v559 = vunpack.c.0.s8 %v558
    %v560 = vlaneseq
    %v561 = vshrl.u32 %v560, 7
    %v562 = vsub.s32 %v559, %v561
    %v563 = vrot.slane %v541, %v562
    %v565 = vunpack.c.l.s4 1966171168
    %v566 = vunpack.c.0.s8 %v565
    %v567 = vlaneseq
    %v568 = vshrl.u32 %v567, 7
    %v569 = vsub.s32 %v566, %v568
    %v570 = vrot.slane %v542, %v569
    %v571 = vcombine.high %v549, %v549
    %v572 = vcombine.high %v556, %v556
    %v573 = vcombine.high %v563, %v563
    %v574 = vcombine.high %v570, %v570
    %v575 = vcombine.high %v348, %v348
    %v577 = vunpack.c.l.s4 1966171168
    %v578 = vunpack.c.0.s8 %v577
    %v579 = vlaneseq
    %v580 = vshrl.u32 %v579, 7
    %v581 = vsub.s32 %v578, %v580
    %v582 = vrot.slane %v348, %v581
    %v584 = vunpack.c.l.s4 1966171168
    %v585 = vunpack.c.0.s8 %v584
    %v586 = vlaneseq
    %v587 = vshrl.u32 %v586, 7
    %v588 = vsub.s32 %v585, %v587
    %v589 = vrot.slane %v575, %v588
    %v590 = vcombine.high %v582, %v582
    %v591 = vcombine.high %v589, %v589
    %v593 = vunpack.c.l.s4 1966171168
    %v594 = vunpack.c.0.s8 %v593
    %v595 = vlaneseq
    %v596 = vshrl.u32 %v595, 7
    %v597 = vsub.s32 %v594, %v596
    %v598 = vrot.slane %v582, %v597
    %v600 = vunpack.c.l.s4 1966171168
    %v601 = vunpack.c.0.s8 %v600
    %v602 = vlaneseq
    %v603 = vshrl.u32 %v602, 7
    %v604 = vsub.s32 %v601, %v603
    %v605 = vrot.slane %v589, %v604
    %v607 = vunpack.c.l.s4 1966171168
    %v608 = vunpack.c.0.s8 %v607
    %v609 = vlaneseq
    %v610 = vshrl.u32 %v609, 7
    %v611 = vsub.s32 %v608, %v610
    %v612 = vrot.slane %v590, %v611
    %v614 = vunpack.c.l.s4 1966171168
    %v615 = vunpack.c.0.s8 %v614
    %v616 = vlaneseq
    %v617 = vshrl.u32 %v616, 7
    %v618 = vsub.s32 %v615, %v617
    %v619 = vrot.slane %v591, %v618
    %v620 = vcombine.high %v598, %v598
    %v621 = vcombine.high %v605, %v605
    %v622 = vcombine.high %v612, %v612
    %v623 = vcombine.high %v619, %v619
    %v624 = vlaneseq
    %v625 = vshrl.u32 %v624, 7
    %v626 = vsub.s32 0, %v625
    %v627 = vrot.slane %v549, %v626
    %v628 = vlaneseq
    %v629 = vshrl.u32 %v628, 7
    %v630 = vsub.s32 0, %v629
    %v631 = vrot.slane %v563, %v630
    %v632 = vlaneseq
    %v633 = vshrl.u32 %v632, 7
    %v634 = vsub.s32 0, %v633
    %v635 = vrot.slane %v571, %v634
    %v636 = vlaneseq
    %v637 = vshrl.u32 %v636, 7
    %v638 = vsub.s32 0, %v637
    %v639 = vrot.slane %v573, %v638
    %v640 = vlaneseq
    %v641 = vshrl.u32 %v640, 7
    %v642 = vsub.s32 0, %v641
    %v643 = vrot.slane %v556, %v642
    %v644 = vlaneseq
    %v645 = vshrl.u32 %v644, 7
    %v646 = vsub.s32 0, %v645
    %v647 = vrot.slane %v570, %v646
    %v648 = vlaneseq
    %v649 = vshrl.u32 %v648, 7
    %v650 = vsub.s32 0, %v649
    %v651 = vrot.slane %v572, %v650
    %v652 = vlaneseq
    %v653 = vshrl.u32 %v652, 7
    %v654 = vsub.s32 0, %v653
    %v655 = vrot.slane %v574, %v654
    %v656 = vlaneseq
    %v657 = vshrl.u32 %v656, 7
    %v658 = vsub.s32 0, %v657
    %v659 = vrot.slane %v598, %v658
    %v660 = vlaneseq
    %v661 = vshrl.u32 %v660, 7
    %v662 = vsub.s32 0, %v661
    %v663 = vrot.slane %v612, %v662
    %v664 = vlaneseq
    %v665 = vshrl.u32 %v664, 7
    %v666 = vsub.s32 0, %v665
    %v667 = vrot.slane %v620, %v666
    %v668 = vlaneseq
    %v669 = vshrl.u32 %v668, 7
    %v670 = vsub.s32 0, %v669
    %v671 = vrot.slane %v622, %v670
    %v672 = vlaneseq
    %v673 = vshrl.u32 %v672, 7
    %v674 = vsub.s32 0, %v673
    %v675 = vrot.slane %v605, %v674
    %v676 = vlaneseq
    %v677 = vshrl.u32 %v676, 7
    %v678 = vsub.s32 0, %v677
    %v679 = vrot.slane %v619, %v678
    %v680 = vlaneseq
    %v681 = vshrl.u32 %v680, 7
    %v682 = vsub.s32 0, %v681
    %v683 = vrot.slane %v621, %v682
    %v684 = vlaneseq
    %v685 = vshrl.u32 %v684, 7
    %v686 = vsub.s32 0, %v685
    %v687 = vrot.slane %v623, %v686
    %v704 = vadd.f32 %v462, %v627
    %v705 = vadd.f32 %v465, %v631
    %v706 = vadd.f32 %v470, %v635
    %v707 = vadd.f32 %v473, %v639
    %v708 = vadd.f32 %v478, %v643
    %v709 = vadd.f32 %v481, %v647
    %v710 = vadd.f32 %v486, %v651
    %v711 = vadd.f32 %v489, %v655
    %v712 = vadd.f32 %v494, %v659
    %v713 = vadd.f32 %v497, %v663
    %v714 = vadd.f32 %v502, %v667
    %v715 = vadd.f32 %v505, %v671
    %v716 = vadd.f32 %v510, %v675
    %v717 = vadd.f32 %v513, %v679
    %v718 = vadd.f32 %v518, %v683
    %v719 = vadd.f32 %v521, %v687
    %v720 = vlaneseq
    %v721 = vshrl.u32 %v720, 7
    %v722 = vsub.s32 0, %v721
    %v723 = vrot.slane %v270, %v722
    %v724 = vadd.f32 %v704, %v723
    %v725 = vadd.f32 %v705, %v723
    %v726 = vadd.f32 %v706, %v723
    %v727 = vadd.f32 %v707, %v723
    %v728 = vadd.f32 %v708, %v723
    %v729 = vadd.f32 %v709, %v723
    %v730 = vadd.f32 %v710, %v723
    %v731 = vadd.f32 %v711, %v723
    %v732 = vadd.f32 %v712, %v723
    %v733 = vadd.f32 %v713, %v723
    %v734 = vadd.f32 %v714, %v723
    %v735 = vadd.f32 %v715, %v723
    %v736 = vadd.f32 %v716, %v723
    %v737 = vadd.f32 %v717, %v723
    %v738 = vadd.f32 %v718, %v723
    %v739 = vadd.f32 %v719, %v723
    %v740 = vmax.f32 %v724, 0.0
    %v741 = vmax.f32 %v725, 0.0
    %v742 = vmax.f32 %v726, 0.0
    %v743 = vmax.f32 %v727, 0.0
    %v744 = vmax.f32 %v728, 0.0
    %v745 = vmax.f32 %v729, 0.0
    %v746 = vmax.f32 %v730, 0.0
    %v747 = vmax.f32 %v731, 0.0
    %v748 = vmax.f32 %v732, 0.0
    %v749 = vmax.f32 %v733, 0.0
    %v750 = vmax.f32 %v734, 0.0
    %v751 = vmax.f32 %v735, 0.0
    %v752 = vmax.f32 %v736, 0.0
    %v753 = vmax.f32 %v737, 0.0
    %v754 = vmax.f32 %v738, 0.0
    %v755 = vmax.f32 %v739, 0.0
    %v756 = vlaneseq
    %v757 = vshrl.u32 %v756, 7
    %v758 = vsub.s32 0, %v757
    %v759 = vrot.slane %v271, %v758
    %v760 = vmul.f32 %v740, %v759
    %v761 = vmul.f32 %v741, %v759
    %v762 = vmul.f32 %v742, %v759
    %v763 = vmul.f32 %v743, %v759
    %v764 = vmul.f32 %v744, %v759
    %v765 = vmul.f32 %v745, %v759
    %v766 = vmul.f32 %v746, %v759
    %v767 = vmul.f32 %v747, %v759
    %v768 = vmul.f32 %v748, %v759
    %v769 = vmul.f32 %v749, %v759
    %v770 = vmul.f32 %v750, %v759
    %v771 = vmul.f32 %v751, %v759
    %v772 = vmul.f32 %v752, %v759
    %v773 = vmul.f32 %v753, %v759
    %v774 = vmul.f32 %v754, %v759
    %v775 = vmul.f32 %v755, %v759
    %v776 = vsel %vm306, %v760, 0.0
    %777 = vadd.xlane.f32.xlu0 %v776
    %v778 = vpop.xlane.xlu0 %777
    %v779 = vsel %vm306, %v761, 0.0
    %780 = vadd.xlane.f32.xlu0 %v779
    %v781 = vpop.xlane.xlu0 %780
    %v782 = vsel %vm306, %v762, 0.0
    %783 = vadd.xlane.f32.xlu0 %v782
    %v784 = vpop.xlane.xlu0 %783
    %v785 = vsel %vm306, %v763, 0.0
    %786 = vadd.xlane.f32.xlu0 %v785
    %v787 = vpop.xlane.xlu0 %786
    %v788 = vsel %vm306, %v764, 0.0
    %789 = vadd.xlane.f32.xlu0 %v788
    %v790 = vpop.xlane.xlu0 %789
    %v791 = vsel %vm306, %v765, 0.0
    %792 = vadd.xlane.f32.xlu0 %v791
    %v793 = vpop.xlane.xlu0 %792
    %v794 = vsel %vm306, %v766, 0.0
    %795 = vadd.xlane.f32.xlu0 %v794
    %v796 = vpop.xlane.xlu0 %795
    %v797 = vsel %vm306, %v767, 0.0
    %798 = vadd.xlane.f32.xlu0 %v797
    %v799 = vpop.xlane.xlu0 %798
    %v800 = vsel %vm306, %v768, 0.0
    %801 = vadd.xlane.f32.xlu0 %v800
    %v802 = vpop.xlane.xlu0 %801
    %v803 = vsel %vm306, %v769, 0.0
    %804 = vadd.xlane.f32.xlu0 %v803
    %v805 = vpop.xlane.xlu0 %804
    %v806 = vsel %vm306, %v770, 0.0
    %807 = vadd.xlane.f32.xlu0 %v806
    %v808 = vpop.xlane.xlu0 %807
    %v809 = vsel %vm306, %v771, 0.0
    %810 = vadd.xlane.f32.xlu0 %v809
    %v811 = vpop.xlane.xlu0 %810
    %v812 = vsel %vm306, %v772, 0.0
    %813 = vadd.xlane.f32.xlu0 %v812
    %v814 = vpop.xlane.xlu0 %813
    %v815 = vsel %vm306, %v773, 0.0
    %816 = vadd.xlane.f32.xlu0 %v815
    %v817 = vpop.xlane.xlu0 %816
    %v818 = vsel %vm306, %v774, 0.0
    %819 = vadd.xlane.f32.xlu0 %v818
    %v820 = vpop.xlane.xlu0 %819
    %v821 = vsel %vm306, %v775, 0.0
    %822 = vadd.xlane.f32.xlu0 %v821
    %v823 = vpop.xlane.xlu0 %822
    %v824 = vstv %s272
    %v825 = vadd.f32 %v778, %v824
    %v826 = vadd.f32 %v781, %v824
    %v827 = vadd.f32 %v784, %v824
    %v828 = vadd.f32 %v787, %v824
    %v829 = vadd.f32 %v790, %v824
    %v830 = vadd.f32 %v793, %v824
    %v831 = vadd.f32 %v796, %v824
    %v832 = vadd.f32 %v799, %v824
    %v833 = vadd.f32 %v802, %v824
    %v834 = vadd.f32 %v805, %v824
    %v835 = vadd.f32 %v808, %v824
    %v836 = vadd.f32 %v811, %v824
    %v837 = vadd.f32 %v814, %v824
    %v838 = vadd.f32 %v817, %v824
    %v839 = vadd.f32 %v820, %v824
    %v840 = vadd.f32 %v823, %v824
    %v843 = vlaneseq
    %v844 = vshrl.u32 %v843, 7
    %v845 = vsub.s32 0, %v844
    %v846 = vrot.slane %v260, %v845
    %848 = vbcast.lane.b32.xlu0 %v846, 256
    %v849 = vpop.permute.xlu0 %848
    %v850 = vlaneseq
    %v851 = vshrl.u32 %v850, 7
    %v852 = vsub.s32 1, %v851
    %v853 = vrot.slane %v260, %v852
    %855 = vbcast.lane.b32.xlu0 %v853, 256
    %v856 = vpop.permute.xlu0 %855
    %v857 = vlaneseq
    %v858 = vshrl.u32 %v857, 7
    %v859 = vsub.s32 2, %v858
    %v860 = vrot.slane %v260, %v859
    %862 = vbcast.lane.b32.xlu0 %v860, 256
    %v863 = vpop.permute.xlu0 %862
    %v864 = vlaneseq
    %v865 = vshrl.u32 %v864, 7
    %v866 = vsub.s32 3, %v865
    %v867 = vrot.slane %v260, %v866
    %869 = vbcast.lane.b32.xlu0 %v867, 256
    %v870 = vpop.permute.xlu0 %869
    %v871 = vlaneseq
    %v872 = vshrl.u32 %v871, 7
    %v873 = vsub.s32 4, %v872
    %v874 = vrot.slane %v260, %v873
    %876 = vbcast.lane.b32.xlu0 %v874, 256
    %v877 = vpop.permute.xlu0 %876
    %v878 = vlaneseq
    %v879 = vshrl.u32 %v878, 7
    %v880 = vsub.s32 5, %v879
    %v881 = vrot.slane %v260, %v880
    %883 = vbcast.lane.b32.xlu0 %v881, 256
    %v884 = vpop.permute.xlu0 %883
    %v885 = vlaneseq
    %v886 = vshrl.u32 %v885, 7
    %v887 = vsub.s32 6, %v886
    %v888 = vrot.slane %v260, %v887
    %890 = vbcast.lane.b32.xlu0 %v888, 256
    %v891 = vpop.permute.xlu0 %890
    %v892 = vlaneseq
    %v893 = vshrl.u32 %v892, 7
    %v894 = vsub.s32 7, %v893
    %v895 = vrot.slane %v260, %v894
    %897 = vbcast.lane.b32.xlu0 %v895, 256
    %v898 = vpop.permute.xlu0 %897
    %v899 = vlaneseq
    %v900 = vshrl.u32 %v899, 7
    %v901 = vsub.s32 0, %v900
    %v902 = vrot.slane %v261, %v901
    %904 = vbcast.lane.b32.xlu0 %v902, 256
    %v905 = vpop.permute.xlu0 %904
    %v906 = vlaneseq
    %v907 = vshrl.u32 %v906, 7
    %v908 = vsub.s32 1, %v907
    %v909 = vrot.slane %v261, %v908
    %911 = vbcast.lane.b32.xlu0 %v909, 256
    %v912 = vpop.permute.xlu0 %911
    %v913 = vlaneseq
    %v914 = vshrl.u32 %v913, 7
    %v915 = vsub.s32 2, %v914
    %v916 = vrot.slane %v261, %v915
    %918 = vbcast.lane.b32.xlu0 %v916, 256
    %v919 = vpop.permute.xlu0 %918
    %v920 = vlaneseq
    %v921 = vshrl.u32 %v920, 7
    %v922 = vsub.s32 3, %v921
    %v923 = vrot.slane %v261, %v922
    %925 = vbcast.lane.b32.xlu0 %v923, 256
    %v926 = vpop.permute.xlu0 %925
    %v927 = vlaneseq
    %v928 = vshrl.u32 %v927, 7
    %v929 = vsub.s32 4, %v928
    %v930 = vrot.slane %v261, %v929
    %932 = vbcast.lane.b32.xlu0 %v930, 256
    %v933 = vpop.permute.xlu0 %932
    %v934 = vlaneseq
    %v935 = vshrl.u32 %v934, 7
    %v936 = vsub.s32 5, %v935
    %v937 = vrot.slane %v261, %v936
    %939 = vbcast.lane.b32.xlu0 %v937, 256
    %v940 = vpop.permute.xlu0 %939
    %v941 = vlaneseq
    %v942 = vshrl.u32 %v941, 7
    %v943 = vsub.s32 6, %v942
    %v944 = vrot.slane %v261, %v943
    %946 = vbcast.lane.b32.xlu0 %v944, 256
    %v947 = vpop.permute.xlu0 %946
    %v948 = vlaneseq
    %v949 = vshrl.u32 %v948, 7
    %v950 = vsub.s32 7, %v949
    %v951 = vrot.slane %v261, %v950
    %953 = vbcast.lane.b32.xlu0 %v951, 256
    %v954 = vpop.permute.xlu0 %953
    %v971 = vadd.f32 %v825, %v849
    %v972 = vadd.f32 %v826, %v856
    %v973 = vadd.f32 %v827, %v863
    %v974 = vadd.f32 %v828, %v870
    %v975 = vadd.f32 %v829, %v877
    %v976 = vadd.f32 %v830, %v884
    %v977 = vadd.f32 %v831, %v891
    %v978 = vadd.f32 %v832, %v898
    %v979 = vadd.f32 %v833, %v905
    %v980 = vadd.f32 %v834, %v912
    %v981 = vadd.f32 %v835, %v919
    %v982 = vadd.f32 %v836, %v926
    %v983 = vadd.f32 %v837, %v933
    %v984 = vadd.f32 %v838, %v940
    %v985 = vadd.f32 %v839, %v947
    %v986 = vadd.f32 %v840, %v954
    %1003 = vset.pattern.permute.xlu0 0
    %1004 = vperm.xlu0 %1003, %v971
    %v1005 = vpop.permute.xlu0 %1004
    %1006 = vset.pattern.permute.xlu0 0
    %1007 = vperm.xlu0 %1006, %v972
    %v1008 = vpop.permute.xlu0 %1007
    %1009 = vset.pattern.permute.xlu0 0
    %1010 = vperm.xlu0 %1009, %v973
    %v1011 = vpop.permute.xlu0 %1010
    %1012 = vset.pattern.permute.xlu0 0
    %1013 = vperm.xlu0 %1012, %v974
    %v1014 = vpop.permute.xlu0 %1013
    %1015 = vset.pattern.permute.xlu0 0
    %1016 = vperm.xlu0 %1015, %v975
    %v1017 = vpop.permute.xlu0 %1016
    %1018 = vset.pattern.permute.xlu0 0
    %1019 = vperm.xlu0 %1018, %v976
    %v1020 = vpop.permute.xlu0 %1019
    %1021 = vset.pattern.permute.xlu0 0
    %1022 = vperm.xlu0 %1021, %v977
    %v1023 = vpop.permute.xlu0 %1022
    %1024 = vset.pattern.permute.xlu0 0
    %1025 = vperm.xlu0 %1024, %v978
    %v1026 = vpop.permute.xlu0 %1025
    %1027 = vset.pattern.permute.xlu0 0
    %1028 = vperm.xlu0 %1027, %v979
    %v1029 = vpop.permute.xlu0 %1028
    %1030 = vset.pattern.permute.xlu0 0
    %1031 = vperm.xlu0 %1030, %v980
    %v1032 = vpop.permute.xlu0 %1031
    %1033 = vset.pattern.permute.xlu0 0
    %1034 = vperm.xlu0 %1033, %v981
    %v1035 = vpop.permute.xlu0 %1034
    %1036 = vset.pattern.permute.xlu0 0
    %1037 = vperm.xlu0 %1036, %v982
    %v1038 = vpop.permute.xlu0 %1037
    %1039 = vset.pattern.permute.xlu0 0
    %1040 = vperm.xlu0 %1039, %v983
    %v1041 = vpop.permute.xlu0 %1040
    %1042 = vset.pattern.permute.xlu0 0
    %1043 = vperm.xlu0 %1042, %v984
    %v1044 = vpop.permute.xlu0 %1043
    %1045 = vset.pattern.permute.xlu0 0
    %1046 = vperm.xlu0 %1045, %v985
    %v1047 = vpop.permute.xlu0 %1046
    %1048 = vset.pattern.permute.xlu0 0
    %1049 = vperm.xlu0 %1048, %v986
    %v1050 = vpop.permute.xlu0 %1049
    %v1051 = vlaneseq
    %v1052 = vand.u32 %v1051, 127
    %v1053 = vlaneseq
    %v1054 = vshrl.u32 %v1053, 7
    %v1055 = vsub.s32 %v1052, %v1054
    %v1056 = vrot.slane %v1005, %v1055
    %v1057 = vlaneseq
    %v1058 = vshrl.u32 %v1057, 7
    %v1059 = vsub.s32 %v1052, %v1058
    %v1060 = vrot.slane %v1008, %v1059
    %v1061 = vlaneseq
    %v1062 = vshrl.u32 %v1061, 7
    %v1063 = vsub.s32 %v1052, %v1062
    %v1064 = vrot.slane %v1011, %v1063
    %v1065 = vlaneseq
    %v1066 = vshrl.u32 %v1065, 7
    %v1067 = vsub.s32 %v1052, %v1066
    %v1068 = vrot.slane %v1014, %v1067
    %v1069 = vlaneseq
    %v1070 = vshrl.u32 %v1069, 7
    %v1071 = vsub.s32 %v1052, %v1070
    %v1072 = vrot.slane %v1017, %v1071
    %v1073 = vlaneseq
    %v1074 = vshrl.u32 %v1073, 7
    %v1075 = vsub.s32 %v1052, %v1074
    %v1076 = vrot.slane %v1020, %v1075
    %v1077 = vlaneseq
    %v1078 = vshrl.u32 %v1077, 7
    %v1079 = vsub.s32 %v1052, %v1078
    %v1080 = vrot.slane %v1023, %v1079
    %v1081 = vlaneseq
    %v1082 = vshrl.u32 %v1081, 7
    %v1083 = vsub.s32 %v1052, %v1082
    %v1084 = vrot.slane %v1026, %v1083
    %v1085 = vlaneseq
    %v1086 = vshrl.u32 %v1085, 7
    %v1087 = vsub.s32 %v1052, %v1086
    %v1088 = vrot.slane %v1029, %v1087
    %v1089 = vlaneseq
    %v1090 = vshrl.u32 %v1089, 7
    %v1091 = vsub.s32 %v1052, %v1090
    %v1092 = vrot.slane %v1032, %v1091
    %v1093 = vlaneseq
    %v1094 = vshrl.u32 %v1093, 7
    %v1095 = vsub.s32 %v1052, %v1094
    %v1096 = vrot.slane %v1035, %v1095
    %v1097 = vlaneseq
    %v1098 = vshrl.u32 %v1097, 7
    %v1099 = vsub.s32 %v1052, %v1098
    %v1100 = vrot.slane %v1038, %v1099
    %v1101 = vlaneseq
    %v1102 = vshrl.u32 %v1101, 7
    %v1103 = vsub.s32 %v1052, %v1102
    %v1104 = vrot.slane %v1041, %v1103
    %v1105 = vlaneseq
    %v1106 = vshrl.u32 %v1105, 7
    %v1107 = vsub.s32 %v1052, %v1106
    %v1108 = vrot.slane %v1044, %v1107
    %v1109 = vlaneseq
    %v1110 = vshrl.u32 %v1109, 7
    %v1111 = vsub.s32 %v1052, %v1110
    %v1112 = vrot.slane %v1047, %v1111
    %v1113 = vlaneseq
    %v1114 = vshrl.u32 %v1113, 7
    %v1115 = vsub.s32 %v1052, %v1114
    %v1116 = vrot.slane %v1050, %v1115
    %vm1117 = vcmask 1041409
    %v1118 = vsel %vm1117, %v1060, %v1056
    %vm1119 = vcmask 1042434
    %v1120 = vsel %vm1119, %v1064, %v1118
    %vm1121 = vcmask 1043459
    %v1122 = vsel %vm1121, %v1068, %v1120
    %vm1123 = vcmask 1044484
    %v1124 = vsel %vm1123, %v1072, %v1122
    %vm1125 = vcmask 1045509
    %v1126 = vsel %vm1125, %v1076, %v1124
    %vm1127 = vcmask 1046534
    %v1128 = vsel %vm1127, %v1080, %v1126
    %vm1129 = vcmask 1047559
    %v1130 = vsel %vm1129, %v1084, %v1128
    %v1131 = vsel %vm1117, %v1092, %v1088
    %v1132 = vsel %vm1119, %v1096, %v1131
    %v1133 = vsel %vm1121, %v1100, %v1132
    %v1134 = vsel %vm1123, %v1104, %v1133
    %v1135 = vsel %vm1125, %v1108, %v1134
    %v1136 = vsel %vm1127, %v1112, %v1135
    %v1137 = vsel %vm1129, %v1116, %v1136
    %vm1140 = vcmask 64512
    %v1141 = vsel %vm1140, %v1130, -inf
    %1142 = vmax.xlane.f32.xlu0 %v1141
    %v1143 = vpop.xlane.xlu0 %1142
    %v1144 = vsel %vm1140, %v1137, -inf
    %1145 = vmax.xlane.f32.xlu0 %v1144
    %v1146 = vpop.xlane.xlu0 %1145
    %v1149 = vlaneseq
    %v1150 = vshrl.u32 %v1149, 7
    %v1151 = vsub.s32 0, %v1150
    %v1152 = vrot.slane %v1143, %v1151
    %v1153 = vlaneseq
    %v1154 = vshrl.u32 %v1153, 7
    %v1155 = vsub.s32 1, %v1154
    %v1156 = vrot.slane %v1143, %v1155
    %v1157 = vlaneseq
    %v1158 = vshrl.u32 %v1157, 7
    %v1159 = vsub.s32 2, %v1158
    %v1160 = vrot.slane %v1143, %v1159
    %v1161 = vlaneseq
    %v1162 = vshrl.u32 %v1161, 7
    %v1163 = vsub.s32 3, %v1162
    %v1164 = vrot.slane %v1143, %v1163
    %v1165 = vlaneseq
    %v1166 = vshrl.u32 %v1165, 7
    %v1167 = vsub.s32 4, %v1166
    %v1168 = vrot.slane %v1143, %v1167
    %v1169 = vlaneseq
    %v1170 = vshrl.u32 %v1169, 7
    %v1171 = vsub.s32 5, %v1170
    %v1172 = vrot.slane %v1143, %v1171
    %v1173 = vlaneseq
    %v1174 = vshrl.u32 %v1173, 7
    %v1175 = vsub.s32 6, %v1174
    %v1176 = vrot.slane %v1143, %v1175
    %v1177 = vlaneseq
    %v1178 = vshrl.u32 %v1177, 7
    %v1179 = vsub.s32 7, %v1178
    %v1180 = vrot.slane %v1143, %v1179
    %v1181 = vlaneseq
    %v1182 = vshrl.u32 %v1181, 7
    %v1183 = vsub.s32 0, %v1182
    %v1184 = vrot.slane %v1146, %v1183
    %v1185 = vlaneseq
    %v1186 = vshrl.u32 %v1185, 7
    %v1187 = vsub.s32 1, %v1186
    %v1188 = vrot.slane %v1146, %v1187
    %v1189 = vlaneseq
    %v1190 = vshrl.u32 %v1189, 7
    %v1191 = vsub.s32 2, %v1190
    %v1192 = vrot.slane %v1146, %v1191
    %v1193 = vlaneseq
    %v1194 = vshrl.u32 %v1193, 7
    %v1195 = vsub.s32 3, %v1194
    %v1196 = vrot.slane %v1146, %v1195
    %v1197 = vlaneseq
    %v1198 = vshrl.u32 %v1197, 7
    %v1199 = vsub.s32 4, %v1198
    %v1200 = vrot.slane %v1146, %v1199
    %v1201 = vlaneseq
    %v1202 = vshrl.u32 %v1201, 7
    %v1203 = vsub.s32 5, %v1202
    %v1204 = vrot.slane %v1146, %v1203
    %v1205 = vlaneseq
    %v1206 = vshrl.u32 %v1205, 7
    %v1207 = vsub.s32 6, %v1206
    %v1208 = vrot.slane %v1146, %v1207
    %v1209 = vlaneseq
    %v1210 = vshrl.u32 %v1209, 7
    %v1211 = vsub.s32 7, %v1210
    %v1212 = vrot.slane %v1146, %v1211
    %v1229 = vsub.f32 %v971, %v1152
    %v1230 = vsub.f32 %v972, %v1156
    %v1231 = vsub.f32 %v973, %v1160
    %v1232 = vsub.f32 %v974, %v1164
    %v1233 = vsub.f32 %v975, %v1168
    %v1234 = vsub.f32 %v976, %v1172
    %v1235 = vsub.f32 %v977, %v1176
    %v1236 = vsub.f32 %v978, %v1180
    %v1237 = vsub.f32 %v979, %v1184
    %v1238 = vsub.f32 %v980, %v1188
    %v1239 = vsub.f32 %v981, %v1192
    %v1240 = vsub.f32 %v982, %v1196
    %v1241 = vsub.f32 %v983, %v1200
    %v1242 = vsub.f32 %v984, %v1204
    %v1243 = vsub.f32 %v985, %v1208
    %v1244 = vsub.f32 %v986, %v1212
    %v1245 = vmul.f32 %v1229, 1.442695
    %v1246 = vpow.pop %v1245
    %v1247 = vmul.f32 %v1230, 1.442695
    %v1248 = vpow.pop %v1247
    %v1249 = vmul.f32 %v1231, 1.442695
    %v1250 = vpow.pop %v1249
    %v1251 = vmul.f32 %v1232, 1.442695
    %v1252 = vpow.pop %v1251
    %v1253 = vmul.f32 %v1233, 1.442695
    %v1254 = vpow.pop %v1253
    %v1255 = vmul.f32 %v1234, 1.442695
    %v1256 = vpow.pop %v1255
    %v1257 = vmul.f32 %v1235, 1.442695
    %v1258 = vpow.pop %v1257
    %v1259 = vmul.f32 %v1236, 1.442695
    %v1260 = vpow.pop %v1259
    %v1261 = vmul.f32 %v1237, 1.442695
    %v1262 = vpow.pop %v1261
    %v1263 = vmul.f32 %v1238, 1.442695
    %v1264 = vpow.pop %v1263
    %v1265 = vmul.f32 %v1239, 1.442695
    %v1266 = vpow.pop %v1265
    %v1267 = vmul.f32 %v1240, 1.442695
    %v1268 = vpow.pop %v1267
    %v1269 = vmul.f32 %v1241, 1.442695
    %v1270 = vpow.pop %v1269
    %v1271 = vmul.f32 %v1242, 1.442695
    %v1272 = vpow.pop %v1271
    %v1273 = vmul.f32 %v1243, 1.442695
    %v1274 = vpow.pop %v1273
    %v1275 = vmul.f32 %v1244, 1.442695
    %v1276 = vpow.pop %v1275
    %1293 = vset.pattern.permute.xlu0 0
    %1294 = vperm.xlu0 %1293, %v1246
    %v1295 = vpop.permute.xlu0 %1294
    %1296 = vset.pattern.permute.xlu0 0
    %1297 = vperm.xlu0 %1296, %v1248
    %v1298 = vpop.permute.xlu0 %1297
    %1299 = vset.pattern.permute.xlu0 0
    %1300 = vperm.xlu0 %1299, %v1250
    %v1301 = vpop.permute.xlu0 %1300
    %1302 = vset.pattern.permute.xlu0 0
    %1303 = vperm.xlu0 %1302, %v1252
    %v1304 = vpop.permute.xlu0 %1303
    %1305 = vset.pattern.permute.xlu0 0
    %1306 = vperm.xlu0 %1305, %v1254
    %v1307 = vpop.permute.xlu0 %1306
    %1308 = vset.pattern.permute.xlu0 0
    %1309 = vperm.xlu0 %1308, %v1256
    %v1310 = vpop.permute.xlu0 %1309
    %1311 = vset.pattern.permute.xlu0 0
    %1312 = vperm.xlu0 %1311, %v1258
    %v1313 = vpop.permute.xlu0 %1312
    %1314 = vset.pattern.permute.xlu0 0
    %1315 = vperm.xlu0 %1314, %v1260
    %v1316 = vpop.permute.xlu0 %1315
    %1317 = vset.pattern.permute.xlu0 0
    %1318 = vperm.xlu0 %1317, %v1262
    %v1319 = vpop.permute.xlu0 %1318
    %1320 = vset.pattern.permute.xlu0 0
    %1321 = vperm.xlu0 %1320, %v1264
    %v1322 = vpop.permute.xlu0 %1321
    %1323 = vset.pattern.permute.xlu0 0
    %1324 = vperm.xlu0 %1323, %v1266
    %v1325 = vpop.permute.xlu0 %1324
    %1326 = vset.pattern.permute.xlu0 0
    %1327 = vperm.xlu0 %1326, %v1268
    %v1328 = vpop.permute.xlu0 %1327
    %1329 = vset.pattern.permute.xlu0 0
    %1330 = vperm.xlu0 %1329, %v1270
    %v1331 = vpop.permute.xlu0 %1330
    %1332 = vset.pattern.permute.xlu0 0
    %1333 = vperm.xlu0 %1332, %v1272
    %v1334 = vpop.permute.xlu0 %1333
    %1335 = vset.pattern.permute.xlu0 0
    %1336 = vperm.xlu0 %1335, %v1274
    %v1337 = vpop.permute.xlu0 %1336
    %1338 = vset.pattern.permute.xlu0 0
    %1339 = vperm.xlu0 %1338, %v1276
    %v1340 = vpop.permute.xlu0 %1339
    %v1341 = vlaneseq
    %v1342 = vshrl.u32 %v1341, 7
    %v1343 = vsub.s32 %v1052, %v1342
    %v1344 = vrot.slane %v1295, %v1343
    %v1345 = vlaneseq
    %v1346 = vshrl.u32 %v1345, 7
    %v1347 = vsub.s32 %v1052, %v1346
    %v1348 = vrot.slane %v1298, %v1347
    %v1349 = vlaneseq
    %v1350 = vshrl.u32 %v1349, 7
    %v1351 = vsub.s32 %v1052, %v1350
    %v1352 = vrot.slane %v1301, %v1351
    %v1353 = vlaneseq
    %v1354 = vshrl.u32 %v1353, 7
    %v1355 = vsub.s32 %v1052, %v1354
    %v1356 = vrot.slane %v1304, %v1355
    %v1357 = vlaneseq
    %v1358 = vshrl.u32 %v1357, 7
    %v1359 = vsub.s32 %v1052, %v1358
    %v1360 = vrot.slane %v1307, %v1359
    %v1361 = vlaneseq
    %v1362 = vshrl.u32 %v1361, 7
    %v1363 = vsub.s32 %v1052, %v1362
    %v1364 = vrot.slane %v1310, %v1363
    %v1365 = vlaneseq
    %v1366 = vshrl.u32 %v1365, 7
    %v1367 = vsub.s32 %v1052, %v1366
    %v1368 = vrot.slane %v1313, %v1367
    %v1369 = vlaneseq
    %v1370 = vshrl.u32 %v1369, 7
    %v1371 = vsub.s32 %v1052, %v1370
    %v1372 = vrot.slane %v1316, %v1371
    %v1373 = vlaneseq
    %v1374 = vshrl.u32 %v1373, 7
    %v1375 = vsub.s32 %v1052, %v1374
    %v1376 = vrot.slane %v1319, %v1375
    %v1377 = vlaneseq
    %v1378 = vshrl.u32 %v1377, 7
    %v1379 = vsub.s32 %v1052, %v1378
    %v1380 = vrot.slane %v1322, %v1379
    %v1381 = vlaneseq
    %v1382 = vshrl.u32 %v1381, 7
    %v1383 = vsub.s32 %v1052, %v1382
    %v1384 = vrot.slane %v1325, %v1383
    %v1385 = vlaneseq
    %v1386 = vshrl.u32 %v1385, 7
    %v1387 = vsub.s32 %v1052, %v1386
    %v1388 = vrot.slane %v1328, %v1387
    %v1389 = vlaneseq
    %v1390 = vshrl.u32 %v1389, 7
    %v1391 = vsub.s32 %v1052, %v1390
    %v1392 = vrot.slane %v1331, %v1391
    %v1393 = vlaneseq
    %v1394 = vshrl.u32 %v1393, 7
    %v1395 = vsub.s32 %v1052, %v1394
    %v1396 = vrot.slane %v1334, %v1395
    %v1397 = vlaneseq
    %v1398 = vshrl.u32 %v1397, 7
    %v1399 = vsub.s32 %v1052, %v1398
    %v1400 = vrot.slane %v1337, %v1399
    %v1401 = vlaneseq
    %v1402 = vshrl.u32 %v1401, 7
    %v1403 = vsub.s32 %v1052, %v1402
    %v1404 = vrot.slane %v1340, %v1403
    %v1405 = vsel %vm1117, %v1348, %v1344
    %v1406 = vsel %vm1119, %v1352, %v1405
    %v1407 = vsel %vm1121, %v1356, %v1406
    %v1408 = vsel %vm1123, %v1360, %v1407
    %v1409 = vsel %vm1125, %v1364, %v1408
    %v1410 = vsel %vm1127, %v1368, %v1409
    %v1411 = vsel %vm1129, %v1372, %v1410
    %v1412 = vsel %vm1117, %v1380, %v1376
    %v1413 = vsel %vm1119, %v1384, %v1412
    %v1414 = vsel %vm1121, %v1388, %v1413
    %v1415 = vsel %vm1123, %v1392, %v1414
    %v1416 = vsel %vm1125, %v1396, %v1415
    %v1417 = vsel %vm1127, %v1400, %v1416
    %v1418 = vsel %vm1129, %v1404, %v1417
    %v1421 = vsel %vm1140, %v1411, 0.0
    %1422 = vadd.xlane.f32.xlu0 %v1421
    %v1423 = vpop.xlane.xlu0 %1422
    %v1424 = vsel %vm1140, %v1418, 0.0
    %1425 = vadd.xlane.f32.xlu0 %v1424
    %v1426 = vpop.xlane.xlu0 %1425
    %v1427 = vrcp.pop %v1423
    %v1428 = vrcp.pop %v1426
    %v1431 = vlaneseq
    %v1432 = vshrl.u32 %v1431, 7
    %v1433 = vsub.s32 0, %v1432
    %v1434 = vrot.slane %v1427, %v1433
    %v1435 = vlaneseq
    %v1436 = vshrl.u32 %v1435, 7
    %v1437 = vsub.s32 1, %v1436
    %v1438 = vrot.slane %v1427, %v1437
    %v1439 = vlaneseq
    %v1440 = vshrl.u32 %v1439, 7
    %v1441 = vsub.s32 2, %v1440
    %v1442 = vrot.slane %v1427, %v1441
    %v1443 = vlaneseq
    %v1444 = vshrl.u32 %v1443, 7
    %v1445 = vsub.s32 3, %v1444
    %v1446 = vrot.slane %v1427, %v1445
    %v1447 = vlaneseq
    %v1448 = vshrl.u32 %v1447, 7
    %v1449 = vsub.s32 4, %v1448
    %v1450 = vrot.slane %v1427, %v1449
    %v1451 = vlaneseq
    %v1452 = vshrl.u32 %v1451, 7
    %v1453 = vsub.s32 5, %v1452
    %v1454 = vrot.slane %v1427, %v1453
    %v1455 = vlaneseq
    %v1456 = vshrl.u32 %v1455, 7
    %v1457 = vsub.s32 6, %v1456
    %v1458 = vrot.slane %v1427, %v1457
    %v1459 = vlaneseq
    %v1460 = vshrl.u32 %v1459, 7
    %v1461 = vsub.s32 7, %v1460
    %v1462 = vrot.slane %v1427, %v1461
    %v1463 = vlaneseq
    %v1464 = vshrl.u32 %v1463, 7
    %v1465 = vsub.s32 0, %v1464
    %v1466 = vrot.slane %v1428, %v1465
    %v1467 = vlaneseq
    %v1468 = vshrl.u32 %v1467, 7
    %v1469 = vsub.s32 1, %v1468
    %v1470 = vrot.slane %v1428, %v1469
    %v1471 = vlaneseq
    %v1472 = vshrl.u32 %v1471, 7
    %v1473 = vsub.s32 2, %v1472
    %v1474 = vrot.slane %v1428, %v1473
    %v1475 = vlaneseq
    %v1476 = vshrl.u32 %v1475, 7
    %v1477 = vsub.s32 3, %v1476
    %v1478 = vrot.slane %v1428, %v1477
    %v1479 = vlaneseq
    %v1480 = vshrl.u32 %v1479, 7
    %v1481 = vsub.s32 4, %v1480
    %v1482 = vrot.slane %v1428, %v1481
    %v1483 = vlaneseq
    %v1484 = vshrl.u32 %v1483, 7
    %v1485 = vsub.s32 5, %v1484
    %v1486 = vrot.slane %v1428, %v1485
    %v1487 = vlaneseq
    %v1488 = vshrl.u32 %v1487, 7
    %v1489 = vsub.s32 6, %v1488
    %v1490 = vrot.slane %v1428, %v1489
    %v1491 = vlaneseq
    %v1492 = vshrl.u32 %v1491, 7
    %v1493 = vsub.s32 7, %v1492
    %v1494 = vrot.slane %v1428, %v1493
    %v1511 = vmul.f32 %v1246, %v1434
    %v1512 = vmul.f32 %v1248, %v1438
    %v1513 = vmul.f32 %v1250, %v1442
    %v1514 = vmul.f32 %v1252, %v1446
    %v1515 = vmul.f32 %v1254, %v1450
    %v1516 = vmul.f32 %v1256, %v1454
    %v1517 = vmul.f32 %v1258, %v1458
    %v1518 = vmul.f32 %v1260, %v1462
    %v1519 = vmul.f32 %v1262, %v1466
    %v1520 = vmul.f32 %v1264, %v1470
    %v1521 = vmul.f32 %v1266, %v1474
    %v1522 = vmul.f32 %v1268, %v1478
    %v1523 = vmul.f32 %v1270, %v1482
    %v1524 = vmul.f32 %v1272, %v1486
    %v1525 = vmul.f32 %v1274, %v1490
    %v1526 = vmul.f32 %v1276, %v1494
    %1528 = vset.pattern.permute.xlu0 0
    %1529 = vperm.xlu0 %1528, %v1511
    %v1530 = vpop.permute.xlu0 %1529
    %1533 = vset.pattern.permute.xlu0 0
    %1534 = vperm.xlu0 %1533, %v1512
    %v1535 = vpop.permute.xlu0 %1534
    %1538 = vset.pattern.permute.xlu0 0
    %1539 = vperm.xlu0 %1538, %v1513
    %v1540 = vpop.permute.xlu0 %1539
    %1543 = vset.pattern.permute.xlu0 0
    %1544 = vperm.xlu0 %1543, %v1514
    %v1545 = vpop.permute.xlu0 %1544
    %1548 = vset.pattern.permute.xlu0 0
    %1549 = vperm.xlu0 %1548, %v1515
    %v1550 = vpop.permute.xlu0 %1549
    %1553 = vset.pattern.permute.xlu0 0
    %1554 = vperm.xlu0 %1553, %v1516
    %v1555 = vpop.permute.xlu0 %1554
    %1558 = vset.pattern.permute.xlu0 0
    %1559 = vperm.xlu0 %1558, %v1517
    %v1560 = vpop.permute.xlu0 %1559
    %1563 = vset.pattern.permute.xlu0 0
    %1564 = vperm.xlu0 %1563, %v1518
    %v1565 = vpop.permute.xlu0 %1564
    %1568 = vset.pattern.permute.xlu0 0
    %1569 = vperm.xlu0 %1568, %v1519
    %v1570 = vpop.permute.xlu0 %1569
    %1573 = vset.pattern.permute.xlu0 0
    %1574 = vperm.xlu0 %1573, %v1520
    %v1575 = vpop.permute.xlu0 %1574
    %1578 = vset.pattern.permute.xlu0 0
    %1579 = vperm.xlu0 %1578, %v1521
    %v1580 = vpop.permute.xlu0 %1579
    %1583 = vset.pattern.permute.xlu0 0
    %1584 = vperm.xlu0 %1583, %v1522
    %v1585 = vpop.permute.xlu0 %1584
    %1588 = vset.pattern.permute.xlu0 0
    %1589 = vperm.xlu0 %1588, %v1523
    %v1590 = vpop.permute.xlu0 %1589
    %1593 = vset.pattern.permute.xlu0 0
    %1594 = vperm.xlu0 %1593, %v1524
    %v1595 = vpop.permute.xlu0 %1594
    %1598 = vset.pattern.permute.xlu0 0
    %1599 = vperm.xlu0 %1598, %v1525
    %v1600 = vpop.permute.xlu0 %1599
    %1603 = vset.pattern.permute.xlu0 0
    %1604 = vperm.xlu0 %1603, %v1526
    %v1605 = vpop.permute.xlu0 %1604
    %v1607 = vmul.f32 %v1530, %v198
    %v1608 = vmul.f32 %v1535, %v201
    %v1609 = vmul.f32 %v1540, %v206
    %v1610 = vmul.f32 %v1545, %v209
    %v1611 = vmul.f32 %v1550, %v214
    %v1612 = vmul.f32 %v1555, %v217
    %v1613 = vmul.f32 %v1560, %v222
    %v1614 = vmul.f32 %v1565, %v225
    %v1615 = vmul.f32 %v1570, %v230
    %v1616 = vmul.f32 %v1575, %v233
    %v1617 = vmul.f32 %v1580, %v238
    %v1618 = vmul.f32 %v1585, %v241
    %v1619 = vmul.f32 %v1590, %v246
    %v1620 = vmul.f32 %v1595, %v249
    %v1621 = vmul.f32 %v1600, %v254
    %v1622 = vmul.f32 %v1605, %v257
    %v1623 = vsel %vm306, %v1607, 0.0
    %v1624 = vrot.slane %v1623, 4
    %v1625 = vadd.f32 %v1623, %v1624
    %v1626 = vrot.slane %v1625, 2
    %v1627 = vadd.f32 %v1625, %v1626
    %v1628 = vrot.slane %v1627, 1
    %v1629 = vadd.f32 %v1627, %v1628
    %v1630 = vsel %vm306, %v1608, 0.0
    %v1631 = vrot.slane %v1630, 4
    %v1632 = vadd.f32 %v1630, %v1631
    %v1633 = vrot.slane %v1632, 2
    %v1634 = vadd.f32 %v1632, %v1633
    %v1635 = vrot.slane %v1634, 1
    %v1636 = vadd.f32 %v1634, %v1635
    %v1637 = vsel %vm306, %v1609, 0.0
    %v1638 = vrot.slane %v1637, 4
    %v1639 = vadd.f32 %v1637, %v1638
    %v1640 = vrot.slane %v1639, 2
    %v1641 = vadd.f32 %v1639, %v1640
    %v1642 = vrot.slane %v1641, 1
    %v1643 = vadd.f32 %v1641, %v1642
    %v1644 = vsel %vm306, %v1610, 0.0
    %v1645 = vrot.slane %v1644, 4
    %v1646 = vadd.f32 %v1644, %v1645
    %v1647 = vrot.slane %v1646, 2
    %v1648 = vadd.f32 %v1646, %v1647
    %v1649 = vrot.slane %v1648, 1
    %v1650 = vadd.f32 %v1648, %v1649
    %v1651 = vsel %vm306, %v1611, 0.0
    %v1652 = vrot.slane %v1651, 4
    %v1653 = vadd.f32 %v1651, %v1652
    %v1654 = vrot.slane %v1653, 2
    %v1655 = vadd.f32 %v1653, %v1654
    %v1656 = vrot.slane %v1655, 1
    %v1657 = vadd.f32 %v1655, %v1656
    %v1658 = vsel %vm306, %v1612, 0.0
    %v1659 = vrot.slane %v1658, 4
    %v1660 = vadd.f32 %v1658, %v1659
    %v1661 = vrot.slane %v1660, 2
    %v1662 = vadd.f32 %v1660, %v1661
    %v1663 = vrot.slane %v1662, 1
    %v1664 = vadd.f32 %v1662, %v1663
    %v1665 = vsel %vm306, %v1613, 0.0
    %v1666 = vrot.slane %v1665, 4
    %v1667 = vadd.f32 %v1665, %v1666
    %v1668 = vrot.slane %v1667, 2
    %v1669 = vadd.f32 %v1667, %v1668
    %v1670 = vrot.slane %v1669, 1
    %v1671 = vadd.f32 %v1669, %v1670
    %v1672 = vsel %vm306, %v1614, 0.0
    %v1673 = vrot.slane %v1672, 4
    %v1674 = vadd.f32 %v1672, %v1673
    %v1675 = vrot.slane %v1674, 2
    %v1676 = vadd.f32 %v1674, %v1675
    %v1677 = vrot.slane %v1676, 1
    %v1678 = vadd.f32 %v1676, %v1677
    %v1679 = vsel %vm306, %v1615, 0.0
    %v1680 = vrot.slane %v1679, 4
    %v1681 = vadd.f32 %v1679, %v1680
    %v1682 = vrot.slane %v1681, 2
    %v1683 = vadd.f32 %v1681, %v1682
    %v1684 = vrot.slane %v1683, 1
    %v1685 = vadd.f32 %v1683, %v1684
    %v1686 = vsel %vm306, %v1616, 0.0
    %v1687 = vrot.slane %v1686, 4
    %v1688 = vadd.f32 %v1686, %v1687
    %v1689 = vrot.slane %v1688, 2
    %v1690 = vadd.f32 %v1688, %v1689
    %v1691 = vrot.slane %v1690, 1
    %v1692 = vadd.f32 %v1690, %v1691
    %v1693 = vsel %vm306, %v1617, 0.0
    %v1694 = vrot.slane %v1693, 4
    %v1695 = vadd.f32 %v1693, %v1694
    %v1696 = vrot.slane %v1695, 2
    %v1697 = vadd.f32 %v1695, %v1696
    %v1698 = vrot.slane %v1697, 1
    %v1699 = vadd.f32 %v1697, %v1698
    %v1700 = vsel %vm306, %v1618, 0.0
    %v1701 = vrot.slane %v1700, 4
    %v1702 = vadd.f32 %v1700, %v1701
    %v1703 = vrot.slane %v1702, 2
    %v1704 = vadd.f32 %v1702, %v1703
    %v1705 = vrot.slane %v1704, 1
    %v1706 = vadd.f32 %v1704, %v1705
    %v1707 = vsel %vm306, %v1619, 0.0
    %v1708 = vrot.slane %v1707, 4
    %v1709 = vadd.f32 %v1707, %v1708
    %v1710 = vrot.slane %v1709, 2
    %v1711 = vadd.f32 %v1709, %v1710
    %v1712 = vrot.slane %v1711, 1
    %v1713 = vadd.f32 %v1711, %v1712
    %v1714 = vsel %vm306, %v1620, 0.0
    %v1715 = vrot.slane %v1714, 4
    %v1716 = vadd.f32 %v1714, %v1715
    %v1717 = vrot.slane %v1716, 2
    %v1718 = vadd.f32 %v1716, %v1717
    %v1719 = vrot.slane %v1718, 1
    %v1720 = vadd.f32 %v1718, %v1719
    %v1721 = vsel %vm306, %v1621, 0.0
    %v1722 = vrot.slane %v1721, 4
    %v1723 = vadd.f32 %v1721, %v1722
    %v1724 = vrot.slane %v1723, 2
    %v1725 = vadd.f32 %v1723, %v1724
    %v1726 = vrot.slane %v1725, 1
    %v1727 = vadd.f32 %v1725, %v1726
    %v1728 = vsel %vm306, %v1622, 0.0
    %v1729 = vrot.slane %v1728, 4
    %v1730 = vadd.f32 %v1728, %v1729
    %v1731 = vrot.slane %v1730, 2
    %v1732 = vadd.f32 %v1730, %v1731
    %v1733 = vrot.slane %v1732, 1
    %v1734 = vadd.f32 %v1732, %v1733
    %v1735 = vld [vmem:[%s3] sm:$0xf]
    %v1736 = vld [vmem:[%s3 + $0x4] sm:$0xf]
    %v1737 = vld [vmem:[%s3 + $0x8] sm:$0xf]
    %v1738 = vld [vmem:[%s3 + $0xc] sm:$0xf]
    %v1739 = vld [vmem:[%s3 + $0x10] sm:$0xf]
    %v1740 = vld [vmem:[%s3 + $0x14] sm:$0xf]
    %v1741 = vld [vmem:[%s3 + $0x18] sm:$0xf]
    %v1742 = vld [vmem:[%s3 + $0x1c] sm:$0xf]
    %v1743 = vld [vmem:[%s3 + $0x20] sm:$0xf]
    %v1744 = vld [vmem:[%s3 + $0x24] sm:$0xf]
    %v1745 = vld [vmem:[%s3 + $0x28] sm:$0xf]
    %v1746 = vld [vmem:[%s3 + $0x2c] sm:$0xf]
    %v1747 = vld [vmem:[%s3 + $0x30] sm:$0xf]
    %v1748 = vld [vmem:[%s3 + $0x34] sm:$0xf]
    %v1749 = vld [vmem:[%s3 + $0x38] sm:$0xf]
    %v1750 = vld [vmem:[%s3 + $0x3c] sm:$0xf]
    %v1751 = vld [vmem:[%s4] sm:$0xff]
    %v1752 = vld [vmem:[%s4 + $0x8] sm:$0xff]
    %v1753 = vld [vmem:[%s5 + $0x40] sm:$0xf]
    %v1754 = vld [vmem:[%s5 + $0x44] sm:$0xf]
    %v1755 = vld [vmem:[%s5 + $0x48] sm:$0xf]
    %v1756 = vld [vmem:[%s5 + $0x4c] sm:$0xf]
    %v1757 = vld [vmem:[%s5 + $0x50] sm:$0xf]
    %v1758 = vld [vmem:[%s5 + $0x54] sm:$0xf]
    %v1759 = vld [vmem:[%s5 + $0x58] sm:$0xf]
    %v1760 = vld [vmem:[%s5 + $0x5c] sm:$0xf]
    %v1761 = vld [vmem:[%s6 + $0x2] sm:$0x1]
    %v1762 = vld [vmem:[%s6 + $0x6] sm:$0x1]
    %s1763 = sld [smem:[#allocation2 + $0x1]]
    %v1768 = vunpack.c.l.b16 %v1757
    %v1769 = vunpack.c.l.b16 %v1758
    %v1770 = vunpack.c.l.b16 %v1759
    %v1771 = vunpack.c.l.b16 %v1760
    %v1772 = vpack.c.b16 %v1769, %v1768
    %v1773 = vpack.c.b16 %v1771, %v1770
    %1776 = vmatprep.subr.bf16.mxu0 0
    %1777 = vmatpush1.bf16.msra.mxu0 %v1772
    %1778 = vmatprep.subr.bf16.mxu0 0
    %1779 = vmatpush1.bf16.msra.mxu0 %v1773
    %1780 = vmatprep.subr.bf16.mxu0 0
    %1781 = vmatpush1.bf16.msra.mxu0 0
    %1782 = vmatprep.subr.bf16.mxu0 0
    %1783 = vmatpush1.bf16.msra.mxu0 0
    %1784 = vmatprep.subr.bf16.mxu0 0
    %1785 = vmatpush1.bf16.msra.mxu0 0
    %1786 = vmatprep.subr.bf16.mxu0 0
    %1787 = vmatpush1.bf16.msra.mxu0 0
    %1788 = vmatprep.subr.bf16.mxu0 0
    %1789 = vmatpush1.bf16.msra.mxu0 0
    %1790 = vmatprep.subr.bf16.mxu0 0
    %1791 = vmatpush1.bf16.msra.mxu0 0
    %1792 = vmatprep.subr.bf16.mxu0 0
    %1793 = vmatpush1.bf16.msra.mxu0 0
    %1794 = vmatprep.subr.bf16.mxu0 0
    %1795 = vmatpush1.bf16.msra.mxu0 0
    %1796 = vmatprep.subr.bf16.mxu0 0
    %1797 = vmatpush1.bf16.msra.mxu0 0
    %1798 = vmatprep.subr.bf16.mxu0 0
    %1799 = vmatpush1.bf16.msra.mxu0 0
    %1800 = vmatprep.subr.bf16.mxu0 0
    %1801 = vmatpush1.bf16.msra.mxu0 0
    %1802 = vmatprep.subr.bf16.mxu0 0
    %1803 = vmatpush1.bf16.msra.mxu0 0
    %1804 = vmatprep.subr.bf16.mxu0 0
    %1805 = vmatpush1.bf16.msra.mxu0 0
    %1806 = vmatprep.subr.bf16.mxu0 0
    %1807 = vmatpush1.bf16.msra.mxu0 0
    %1808 = vmatprep.mubr.bf16.mxu0 0
    %1809 = vmatmul.mubr.bf16.gmra.mrb[0].mxu0 %v308
    %v1810 = vpop.f32.mrb[0].mxu0
    %v1811 = vadd.f32 0.0, %v1810
    %v1812 = vpop.f32.mrb[0].mxu0
    %v1813 = vpop.f32.mrb[0].mxu0
    %v1814 = vadd.f32 0.0, %v1813
    %v1815 = vpop.f32.mrb[0].mxu0
    %1816 = vdwg.mxu0
    %v1833 = vunpack.c.l.b16 %v1735
    %v1834 = vunpack.c.l.b16 %v1736
    %v1835 = vunpack.c.l.b16 %v1737
    %v1836 = vunpack.c.l.b16 %v1738
    %v1837 = vunpack.c.l.b16 %v1739
    %v1838 = vunpack.c.l.b16 %v1740
    %v1839 = vunpack.c.l.b16 %v1741
    %v1840 = vunpack.c.l.b16 %v1742
    %v1841 = vunpack.c.l.b16 %v1743
    %v1842 = vunpack.c.l.b16 %v1744
    %v1843 = vunpack.c.l.b16 %v1745
    %v1844 = vunpack.c.l.b16 %v1746
    %v1845 = vunpack.c.l.b16 %v1747
    %v1846 = vunpack.c.l.b16 %v1748
    %v1847 = vunpack.c.l.b16 %v1749
    %v1848 = vunpack.c.l.b16 %v1750
    %v1849 = vpack.c.b16 %v1834, %v1833
    %v1850 = vpack.c.b16 %v1836, %v1835
    %v1851 = vpack.c.b16 %v1838, %v1837
    %v1852 = vpack.c.b16 %v1840, %v1839
    %v1853 = vpack.c.b16 %v1842, %v1841
    %v1854 = vpack.c.b16 %v1844, %v1843
    %v1855 = vpack.c.b16 %v1846, %v1845
    %v1856 = vpack.c.b16 %v1848, %v1847
    %v1861 = vunpack.c.l.b16 %v1753
    %v1862 = vunpack.c.l.b16 %v1754
    %v1863 = vunpack.c.l.b16 %v1755
    %v1864 = vunpack.c.l.b16 %v1756
    %v1865 = vpack.c.b16 %v1862, %v1861
    %v1866 = vpack.c.b16 %v1864, %v1863
    %v1870 = vsel %vm306, %v1849, 0
    %v1873 = vsel %vm306, %v1850, 0
    %v1876 = vsel %vm306, %v1851, 0
    %v1879 = vsel %vm306, %v1852, 0
    %v1882 = vsel %vm306, %v1853, 0
    %v1885 = vsel %vm306, %v1854, 0
    %v1888 = vsel %vm306, %v1855, 0
    %v1891 = vsel %vm306, %v1856, 0
    %1893 = vmatprep.subr.bf16.mxu0 0
    %1894 = vmatpush1.bf16.msra.mxu0 %v1865
    %1895 = vmatprep.subr.bf16.mxu0 0
    %1896 = vmatpush1.bf16.msra.mxu0 %v1866
    %1897 = vmatprep.subr.bf16.mxu0 0
    %1898 = vmatpush1.bf16.msra.mxu0 0
    %1899 = vmatprep.subr.bf16.mxu0 0
    %1900 = vmatpush1.bf16.msra.mxu0 0
    %1901 = vmatprep.subr.bf16.mxu0 0
    %1902 = vmatpush1.bf16.msra.mxu0 0
    %1903 = vmatprep.subr.bf16.mxu0 0
    %1904 = vmatpush1.bf16.msra.mxu0 0
    %1905 = vmatprep.subr.bf16.mxu0 0
    %1906 = vmatpush1.bf16.msra.mxu0 0
    %1907 = vmatprep.subr.bf16.mxu0 0
    %1908 = vmatpush1.bf16.msra.mxu0 0
    %1909 = vmatprep.subr.bf16.mxu0 0
    %1910 = vmatpush1.bf16.msra.mxu0 0
    %1911 = vmatprep.subr.bf16.mxu0 0
    %1912 = vmatpush1.bf16.msra.mxu0 0
    %1913 = vmatprep.subr.bf16.mxu0 0
    %1914 = vmatpush1.bf16.msra.mxu0 0
    %1915 = vmatprep.subr.bf16.mxu0 0
    %1916 = vmatpush1.bf16.msra.mxu0 0
    %1917 = vmatprep.subr.bf16.mxu0 0
    %1918 = vmatpush1.bf16.msra.mxu0 0
    %1919 = vmatprep.subr.bf16.mxu0 0
    %1920 = vmatpush1.bf16.msra.mxu0 0
    %1921 = vmatprep.subr.bf16.mxu0 0
    %1922 = vmatpush1.bf16.msra.mxu0 0
    %1923 = vmatprep.subr.bf16.mxu0 0
    %1924 = vmatpush1.bf16.msra.mxu0 0
    %1925 = vmatprep.mubr.bf16.mxu0 0
    %1926 = vmatmul.mubr.bf16.gmra.mrb[0].mxu0 %v1870
    %v1927 = vpop.f32.mrb[0].mxu0
    %v1928 = vadd.f32 0.0, %v1927
    %v1929 = vpop.f32.mrb[0].mxu0
    %v1930 = vpop.f32.mrb[0].mxu0
    %v1931 = vadd.f32 0.0, %v1930
    %v1932 = vpop.f32.mrb[0].mxu0
    %1933 = vmatprep.mubr.bf16.mxu0 0
    %1934 = vmatmul.mubr.bf16.gmra.mrb[0].mxu0 %v1873
    %v1935 = vpop.f32.mrb[0].mxu0
    %v1936 = vadd.f32 0.0, %v1935
    %v1937 = vpop.f32.mrb[0].mxu0
    %v1938 = vpop.f32.mrb[0].mxu0
    %v1939 = vadd.f32 0.0, %v1938
    %v1940 = vpop.f32.mrb[0].mxu0
    %1941 = vmatprep.mubr.bf16.mxu0 0
    %1942 = vmatmul.mubr.bf16.gmra.mrb[0].mxu0 %v1876
    %v1943 = vpop.f32.mrb[0].mxu0
    %v1944 = vadd.f32 0.0, %v1943
    %v1945 = vpop.f32.mrb[0].mxu0
    %v1946 = vpop.f32.mrb[0].mxu0
    %v1947 = vadd.f32 0.0, %v1946
    %v1948 = vpop.f32.mrb[0].mxu0
    %1949 = vmatprep.mubr.bf16.mxu0 0
    %1950 = vmatmul.mubr.bf16.gmra.mrb[0].mxu0 %v1879
    %v1951 = vpop.f32.mrb[0].mxu0
    %v1952 = vadd.f32 0.0, %v1951
    %v1953 = vpop.f32.mrb[0].mxu0
    %v1954 = vpop.f32.mrb[0].mxu0
    %v1955 = vadd.f32 0.0, %v1954
    %v1956 = vpop.f32.mrb[0].mxu0
    %1957 = vmatprep.mubr.bf16.mxu0 0
    %1958 = vmatmul.mubr.bf16.gmra.mrb[0].mxu0 %v1882
    %v1959 = vpop.f32.mrb[0].mxu0
    %v1960 = vadd.f32 0.0, %v1959
    %v1961 = vpop.f32.mrb[0].mxu0
    %v1962 = vpop.f32.mrb[0].mxu0
    %v1963 = vadd.f32 0.0, %v1962
    %v1964 = vpop.f32.mrb[0].mxu0
    %1965 = vmatprep.mubr.bf16.mxu0 0
    %1966 = vmatmul.mubr.bf16.gmra.mrb[0].mxu0 %v1885
    %v1967 = vpop.f32.mrb[0].mxu0
    %v1968 = vadd.f32 0.0, %v1967
    %v1969 = vpop.f32.mrb[0].mxu0
    %v1970 = vpop.f32.mrb[0].mxu0
    %v1971 = vadd.f32 0.0, %v1970
    %v1972 = vpop.f32.mrb[0].mxu0
    %1973 = vmatprep.mubr.bf16.mxu0 0
    %1974 = vmatmul.mubr.bf16.gmra.mrb[0].mxu0 %v1888
    %v1975 = vpop.f32.mrb[0].mxu0
    %v1976 = vadd.f32 0.0, %v1975
    %v1977 = vpop.f32.mrb[0].mxu0
    %v1978 = vpop.f32.mrb[0].mxu0
    %v1979 = vadd.f32 0.0, %v1978
    %v1980 = vpop.f32.mrb[0].mxu0
    %1981 = vmatprep.mubr.bf16.mxu0 0
    %1982 = vmatmul.mubr.bf16.gmra.mrb[0].mxu0 %v1891
    %v1983 = vpop.f32.mrb[0].mxu0
    %v1984 = vadd.f32 0.0, %v1983
    %v1985 = vpop.f32.mrb[0].mxu0
    %v1986 = vpop.f32.mrb[0].mxu0
    %v1987 = vadd.f32 0.0, %v1986
    %v1988 = vpop.f32.mrb[0].mxu0
    %1989 = vdwg.mxu0
    %v1992 = vcombine.high %v1811, %v1811
    %v1994 = vunpack.c.l.s4 1966171168
    %v1995 = vunpack.c.0.s8 %v1994
    %v1996 = vlaneseq
    %v1997 = vshrl.u32 %v1996, 7
    %v1998 = vsub.s32 %v1995, %v1997
    %v1999 = vrot.slane %v1811, %v1998
    %v2001 = vunpack.c.l.s4 1966171168
    %v2002 = vunpack.c.0.s8 %v2001
    %v2003 = vlaneseq
    %v2004 = vshrl.u32 %v2003, 7
    %v2005 = vsub.s32 %v2002, %v2004
    %v2006 = vrot.slane %v1992, %v2005
    %v2007 = vcombine.high %v1999, %v1999
    %v2008 = vcombine.high %v2006, %v2006
    %v2010 = vunpack.c.l.s4 1966171168
    %v2011 = vunpack.c.0.s8 %v2010
    %v2012 = vlaneseq
    %v2013 = vshrl.u32 %v2012, 7
    %v2014 = vsub.s32 %v2011, %v2013
    %v2015 = vrot.slane %v1999, %v2014
    %v2017 = vunpack.c.l.s4 1966171168
    %v2018 = vunpack.c.0.s8 %v2017
    %v2019 = vlaneseq
    %v2020 = vshrl.u32 %v2019, 7
    %v2021 = vsub.s32 %v2018, %v2020
    %v2022 = vrot.slane %v2006, %v2021
    %v2024 = vunpack.c.l.s4 1966171168
    %v2025 = vunpack.c.0.s8 %v2024
    %v2026 = vlaneseq
    %v2027 = vshrl.u32 %v2026, 7
    %v2028 = vsub.s32 %v2025, %v2027
    %v2029 = vrot.slane %v2007, %v2028
    %v2031 = vunpack.c.l.s4 1966171168
    %v2032 = vunpack.c.0.s8 %v2031
    %v2033 = vlaneseq
    %v2034 = vshrl.u32 %v2033, 7
    %v2035 = vsub.s32 %v2032, %v2034
    %v2036 = vrot.slane %v2008, %v2035
    %v2037 = vcombine.high %v2015, %v2015
    %v2038 = vcombine.high %v2022, %v2022
    %v2039 = vcombine.high %v2029, %v2029
    %v2040 = vcombine.high %v2036, %v2036
    %v2041 = vcombine.high %v1814, %v1814
    %v2043 = vunpack.c.l.s4 1966171168
    %v2044 = vunpack.c.0.s8 %v2043
    %v2045 = vlaneseq
    %v2046 = vshrl.u32 %v2045, 7
    %v2047 = vsub.s32 %v2044, %v2046
    %v2048 = vrot.slane %v1814, %v2047
    %v2050 = vunpack.c.l.s4 1966171168
    %v2051 = vunpack.c.0.s8 %v2050
    %v2052 = vlaneseq
    %v2053 = vshrl.u32 %v2052, 7
    %v2054 = vsub.s32 %v2051, %v2053
    %v2055 = vrot.slane %v2041, %v2054
    %v2056 = vcombine.high %v2048, %v2048
    %v2057 = vcombine.high %v2055, %v2055
    %v2059 = vunpack.c.l.s4 1966171168
    %v2060 = vunpack.c.0.s8 %v2059
    %v2061 = vlaneseq
    %v2062 = vshrl.u32 %v2061, 7
    %v2063 = vsub.s32 %v2060, %v2062
    %v2064 = vrot.slane %v2048, %v2063
    %v2066 = vunpack.c.l.s4 1966171168
    %v2067 = vunpack.c.0.s8 %v2066
    %v2068 = vlaneseq
    %v2069 = vshrl.u32 %v2068, 7
    %v2070 = vsub.s32 %v2067, %v2069
    %v2071 = vrot.slane %v2055, %v2070
    %v2073 = vunpack.c.l.s4 1966171168
    %v2074 = vunpack.c.0.s8 %v2073
    %v2075 = vlaneseq
    %v2076 = vshrl.u32 %v2075, 7
    %v2077 = vsub.s32 %v2074, %v2076
    %v2078 = vrot.slane %v2056, %v2077
    %v2080 = vunpack.c.l.s4 1966171168
    %v2081 = vunpack.c.0.s8 %v2080
    %v2082 = vlaneseq
    %v2083 = vshrl.u32 %v2082, 7
    %v2084 = vsub.s32 %v2081, %v2083
    %v2085 = vrot.slane %v2057, %v2084
    %v2086 = vcombine.high %v2064, %v2064
    %v2087 = vcombine.high %v2071, %v2071
    %v2088 = vcombine.high %v2078, %v2078
    %v2089 = vcombine.high %v2085, %v2085
    %v2090 = vlaneseq
    %v2091 = vshrl.u32 %v2090, 7
    %v2092 = vsub.s32 0, %v2091
    %v2093 = vrot.slane %v2015, %v2092
    %v2094 = vlaneseq
    %v2095 = vshrl.u32 %v2094, 7
    %v2096 = vsub.s32 0, %v2095
    %v2097 = vrot.slane %v2029, %v2096
    %v2098 = vlaneseq
    %v2099 = vshrl.u32 %v2098, 7
    %v2100 = vsub.s32 0, %v2099
    %v2101 = vrot.slane %v2037, %v2100
    %v2102 = vlaneseq
    %v2103 = vshrl.u32 %v2102, 7
    %v2104 = vsub.s32 0, %v2103
    %v2105 = vrot.slane %v2039, %v2104
    %v2106 = vlaneseq
    %v2107 = vshrl.u32 %v2106, 7
    %v2108 = vsub.s32 0, %v2107
    %v2109 = vrot.slane %v2022, %v2108
    %v2110 = vlaneseq
    %v2111 = vshrl.u32 %v2110, 7
    %v2112 = vsub.s32 0, %v2111
    %v2113 = vrot.slane %v2036, %v2112
    %v2114 = vlaneseq
    %v2115 = vshrl.u32 %v2114, 7
    %v2116 = vsub.s32 0, %v2115
    %v2117 = vrot.slane %v2038, %v2116
    %v2118 = vlaneseq
    %v2119 = vshrl.u32 %v2118, 7
    %v2120 = vsub.s32 0, %v2119
    %v2121 = vrot.slane %v2040, %v2120
    %v2122 = vlaneseq
    %v2123 = vshrl.u32 %v2122, 7
    %v2124 = vsub.s32 0, %v2123
    %v2125 = vrot.slane %v2064, %v2124
    %v2126 = vlaneseq
    %v2127 = vshrl.u32 %v2126, 7
    %v2128 = vsub.s32 0, %v2127
    %v2129 = vrot.slane %v2078, %v2128
    %v2130 = vlaneseq
    %v2131 = vshrl.u32 %v2130, 7
    %v2132 = vsub.s32 0, %v2131
    %v2133 = vrot.slane %v2086, %v2132
    %v2134 = vlaneseq
    %v2135 = vshrl.u32 %v2134, 7
    %v2136 = vsub.s32 0, %v2135
    %v2137 = vrot.slane %v2088, %v2136
    %v2138 = vlaneseq
    %v2139 = vshrl.u32 %v2138, 7
    %v2140 = vsub.s32 0, %v2139
    %v2141 = vrot.slane %v2071, %v2140
    %v2142 = vlaneseq
    %v2143 = vshrl.u32 %v2142, 7
    %v2144 = vsub.s32 0, %v2143
    %v2145 = vrot.slane %v2085, %v2144
    %v2146 = vlaneseq
    %v2147 = vshrl.u32 %v2146, 7
    %v2148 = vsub.s32 0, %v2147
    %v2149 = vrot.slane %v2087, %v2148
    %v2150 = vlaneseq
    %v2151 = vshrl.u32 %v2150, 7
    %v2152 = vsub.s32 0, %v2151
    %v2153 = vrot.slane %v2089, %v2152
    %v2170 = vadd.f32 %v1928, %v2093
    %v2171 = vadd.f32 %v1931, %v2097
    %v2172 = vadd.f32 %v1936, %v2101
    %v2173 = vadd.f32 %v1939, %v2105
    %v2174 = vadd.f32 %v1944, %v2109
    %v2175 = vadd.f32 %v1947, %v2113
    %v2176 = vadd.f32 %v1952, %v2117
    %v2177 = vadd.f32 %v1955, %v2121
    %v2178 = vadd.f32 %v1960, %v2125
    %v2179 = vadd.f32 %v1963, %v2129
    %v2180 = vadd.f32 %v1968, %v2133
    %v2181 = vadd.f32 %v1971, %v2137
    %v2182 = vadd.f32 %v1976, %v2141
    %v2183 = vadd.f32 %v1979, %v2145
    %v2184 = vadd.f32 %v1984, %v2149
    %v2185 = vadd.f32 %v1987, %v2153
    %v2186 = vlaneseq
    %v2187 = vshrl.u32 %v2186, 7
    %v2188 = vsub.s32 0, %v2187
    %v2189 = vrot.slane %v1761, %v2188
    %v2190 = vadd.f32 %v2170, %v2189
    %v2191 = vadd.f32 %v2171, %v2189
    %v2192 = vadd.f32 %v2172, %v2189
    %v2193 = vadd.f32 %v2173, %v2189
    %v2194 = vadd.f32 %v2174, %v2189
    %v2195 = vadd.f32 %v2175, %v2189
    %v2196 = vadd.f32 %v2176, %v2189
    %v2197 = vadd.f32 %v2177, %v2189
    %v2198 = vadd.f32 %v2178, %v2189
    %v2199 = vadd.f32 %v2179, %v2189
    %v2200 = vadd.f32 %v2180, %v2189
    %v2201 = vadd.f32 %v2181, %v2189
    %v2202 = vadd.f32 %v2182, %v2189
    %v2203 = vadd.f32 %v2183, %v2189
    %v2204 = vadd.f32 %v2184, %v2189
    %v2205 = vadd.f32 %v2185, %v2189
    %v2206 = vmax.f32 %v2190, 0.0
    %v2207 = vmax.f32 %v2191, 0.0
    %v2208 = vmax.f32 %v2192, 0.0
    %v2209 = vmax.f32 %v2193, 0.0
    %v2210 = vmax.f32 %v2194, 0.0
    %v2211 = vmax.f32 %v2195, 0.0
    %v2212 = vmax.f32 %v2196, 0.0
    %v2213 = vmax.f32 %v2197, 0.0
    %v2214 = vmax.f32 %v2198, 0.0
    %v2215 = vmax.f32 %v2199, 0.0
    %v2216 = vmax.f32 %v2200, 0.0
    %v2217 = vmax.f32 %v2201, 0.0
    %v2218 = vmax.f32 %v2202, 0.0
    %v2219 = vmax.f32 %v2203, 0.0
    %v2220 = vmax.f32 %v2204, 0.0
    %v2221 = vmax.f32 %v2205, 0.0
    %v2222 = vlaneseq
    %v2223 = vshrl.u32 %v2222, 7
    %v2224 = vsub.s32 0, %v2223
    %v2225 = vrot.slane %v1762, %v2224
    %v2226 = vmul.f32 %v2206, %v2225
    %v2227 = vmul.f32 %v2207, %v2225
    %v2228 = vmul.f32 %v2208, %v2225
    %v2229 = vmul.f32 %v2209, %v2225
    %v2230 = vmul.f32 %v2210, %v2225
    %v2231 = vmul.f32 %v2211, %v2225
    %v2232 = vmul.f32 %v2212, %v2225
    %v2233 = vmul.f32 %v2213, %v2225
    %v2234 = vmul.f32 %v2214, %v2225
    %v2235 = vmul.f32 %v2215, %v2225
    %v2236 = vmul.f32 %v2216, %v2225
    %v2237 = vmul.f32 %v2217, %v2225
    %v2238 = vmul.f32 %v2218, %v2225
    %v2239 = vmul.f32 %v2219, %v2225
    %v2240 = vmul.f32 %v2220, %v2225
    %v2241 = vmul.f32 %v2221, %v2225
    %v2242 = vsel %vm306, %v2226, 0.0
    %2243 = vadd.xlane.f32.xlu0 %v2242
    %v2244 = vpop.xlane.xlu0 %2243
    %v2245 = vsel %vm306, %v2227, 0.0
    %2246 = vadd.xlane.f32.xlu0 %v2245
    %v2247 = vpop.xlane.xlu0 %2246
    %v2248 = vsel %vm306, %v2228, 0.0
    %2249 = vadd.xlane.f32.xlu0 %v2248
    %v2250 = vpop.xlane.xlu0 %2249
    %v2251 = vsel %vm306, %v2229, 0.0
    %2252 = vadd.xlane.f32.xlu0 %v2251
    %v2253 = vpop.xlane.xlu0 %2252
    %v2254 = vsel %vm306, %v2230, 0.0
    %2255 = vadd.xlane.f32.xlu0 %v2254
    %v2256 = vpop.xlane.xlu0 %2255
    %v2257 = vsel %vm306, %v2231, 0.0
    %2258 = vadd.xlane.f32.xlu0 %v2257
    %v2259 = vpop.xlane.xlu0 %2258
    %v2260 = vsel %vm306, %v2232, 0.0
    %2261 = vadd.xlane.f32.xlu0 %v2260
    %v2262 = vpop.xlane.xlu0 %2261
    %v2263 = vsel %vm306, %v2233, 0.0
    %2264 = vadd.xlane.f32.xlu0 %v2263
    %v2265 = vpop.xlane.xlu0 %2264
    %v2266 = vsel %vm306, %v2234, 0.0
    %2267 = vadd.xlane.f32.xlu0 %v2266
    %v2268 = vpop.xlane.xlu0 %2267
    %v2269 = vsel %vm306, %v2235, 0.0
    %2270 = vadd.xlane.f32.xlu0 %v2269
    %v2271 = vpop.xlane.xlu0 %2270
    %v2272 = vsel %vm306, %v2236, 0.0
    %2273 = vadd.xlane.f32.xlu0 %v2272
    %v2274 = vpop.xlane.xlu0 %2273
    %v2275 = vsel %vm306, %v2237, 0.0
    %2276 = vadd.xlane.f32.xlu0 %v2275
    %v2277 = vpop.xlane.xlu0 %2276
    %v2278 = vsel %vm306, %v2238, 0.0
    %2279 = vadd.xlane.f32.xlu0 %v2278
    %v2280 = vpop.xlane.xlu0 %2279
    %v2281 = vsel %vm306, %v2239, 0.0
    %2282 = vadd.xlane.f32.xlu0 %v2281
    %v2283 = vpop.xlane.xlu0 %2282
    %v2284 = vsel %vm306, %v2240, 0.0
    %2285 = vadd.xlane.f32.xlu0 %v2284
    %v2286 = vpop.xlane.xlu0 %2285
    %v2287 = vsel %vm306, %v2241, 0.0
    %2288 = vadd.xlane.f32.xlu0 %v2287
    %v2289 = vpop.xlane.xlu0 %2288
    %v2290 = vstv %s1763
    %v2291 = vadd.f32 %v2244, %v2290
    %v2292 = vadd.f32 %v2247, %v2290
    %v2293 = vadd.f32 %v2250, %v2290
    %v2294 = vadd.f32 %v2253, %v2290
    %v2295 = vadd.f32 %v2256, %v2290
    %v2296 = vadd.f32 %v2259, %v2290
    %v2297 = vadd.f32 %v2262, %v2290
    %v2298 = vadd.f32 %v2265, %v2290
    %v2299 = vadd.f32 %v2268, %v2290
    %v2300 = vadd.f32 %v2271, %v2290
    %v2301 = vadd.f32 %v2274, %v2290
    %v2302 = vadd.f32 %v2277, %v2290
    %v2303 = vadd.f32 %v2280, %v2290
    %v2304 = vadd.f32 %v2283, %v2290
    %v2305 = vadd.f32 %v2286, %v2290
    %v2306 = vadd.f32 %v2289, %v2290
    %v2309 = vlaneseq
    %v2310 = vshrl.u32 %v2309, 7
    %v2311 = vsub.s32 0, %v2310
    %v2312 = vrot.slane %v1751, %v2311
    %2314 = vbcast.lane.b32.xlu0 %v2312, 256
    %v2315 = vpop.permute.xlu0 %2314
    %v2316 = vlaneseq
    %v2317 = vshrl.u32 %v2316, 7
    %v2318 = vsub.s32 1, %v2317
    %v2319 = vrot.slane %v1751, %v2318
    %2321 = vbcast.lane.b32.xlu0 %v2319, 256
    %v2322 = vpop.permute.xlu0 %2321
    %v2323 = vlaneseq
    %v2324 = vshrl.u32 %v2323, 7
    %v2325 = vsub.s32 2, %v2324
    %v2326 = vrot.slane %v1751, %v2325
    %2328 = vbcast.lane.b32.xlu0 %v2326, 256
    %v2329 = vpop.permute.xlu0 %2328
    %v2330 = vlaneseq
    %v2331 = vshrl.u32 %v2330, 7
    %v2332 = vsub.s32 3, %v2331
    %v2333 = vrot.slane %v1751, %v2332
    %2335 = vbcast.lane.b32.xlu0 %v2333, 256
    %v2336 = vpop.permute.xlu0 %2335
    %v2337 = vlaneseq
    %v2338 = vshrl.u32 %v2337, 7
    %v2339 = vsub.s32 4, %v2338
    %v2340 = vrot.slane %v1751, %v2339
    %2342 = vbcast.lane.b32.xlu0 %v2340, 256
    %v2343 = vpop.permute.xlu0 %2342
    %v2344 = vlaneseq
    %v2345 = vshrl.u32 %v2344, 7
    %v2346 = vsub.s32 5, %v2345
    %v2347 = vrot.slane %v1751, %v2346
    %2349 = vbcast.lane.b32.xlu0 %v2347, 256
    %v2350 = vpop.permute.xlu0 %2349
    %v2351 = vlaneseq
    %v2352 = vshrl.u32 %v2351, 7
    %v2353 = vsub.s32 6, %v2352
    %v2354 = vrot.slane %v1751, %v2353
    %2356 = vbcast.lane.b32.xlu0 %v2354, 256
    %v2357 = vpop.permute.xlu0 %2356
    %v2358 = vlaneseq
    %v2359 = vshrl.u32 %v2358, 7
    %v2360 = vsub.s32 7, %v2359
    %v2361 = vrot.slane %v1751, %v2360
    %2363 = vbcast.lane.b32.xlu0 %v2361, 256
    %v2364 = vpop.permute.xlu0 %2363
    %v2365 = vlaneseq
    %v2366 = vshrl.u32 %v2365, 7
    %v2367 = vsub.s32 0, %v2366
    %v2368 = vrot.slane %v1752, %v2367
    %2370 = vbcast.lane.b32.xlu0 %v2368, 256
    %v2371 = vpop.permute.xlu0 %2370
    %v2372 = vlaneseq
    %v2373 = vshrl.u32 %v2372, 7
    %v2374 = vsub.s32 1, %v2373
    %v2375 = vrot.slane %v1752, %v2374
    %2377 = vbcast.lane.b32.xlu0 %v2375, 256
    %v2378 = vpop.permute.xlu0 %2377
    %v2379 = vlaneseq
    %v2380 = vshrl.u32 %v2379, 7
    %v2381 = vsub.s32 2, %v2380
    %v2382 = vrot.slane %v1752, %v2381
    %2384 = vbcast.lane.b32.xlu0 %v2382, 256
    %v2385 = vpop.permute.xlu0 %2384
    %v2386 = vlaneseq
    %v2387 = vshrl.u32 %v2386, 7
    %v2388 = vsub.s32 3, %v2387
    %v2389 = vrot.slane %v1752, %v2388
    %2391 = vbcast.lane.b32.xlu0 %v2389, 256
    %v2392 = vpop.permute.xlu0 %2391
    %v2393 = vlaneseq
    %v2394 = vshrl.u32 %v2393, 7
    %v2395 = vsub.s32 4, %v2394
    %v2396 = vrot.slane %v1752, %v2395
    %2398 = vbcast.lane.b32.xlu0 %v2396, 256
    %v2399 = vpop.permute.xlu0 %2398
    %v2400 = vlaneseq
    %v2401 = vshrl.u32 %v2400, 7
    %v2402 = vsub.s32 5, %v2401
    %v2403 = vrot.slane %v1752, %v2402
    %2405 = vbcast.lane.b32.xlu0 %v2403, 256
    %v2406 = vpop.permute.xlu0 %2405
    %v2407 = vlaneseq
    %v2408 = vshrl.u32 %v2407, 7
    %v2409 = vsub.s32 6, %v2408
    %v2410 = vrot.slane %v1752, %v2409
    %2412 = vbcast.lane.b32.xlu0 %v2410, 256
    %v2413 = vpop.permute.xlu0 %2412
    %v2414 = vlaneseq
    %v2415 = vshrl.u32 %v2414, 7
    %v2416 = vsub.s32 7, %v2415
    %v2417 = vrot.slane %v1752, %v2416
    %2419 = vbcast.lane.b32.xlu0 %v2417, 256
    %v2420 = vpop.permute.xlu0 %2419
    %v2437 = vadd.f32 %v2291, %v2315
    %v2438 = vadd.f32 %v2292, %v2322
    %v2439 = vadd.f32 %v2293, %v2329
    %v2440 = vadd.f32 %v2294, %v2336
    %v2441 = vadd.f32 %v2295, %v2343
    %v2442 = vadd.f32 %v2296, %v2350
    %v2443 = vadd.f32 %v2297, %v2357
    %v2444 = vadd.f32 %v2298, %v2364
    %v2445 = vadd.f32 %v2299, %v2371
    %v2446 = vadd.f32 %v2300, %v2378
    %v2447 = vadd.f32 %v2301, %v2385
    %v2448 = vadd.f32 %v2302, %v2392
    %v2449 = vadd.f32 %v2303, %v2399
    %v2450 = vadd.f32 %v2304, %v2406
    %v2451 = vadd.f32 %v2305, %v2413
    %v2452 = vadd.f32 %v2306, %v2420
    %2469 = vset.pattern.permute.xlu0 0
    %2470 = vperm.xlu0 %2469, %v2437
    %v2471 = vpop.permute.xlu0 %2470
    %2472 = vset.pattern.permute.xlu0 0
    %2473 = vperm.xlu0 %2472, %v2438
    %v2474 = vpop.permute.xlu0 %2473
    %2475 = vset.pattern.permute.xlu0 0
    %2476 = vperm.xlu0 %2475, %v2439
    %v2477 = vpop.permute.xlu0 %2476
    %2478 = vset.pattern.permute.xlu0 0
    %2479 = vperm.xlu0 %2478, %v2440
    %v2480 = vpop.permute.xlu0 %2479
    %2481 = vset.pattern.permute.xlu0 0
    %2482 = vperm.xlu0 %2481, %v2441
    %v2483 = vpop.permute.xlu0 %2482
    %2484 = vset.pattern.permute.xlu0 0
    %2485 = vperm.xlu0 %2484, %v2442
    %v2486 = vpop.permute.xlu0 %2485
    %2487 = vset.pattern.permute.xlu0 0
    %2488 = vperm.xlu0 %2487, %v2443
    %v2489 = vpop.permute.xlu0 %2488
    %2490 = vset.pattern.permute.xlu0 0
    %2491 = vperm.xlu0 %2490, %v2444
    %v2492 = vpop.permute.xlu0 %2491
    %2493 = vset.pattern.permute.xlu0 0
    %2494 = vperm.xlu0 %2493, %v2445
    %v2495 = vpop.permute.xlu0 %2494
    %2496 = vset.pattern.permute.xlu0 0
    %2497 = vperm.xlu0 %2496, %v2446
    %v2498 = vpop.permute.xlu0 %2497
    %2499 = vset.pattern.permute.xlu0 0
    %2500 = vperm.xlu0 %2499, %v2447
    %v2501 = vpop.permute.xlu0 %2500
    %2502 = vset.pattern.permute.xlu0 0
    %2503 = vperm.xlu0 %2502, %v2448
    %v2504 = vpop.permute.xlu0 %2503
    %2505 = vset.pattern.permute.xlu0 0
    %2506 = vperm.xlu0 %2505, %v2449
    %v2507 = vpop.permute.xlu0 %2506
    %2508 = vset.pattern.permute.xlu0 0
    %2509 = vperm.xlu0 %2508, %v2450
    %v2510 = vpop.permute.xlu0 %2509
    %2511 = vset.pattern.permute.xlu0 0
    %2512 = vperm.xlu0 %2511, %v2451
    %v2513 = vpop.permute.xlu0 %2512
    %2514 = vset.pattern.permute.xlu0 0
    %2515 = vperm.xlu0 %2514, %v2452
    %v2516 = vpop.permute.xlu0 %2515
    %v2517 = vlaneseq
    %v2518 = vshrl.u32 %v2517, 7
    %v2519 = vsub.s32 %v1052, %v2518
    %v2520 = vrot.slane %v2471, %v2519
    %v2521 = vlaneseq
    %v2522 = vshrl.u32 %v2521, 7
    %v2523 = vsub.s32 %v1052, %v2522
    %v2524 = vrot.slane %v2474, %v2523
    %v2525 = vlaneseq
    %v2526 = vshrl.u32 %v2525, 7
    %v2527 = vsub.s32 %v1052, %v2526
    %v2528 = vrot.slane %v2477, %v2527
    %v2529 = vlaneseq
    %v2530 = vshrl.u32 %v2529, 7
    %v2531 = vsub.s32 %v1052, %v2530
    %v2532 = vrot.slane %v2480, %v2531
    %v2533 = vlaneseq
    %v2534 = vshrl.u32 %v2533, 7
    %v2535 = vsub.s32 %v1052, %v2534
    %v2536 = vrot.slane %v2483, %v2535
    %v2537 = vlaneseq
    %v2538 = vshrl.u32 %v2537, 7
    %v2539 = vsub.s32 %v1052, %v2538
    %v2540 = vrot.slane %v2486, %v2539
    %v2541 = vlaneseq
    %v2542 = vshrl.u32 %v2541, 7
    %v2543 = vsub.s32 %v1052, %v2542
    %v2544 = vrot.slane %v2489, %v2543
    %v2545 = vlaneseq
    %v2546 = vshrl.u32 %v2545, 7
    %v2547 = vsub.s32 %v1052, %v2546
    %v2548 = vrot.slane %v2492, %v2547
    %v2549 = vlaneseq
    %v2550 = vshrl.u32 %v2549, 7
    %v2551 = vsub.s32 %v1052, %v2550
    %v2552 = vrot.slane %v2495, %v2551
    %v2553 = vlaneseq
    %v2554 = vshrl.u32 %v2553, 7
    %v2555 = vsub.s32 %v1052, %v2554
    %v2556 = vrot.slane %v2498, %v2555
    %v2557 = vlaneseq
    %v2558 = vshrl.u32 %v2557, 7
    %v2559 = vsub.s32 %v1052, %v2558
    %v2560 = vrot.slane %v2501, %v2559
    %v2561 = vlaneseq
    %v2562 = vshrl.u32 %v2561, 7
    %v2563 = vsub.s32 %v1052, %v2562
    %v2564 = vrot.slane %v2504, %v2563
    %v2565 = vlaneseq
    %v2566 = vshrl.u32 %v2565, 7
    %v2567 = vsub.s32 %v1052, %v2566
    %v2568 = vrot.slane %v2507, %v2567
    %v2569 = vlaneseq
    %v2570 = vshrl.u32 %v2569, 7
    %v2571 = vsub.s32 %v1052, %v2570
    %v2572 = vrot.slane %v2510, %v2571
    %v2573 = vlaneseq
    %v2574 = vshrl.u32 %v2573, 7
    %v2575 = vsub.s32 %v1052, %v2574
    %v2576 = vrot.slane %v2513, %v2575
    %v2577 = vlaneseq
    %v2578 = vshrl.u32 %v2577, 7
    %v2579 = vsub.s32 %v1052, %v2578
    %v2580 = vrot.slane %v2516, %v2579
    %v2581 = vsel %vm1117, %v2524, %v2520
    %v2582 = vsel %vm1119, %v2528, %v2581
    %v2583 = vsel %vm1121, %v2532, %v2582
    %v2584 = vsel %vm1123, %v2536, %v2583
    %v2585 = vsel %vm1125, %v2540, %v2584
    %v2586 = vsel %vm1127, %v2544, %v2585
    %v2587 = vsel %vm1129, %v2548, %v2586
    %v2588 = vsel %vm1117, %v2556, %v2552
    %v2589 = vsel %vm1119, %v2560, %v2588
    %v2590 = vsel %vm1121, %v2564, %v2589
    %v2591 = vsel %vm1123, %v2568, %v2590
    %v2592 = vsel %vm1125, %v2572, %v2591
    %v2593 = vsel %vm1127, %v2576, %v2592
    %v2594 = vsel %vm1129, %v2580, %v2593
    %v2597 = vsel %vm1140, %v2587, -inf
    %2598 = vmax.xlane.f32.xlu0 %v2597
    %v2599 = vpop.xlane.xlu0 %2598
    %v2600 = vsel %vm1140, %v2594, -inf
    %2601 = vmax.xlane.f32.xlu0 %v2600
    %v2602 = vpop.xlane.xlu0 %2601
    %v2605 = vlaneseq
    %v2606 = vshrl.u32 %v2605, 7
    %v2607 = vsub.s32 0, %v2606
    %v2608 = vrot.slane %v2599, %v2607
    %v2609 = vlaneseq
    %v2610 = vshrl.u32 %v2609, 7
    %v2611 = vsub.s32 1, %v2610
    %v2612 = vrot.slane %v2599, %v2611
    %v2613 = vlaneseq
    %v2614 = vshrl.u32 %v2613, 7
    %v2615 = vsub.s32 2, %v2614
    %v2616 = vrot.slane %v2599, %v2615
    %v2617 = vlaneseq
    %v2618 = vshrl.u32 %v2617, 7
    %v2619 = vsub.s32 3, %v2618
    %v2620 = vrot.slane %v2599, %v2619
    %v2621 = vlaneseq
    %v2622 = vshrl.u32 %v2621, 7
    %v2623 = vsub.s32 4, %v2622
    %v2624 = vrot.slane %v2599, %v2623
    %v2625 = vlaneseq
    %v2626 = vshrl.u32 %v2625, 7
    %v2627 = vsub.s32 5, %v2626
    %v2628 = vrot.slane %v2599, %v2627
    %v2629 = vlaneseq
    %v2630 = vshrl.u32 %v2629, 7
    %v2631 = vsub.s32 6, %v2630
    %v2632 = vrot.slane %v2599, %v2631
    %v2633 = vlaneseq
    %v2634 = vshrl.u32 %v2633, 7
    %v2635 = vsub.s32 7, %v2634
    %v2636 = vrot.slane %v2599, %v2635
    %v2637 = vlaneseq
    %v2638 = vshrl.u32 %v2637, 7
    %v2639 = vsub.s32 0, %v2638
    %v2640 = vrot.slane %v2602, %v2639
    %v2641 = vlaneseq
    %v2642 = vshrl.u32 %v2641, 7
    %v2643 = vsub.s32 1, %v2642
    %v2644 = vrot.slane %v2602, %v2643
    %v2645 = vlaneseq
    %v2646 = vshrl.u32 %v2645, 7
    %v2647 = vsub.s32 2, %v2646
    %v2648 = vrot.slane %v2602, %v2647
    %v2649 = vlaneseq
    %v2650 = vshrl.u32 %v2649, 7
    %v2651 = vsub.s32 3, %v2650
    %v2652 = vrot.slane %v2602, %v2651
    %v2653 = vlaneseq
    %v2654 = vshrl.u32 %v2653, 7
    %v2655 = vsub.s32 4, %v2654
    %v2656 = vrot.slane %v2602, %v2655
    %v2657 = vlaneseq
    %v2658 = vshrl.u32 %v2657, 7
    %v2659 = vsub.s32 5, %v2658
    %v2660 = vrot.slane %v2602, %v2659
    %v2661 = vlaneseq
    %v2662 = vshrl.u32 %v2661, 7
    %v2663 = vsub.s32 6, %v2662
    %v2664 = vrot.slane %v2602, %v2663
    %v2665 = vlaneseq
    %v2666 = vshrl.u32 %v2665, 7
    %v2667 = vsub.s32 7, %v2666
    %v2668 = vrot.slane %v2602, %v2667
    %v2685 = vsub.f32 %v2437, %v2608
    %v2686 = vsub.f32 %v2438, %v2612
    %v2687 = vsub.f32 %v2439, %v2616
    %v2688 = vsub.f32 %v2440, %v2620
    %v2689 = vsub.f32 %v2441, %v2624
    %v2690 = vsub.f32 %v2442, %v2628
    %v2691 = vsub.f32 %v2443, %v2632
    %v2692 = vsub.f32 %v2444, %v2636
    %v2693 = vsub.f32 %v2445, %v2640
    %v2694 = vsub.f32 %v2446, %v2644
    %v2695 = vsub.f32 %v2447, %v2648
    %v2696 = vsub.f32 %v2448, %v2652
    %v2697 = vsub.f32 %v2449, %v2656
    %v2698 = vsub.f32 %v2450, %v2660
    %v2699 = vsub.f32 %v2451, %v2664
    %v2700 = vsub.f32 %v2452, %v2668
    %v2701 = vmul.f32 %v2685, 1.442695
    %v2702 = vpow.pop %v2701
    %v2703 = vmul.f32 %v2686, 1.442695
    %v2704 = vpow.pop %v2703
    %v2705 = vmul.f32 %v2687, 1.442695
    %v2706 = vpow.pop %v2705
    %v2707 = vmul.f32 %v2688, 1.442695
    %v2708 = vpow.pop %v2707
    %v2709 = vmul.f32 %v2689, 1.442695
    %v2710 = vpow.pop %v2709
    %v2711 = vmul.f32 %v2690, 1.442695
    %v2712 = vpow.pop %v2711
    %v2713 = vmul.f32 %v2691, 1.442695
    %v2714 = vpow.pop %v2713
    %v2715 = vmul.f32 %v2692, 1.442695
    %v2716 = vpow.pop %v2715
    %v2717 = vmul.f32 %v2693, 1.442695
    %v2718 = vpow.pop %v2717
    %v2719 = vmul.f32 %v2694, 1.442695
    %v2720 = vpow.pop %v2719
    %v2721 = vmul.f32 %v2695, 1.442695
    %v2722 = vpow.pop %v2721
    %v2723 = vmul.f32 %v2696, 1.442695
    %v2724 = vpow.pop %v2723
    %v2725 = vmul.f32 %v2697, 1.442695
    %v2726 = vpow.pop %v2725
    %v2727 = vmul.f32 %v2698, 1.442695
    %v2728 = vpow.pop %v2727
    %v2729 = vmul.f32 %v2699, 1.442695
    %v2730 = vpow.pop %v2729
    %v2731 = vmul.f32 %v2700, 1.442695
    %v2732 = vpow.pop %v2731
    %2749 = vset.pattern.permute.xlu0 0
    %2750 = vperm.xlu0 %2749, %v2702
    %v2751 = vpop.permute.xlu0 %2750
    %2752 = vset.pattern.permute.xlu0 0
    %2753 = vperm.xlu0 %2752, %v2704
    %v2754 = vpop.permute.xlu0 %2753
    %2755 = vset.pattern.permute.xlu0 0
    %2756 = vperm.xlu0 %2755, %v2706
    %v2757 = vpop.permute.xlu0 %2756
    %2758 = vset.pattern.permute.xlu0 0
    %2759 = vperm.xlu0 %2758, %v2708
    %v2760 = vpop.permute.xlu0 %2759
    %2761 = vset.pattern.permute.xlu0 0
    %2762 = vperm.xlu0 %2761, %v2710
    %v2763 = vpop.permute.xlu0 %2762
    %2764 = vset.pattern.permute.xlu0 0
    %2765 = vperm.xlu0 %2764, %v2712
    %v2766 = vpop.permute.xlu0 %2765
    %2767 = vset.pattern.permute.xlu0 0
    %2768 = vperm.xlu0 %2767, %v2714
    %v2769 = vpop.permute.xlu0 %2768
    %2770 = vset.pattern.permute.xlu0 0
    %2771 = vperm.xlu0 %2770, %v2716
    %v2772 = vpop.permute.xlu0 %2771
    %2773 = vset.pattern.permute.xlu0 0
    %2774 = vperm.xlu0 %2773, %v2718
    %v2775 = vpop.permute.xlu0 %2774
    %2776 = vset.pattern.permute.xlu0 0
    %2777 = vperm.xlu0 %2776, %v2720
    %v2778 = vpop.permute.xlu0 %2777
    %2779 = vset.pattern.permute.xlu0 0
    %2780 = vperm.xlu0 %2779, %v2722
    %v2781 = vpop.permute.xlu0 %2780
    %2782 = vset.pattern.permute.xlu0 0
    %2783 = vperm.xlu0 %2782, %v2724
    %v2784 = vpop.permute.xlu0 %2783
    %2785 = vset.pattern.permute.xlu0 0
    %2786 = vperm.xlu0 %2785, %v2726
    %v2787 = vpop.permute.xlu0 %2786
    %2788 = vset.pattern.permute.xlu0 0
    %2789 = vperm.xlu0 %2788, %v2728
    %v2790 = vpop.permute.xlu0 %2789
    %2791 = vset.pattern.permute.xlu0 0
    %2792 = vperm.xlu0 %2791, %v2730
    %v2793 = vpop.permute.xlu0 %2792
    %2794 = vset.pattern.permute.xlu0 0
    %2795 = vperm.xlu0 %2794, %v2732
    %v2796 = vpop.permute.xlu0 %2795
    %v2797 = vlaneseq
    %v2798 = vshrl.u32 %v2797, 7
    %v2799 = vsub.s32 %v1052, %v2798
    %v2800 = vrot.slane %v2751, %v2799
    %v2801 = vlaneseq
    %v2802 = vshrl.u32 %v2801, 7
    %v2803 = vsub.s32 %v1052, %v2802
    %v2804 = vrot.slane %v2754, %v2803
    %v2805 = vlaneseq
    %v2806 = vshrl.u32 %v2805, 7
    %v2807 = vsub.s32 %v1052, %v2806
    %v2808 = vrot.slane %v2757, %v2807
    %v2809 = vlaneseq
    %v2810 = vshrl.u32 %v2809, 7
    %v2811 = vsub.s32 %v1052, %v2810
    %v2812 = vrot.slane %v2760, %v2811
    %v2813 = vlaneseq
    %v2814 = vshrl.u32 %v2813, 7
    %v2815 = vsub.s32 %v1052, %v2814
    %v2816 = vrot.slane %v2763, %v2815
    %v2817 = vlaneseq
    %v2818 = vshrl.u32 %v2817, 7
    %v2819 = vsub.s32 %v1052, %v2818
    %v2820 = vrot.slane %v2766, %v2819
    %v2821 = vlaneseq
    %v2822 = vshrl.u32 %v2821, 7
    %v2823 = vsub.s32 %v1052, %v2822
    %v2824 = vrot.slane %v2769, %v2823
    %v2825 = vlaneseq
    %v2826 = vshrl.u32 %v2825, 7
    %v2827 = vsub.s32 %v1052, %v2826
    %v2828 = vrot.slane %v2772, %v2827
    %v2829 = vlaneseq
    %v2830 = vshrl.u32 %v2829, 7
    %v2831 = vsub.s32 %v1052, %v2830
    %v2832 = vrot.slane %v2775, %v2831
    %v2833 = vlaneseq
    %v2834 = vshrl.u32 %v2833, 7
    %v2835 = vsub.s32 %v1052, %v2834
    %v2836 = vrot.slane %v2778, %v2835
    %v2837 = vlaneseq
    %v2838 = vshrl.u32 %v2837, 7
    %v2839 = vsub.s32 %v1052, %v2838
    %v2840 = vrot.slane %v2781, %v2839
    %v2841 = vlaneseq
    %v2842 = vshrl.u32 %v2841, 7
    %v2843 = vsub.s32 %v1052, %v2842
    %v2844 = vrot.slane %v2784, %v2843
    %v2845 = vlaneseq
    %v2846 = vshrl.u32 %v2845, 7
    %v2847 = vsub.s32 %v1052, %v2846
    %v2848 = vrot.slane %v2787, %v2847
    %v2849 = vlaneseq
    %v2850 = vshrl.u32 %v2849, 7
    %v2851 = vsub.s32 %v1052, %v2850
    %v2852 = vrot.slane %v2790, %v2851
    %v2853 = vlaneseq
    %v2854 = vshrl.u32 %v2853, 7
    %v2855 = vsub.s32 %v1052, %v2854
    %v2856 = vrot.slane %v2793, %v2855
    %v2857 = vlaneseq
    %v2858 = vshrl.u32 %v2857, 7
    %v2859 = vsub.s32 %v1052, %v2858
    %v2860 = vrot.slane %v2796, %v2859
    %v2861 = vsel %vm1117, %v2804, %v2800
    %v2862 = vsel %vm1119, %v2808, %v2861
    %v2863 = vsel %vm1121, %v2812, %v2862
    %v2864 = vsel %vm1123, %v2816, %v2863
    %v2865 = vsel %vm1125, %v2820, %v2864
    %v2866 = vsel %vm1127, %v2824, %v2865
    %v2867 = vsel %vm1129, %v2828, %v2866
    %v2868 = vsel %vm1117, %v2836, %v2832
    %v2869 = vsel %vm1119, %v2840, %v2868
    %v2870 = vsel %vm1121, %v2844, %v2869
    %v2871 = vsel %vm1123, %v2848, %v2870
    %v2872 = vsel %vm1125, %v2852, %v2871
    %v2873 = vsel %vm1127, %v2856, %v2872
    %v2874 = vsel %vm1129, %v2860, %v2873
    %v2877 = vsel %vm1140, %v2867, 0.0
    %2878 = vadd.xlane.f32.xlu0 %v2877
    %v2879 = vpop.xlane.xlu0 %2878
    %v2880 = vsel %vm1140, %v2874, 0.0
    %2881 = vadd.xlane.f32.xlu0 %v2880
    %v2882 = vpop.xlane.xlu0 %2881
    %v2883 = vrcp.pop %v2879
    %v2884 = vrcp.pop %v2882
    %v2887 = vlaneseq
    %v2888 = vshrl.u32 %v2887, 7
    %v2889 = vsub.s32 0, %v2888
    %v2890 = vrot.slane %v2883, %v2889
    %v2891 = vlaneseq
    %v2892 = vshrl.u32 %v2891, 7
    %v2893 = vsub.s32 1, %v2892
    %v2894 = vrot.slane %v2883, %v2893
    %v2895 = vlaneseq
    %v2896 = vshrl.u32 %v2895, 7
    %v2897 = vsub.s32 2, %v2896
    %v2898 = vrot.slane %v2883, %v2897
    %v2899 = vlaneseq
    %v2900 = vshrl.u32 %v2899, 7
    %v2901 = vsub.s32 3, %v2900
    %v2902 = vrot.slane %v2883, %v2901
    %v2903 = vlaneseq
    %v2904 = vshrl.u32 %v2903, 7
    %v2905 = vsub.s32 4, %v2904
    %v2906 = vrot.slane %v2883, %v2905
    %v2907 = vlaneseq
    %v2908 = vshrl.u32 %v2907, 7
    %v2909 = vsub.s32 5, %v2908
    %v2910 = vrot.slane %v2883, %v2909
    %v2911 = vlaneseq
    %v2912 = vshrl.u32 %v2911, 7
    %v2913 = vsub.s32 6, %v2912
    %v2914 = vrot.slane %v2883, %v2913
    %v2915 = vlaneseq
    %v2916 = vshrl.u32 %v2915, 7
    %v2917 = vsub.s32 7, %v2916
    %v2918 = vrot.slane %v2883, %v2917
    %v2919 = vlaneseq
    %v2920 = vshrl.u32 %v2919, 7
    %v2921 = vsub.s32 0, %v2920
    %v2922 = vrot.slane %v2884, %v2921
    %v2923 = vlaneseq
    %v2924 = vshrl.u32 %v2923, 7
    %v2925 = vsub.s32 1, %v2924
    %v2926 = vrot.slane %v2884, %v2925
    %v2927 = vlaneseq
    %v2928 = vshrl.u32 %v2927, 7
    %v2929 = vsub.s32 2, %v2928
    %v2930 = vrot.slane %v2884, %v2929
    %v2931 = vlaneseq
    %v2932 = vshrl.u32 %v2931, 7
    %v2933 = vsub.s32 3, %v2932
    %v2934 = vrot.slane %v2884, %v2933
    %v2935 = vlaneseq
    %v2936 = vshrl.u32 %v2935, 7
    %v2937 = vsub.s32 4, %v2936
    %v2938 = vrot.slane %v2884, %v2937
    %v2939 = vlaneseq
    %v2940 = vshrl.u32 %v2939, 7
    %v2941 = vsub.s32 5, %v2940
    %v2942 = vrot.slane %v2884, %v2941
    %v2943 = vlaneseq
    %v2944 = vshrl.u32 %v2943, 7
    %v2945 = vsub.s32 6, %v2944
    %v2946 = vrot.slane %v2884, %v2945
    %v2947 = vlaneseq
    %v2948 = vshrl.u32 %v2947, 7
    %v2949 = vsub.s32 7, %v2948
    %v2950 = vrot.slane %v2884, %v2949
    %v2967 = vmul.f32 %v2702, %v2890
    %v2968 = vmul.f32 %v2704, %v2894
    %v2969 = vmul.f32 %v2706, %v2898
    %v2970 = vmul.f32 %v2708, %v2902
    %v2971 = vmul.f32 %v2710, %v2906
    %v2972 = vmul.f32 %v2712, %v2910
    %v2973 = vmul.f32 %v2714, %v2914
    %v2974 = vmul.f32 %v2716, %v2918
    %v2975 = vmul.f32 %v2718, %v2922
    %v2976 = vmul.f32 %v2720, %v2926
    %v2977 = vmul.f32 %v2722, %v2930
    %v2978 = vmul.f32 %v2724, %v2934
    %v2979 = vmul.f32 %v2726, %v2938
    %v2980 = vmul.f32 %v2728, %v2942
    %v2981 = vmul.f32 %v2730, %v2946
    %v2982 = vmul.f32 %v2732, %v2950
    %v2983 = vunpack.c.l.bf16 %v1735
    %v2984 = vunpack.c.l.bf16 %v1736
    %v2985 = vunpack.c.l.bf16 %v1737
    %v2986 = vunpack.c.l.bf16 %v1738
    %v2987 = vunpack.c.l.bf16 %v1739
    %v2988 = vunpack.c.l.bf16 %v1740
    %v2989 = vunpack.c.l.bf16 %v1741
    %v2990 = vunpack.c.l.bf16 %v1742
    %v2991 = vunpack.c.l.bf16 %v1743
    %v2992 = vunpack.c.l.bf16 %v1744
    %v2993 = vunpack.c.l.bf16 %v1745
    %v2994 = vunpack.c.l.bf16 %v1746
    %v2995 = vunpack.c.l.bf16 %v1747
    %v2996 = vunpack.c.l.bf16 %v1748
    %v2997 = vunpack.c.l.bf16 %v1749
    %v2998 = vunpack.c.l.bf16 %v1750
    %3000 = vset.pattern.permute.xlu0 0
    %3001 = vperm.xlu0 %3000, %v2967
    %v3002 = vpop.permute.xlu0 %3001
    %3005 = vset.pattern.permute.xlu0 0
    %3006 = vperm.xlu0 %3005, %v2968
    %v3007 = vpop.permute.xlu0 %3006
    %3010 = vset.pattern.permute.xlu0 0
    %3011 = vperm.xlu0 %3010, %v2969
    %v3012 = vpop.permute.xlu0 %3011
    %3015 = vset.pattern.permute.xlu0 0
    %3016 = vperm.xlu0 %3015, %v2970
    %v3017 = vpop.permute.xlu0 %3016
    %3020 = vset.pattern.permute.xlu0 0
    %3021 = vperm.xlu0 %3020, %v2971
    %v3022 = vpop.permute.xlu0 %3021
    %3025 = vset.pattern.permute.xlu0 0
    %3026 = vperm.xlu0 %3025, %v2972
    %v3027 = vpop.permute.xlu0 %3026
    %3030 = vset.pattern.permute.xlu0 0
    %3031 = vperm.xlu0 %3030, %v2973
    %v3032 = vpop.permute.xlu0 %3031
    %3035 = vset.pattern.permute.xlu0 0
    %3036 = vperm.xlu0 %3035, %v2974
    %v3037 = vpop.permute.xlu0 %3036
    %3040 = vset.pattern.permute.xlu0 0
    %3041 = vperm.xlu0 %3040, %v2975
    %v3042 = vpop.permute.xlu0 %3041
    %3045 = vset.pattern.permute.xlu0 0
    %3046 = vperm.xlu0 %3045, %v2976
    %v3047 = vpop.permute.xlu0 %3046
    %3050 = vset.pattern.permute.xlu0 0
    %3051 = vperm.xlu0 %3050, %v2977
    %v3052 = vpop.permute.xlu0 %3051
    %3055 = vset.pattern.permute.xlu0 0
    %3056 = vperm.xlu0 %3055, %v2978
    %v3057 = vpop.permute.xlu0 %3056
    %3060 = vset.pattern.permute.xlu0 0
    %3061 = vperm.xlu0 %3060, %v2979
    %v3062 = vpop.permute.xlu0 %3061
    %3065 = vset.pattern.permute.xlu0 0
    %3066 = vperm.xlu0 %3065, %v2980
    %v3067 = vpop.permute.xlu0 %3066
    %3070 = vset.pattern.permute.xlu0 0
    %3071 = vperm.xlu0 %3070, %v2981
    %v3072 = vpop.permute.xlu0 %3071
    %3075 = vset.pattern.permute.xlu0 0
    %3076 = vperm.xlu0 %3075, %v2982
    %v3077 = vpop.permute.xlu0 %3076
    %v3079 = vmul.f32 %v3002, %v2983
    %v3080 = vmul.f32 %v3007, %v2984
    %v3081 = vmul.f32 %v3012, %v2985
    %v3082 = vmul.f32 %v3017, %v2986
    %v3083 = vmul.f32 %v3022, %v2987
    %v3084 = vmul.f32 %v3027, %v2988
    %v3085 = vmul.f32 %v3032, %v2989
    %v3086 = vmul.f32 %v3037, %v2990
    %v3087 = vmul.f32 %v3042, %v2991
    %v3088 = vmul.f32 %v3047, %v2992
    %v3089 = vmul.f32 %v3052, %v2993
    %v3090 = vmul.f32 %v3057, %v2994
    %v3091 = vmul.f32 %v3062, %v2995
    %v3092 = vmul.f32 %v3067, %v2996
    %v3093 = vmul.f32 %v3072, %v2997
    %v3094 = vmul.f32 %v3077, %v2998
    %v3095 = vsel %vm306, %v3079, 0.0
    %v3096 = vrot.slane %v3095, 4
    %v3097 = vadd.f32 %v3095, %v3096
    %v3098 = vrot.slane %v3097, 2
    %v3099 = vadd.f32 %v3097, %v3098
    %v3100 = vrot.slane %v3099, 1
    %v3101 = vadd.f32 %v3099, %v3100
    %v3102 = vsel %vm306, %v3080, 0.0
    %v3103 = vrot.slane %v3102, 4
    %v3104 = vadd.f32 %v3102, %v3103
    %v3105 = vrot.slane %v3104, 2
    %v3106 = vadd.f32 %v3104, %v3105
    %v3107 = vrot.slane %v3106, 1
    %v3108 = vadd.f32 %v3106, %v3107
    %v3109 = vsel %vm306, %v3081, 0.0
    %v3110 = vrot.slane %v3109, 4
    %v3111 = vadd.f32 %v3109, %v3110
    %v3112 = vrot.slane %v3111, 2
    %v3113 = vadd.f32 %v3111, %v3112
    %v3114 = vrot.slane %v3113, 1
    %v3115 = vadd.f32 %v3113, %v3114
    %v3116 = vsel %vm306, %v3082, 0.0
    %v3117 = vrot.slane %v3116, 4
    %v3118 = vadd.f32 %v3116, %v3117
    %v3119 = vrot.slane %v3118, 2
    %v3120 = vadd.f32 %v3118, %v3119
    %v3121 = vrot.slane %v3120, 1
    %v3122 = vadd.f32 %v3120, %v3121
    %v3123 = vsel %vm306, %v3083, 0.0
    %v3124 = vrot.slane %v3123, 4
    %v3125 = vadd.f32 %v3123, %v3124
    %v3126 = vrot.slane %v3125, 2
    %v3127 = vadd.f32 %v3125, %v3126
    %v3128 = vrot.slane %v3127, 1
    %v3129 = vadd.f32 %v3127, %v3128
    %v3130 = vsel %vm306, %v3084, 0.0
    %v3131 = vrot.slane %v3130, 4
    %v3132 = vadd.f32 %v3130, %v3131
    %v3133 = vrot.slane %v3132, 2
    %v3134 = vadd.f32 %v3132, %v3133
    %v3135 = vrot.slane %v3134, 1
    %v3136 = vadd.f32 %v3134, %v3135
    %v3137 = vsel %vm306, %v3085, 0.0
    %v3138 = vrot.slane %v3137, 4
    %v3139 = vadd.f32 %v3137, %v3138
    %v3140 = vrot.slane %v3139, 2
    %v3141 = vadd.f32 %v3139, %v3140
    %v3142 = vrot.slane %v3141, 1
    %v3143 = vadd.f32 %v3141, %v3142
    %v3144 = vsel %vm306, %v3086, 0.0
    %v3145 = vrot.slane %v3144, 4
    %v3146 = vadd.f32 %v3144, %v3145
    %v3147 = vrot.slane %v3146, 2
    %v3148 = vadd.f32 %v3146, %v3147
    %v3149 = vrot.slane %v3148, 1
    %v3150 = vadd.f32 %v3148, %v3149
    %v3151 = vsel %vm306, %v3087, 0.0
    %v3152 = vrot.slane %v3151, 4
    %v3153 = vadd.f32 %v3151, %v3152
    %v3154 = vrot.slane %v3153, 2
    %v3155 = vadd.f32 %v3153, %v3154
    %v3156 = vrot.slane %v3155, 1
    %v3157 = vadd.f32 %v3155, %v3156
    %v3158 = vsel %vm306, %v3088, 0.0
    %v3159 = vrot.slane %v3158, 4
    %v3160 = vadd.f32 %v3158, %v3159
    %v3161 = vrot.slane %v3160, 2
    %v3162 = vadd.f32 %v3160, %v3161
    %v3163 = vrot.slane %v3162, 1
    %v3164 = vadd.f32 %v3162, %v3163
    %v3165 = vsel %vm306, %v3089, 0.0
    %v3166 = vrot.slane %v3165, 4
    %v3167 = vadd.f32 %v3165, %v3166
    %v3168 = vrot.slane %v3167, 2
    %v3169 = vadd.f32 %v3167, %v3168
    %v3170 = vrot.slane %v3169, 1
    %v3171 = vadd.f32 %v3169, %v3170
    %v3172 = vsel %vm306, %v3090, 0.0
    %v3173 = vrot.slane %v3172, 4
    %v3174 = vadd.f32 %v3172, %v3173
    %v3175 = vrot.slane %v3174, 2
    %v3176 = vadd.f32 %v3174, %v3175
    %v3177 = vrot.slane %v3176, 1
    %v3178 = vadd.f32 %v3176, %v3177
    %v3179 = vsel %vm306, %v3091, 0.0
    %v3180 = vrot.slane %v3179, 4
    %v3181 = vadd.f32 %v3179, %v3180
    %v3182 = vrot.slane %v3181, 2
    %v3183 = vadd.f32 %v3181, %v3182
    %v3184 = vrot.slane %v3183, 1
    %v3185 = vadd.f32 %v3183, %v3184
    %v3186 = vsel %vm306, %v3092, 0.0
    %v3187 = vrot.slane %v3186, 4
    %v3188 = vadd.f32 %v3186, %v3187
    %v3189 = vrot.slane %v3188, 2
    %v3190 = vadd.f32 %v3188, %v3189
    %v3191 = vrot.slane %v3190, 1
    %v3192 = vadd.f32 %v3190, %v3191
    %v3193 = vsel %vm306, %v3093, 0.0
    %v3194 = vrot.slane %v3193, 4
    %v3195 = vadd.f32 %v3193, %v3194
    %v3196 = vrot.slane %v3195, 2
    %v3197 = vadd.f32 %v3195, %v3196
    %v3198 = vrot.slane %v3197, 1
    %v3199 = vadd.f32 %v3197, %v3198
    %v3200 = vsel %vm306, %v3094, 0.0
    %v3201 = vrot.slane %v3200, 4
    %v3202 = vadd.f32 %v3200, %v3201
    %v3203 = vrot.slane %v3202, 2
    %v3204 = vadd.f32 %v3202, %v3203
    %v3205 = vrot.slane %v3204, 1
    %v3206 = vadd.f32 %v3204, %v3205
    %v3207 = vpack.c.bf16 %v1629, %v1629
    %v3208 = vpack.c.bf16 %v1636, %v1636
    %v3209 = vpack.c.bf16 %v1643, %v1643
    %v3210 = vpack.c.bf16 %v1650, %v1650
    %v3211 = vpack.c.bf16 %v1657, %v1657
    %v3212 = vpack.c.bf16 %v1664, %v1664
    %v3213 = vpack.c.bf16 %v1671, %v1671
    %v3214 = vpack.c.bf16 %v1678, %v1678
    %v3215 = vpack.c.bf16 %v1685, %v1685
    %v3216 = vpack.c.bf16 %v1692, %v1692
    %v3217 = vpack.c.bf16 %v1699, %v1699
    %v3218 = vpack.c.bf16 %v1706, %v1706
    %v3219 = vpack.c.bf16 %v1713, %v1713
    %v3220 = vpack.c.bf16 %v1720, %v1720
    %v3221 = vpack.c.bf16 %v1727, %v1727
    %v3222 = vpack.c.bf16 %v1734, %v1734
    %v3223 = vld [vmem:[%s5 + $0x60] sm:$0xf]
    %v3224 = vld [vmem:[%s5 + $0x64] sm:$0xf]
    %v3225 = vld [vmem:[%s5 + $0x68] sm:$0xf]
    %v3226 = vld [vmem:[%s5 + $0x6c] sm:$0xf]
    %v3227 = vpack.c.bf16 %v3101, %v3101
    %v3228 = vpack.c.bf16 %v3108, %v3108
    %v3229 = vpack.c.bf16 %v3115, %v3115
    %v3230 = vpack.c.bf16 %v3122, %v3122
    %v3231 = vpack.c.bf16 %v3129, %v3129
    %v3232 = vpack.c.bf16 %v3136, %v3136
    %v3233 = vpack.c.bf16 %v3143, %v3143
    %v3234 = vpack.c.bf16 %v3150, %v3150
    %v3235 = vpack.c.bf16 %v3157, %v3157
    %v3236 = vpack.c.bf16 %v3164, %v3164
    %v3237 = vpack.c.bf16 %v3171, %v3171
    %v3238 = vpack.c.bf16 %v3178, %v3178
    %v3239 = vpack.c.bf16 %v3185, %v3185
    %v3240 = vpack.c.bf16 %v3192, %v3192
    %v3241 = vpack.c.bf16 %v3199, %v3199
    %v3242 = vpack.c.bf16 %v3206, %v3206
    %v3243 = vld [vmem:[%s5 + $0x70] sm:$0xf]
    %v3244 = vld [vmem:[%s5 + $0x74] sm:$0xf]
    %v3245 = vld [vmem:[%s5 + $0x78] sm:$0xf]
    %v3246 = vld [vmem:[%s5 + $0x7c] sm:$0xf]
    %v3263 = vunpack.c.l.b16 %v3227
    %v3264 = vunpack.c.l.b16 %v3228
    %v3265 = vunpack.c.l.b16 %v3229
    %v3266 = vunpack.c.l.b16 %v3230
    %v3267 = vunpack.c.l.b16 %v3231
    %v3268 = vunpack.c.l.b16 %v3232
    %v3269 = vunpack.c.l.b16 %v3233
    %v3270 = vunpack.c.l.b16 %v3234
    %v3271 = vunpack.c.l.b16 %v3235
    %v3272 = vunpack.c.l.b16 %v3236
    %v3273 = vunpack.c.l.b16 %v3237
    %v3274 = vunpack.c.l.b16 %v3238
    %v3275 = vunpack.c.l.b16 %v3239
    %v3276 = vunpack.c.l.b16 %v3240
    %v3277 = vunpack.c.l.b16 %v3241
    %v3278 = vunpack.c.l.b16 %v3242
    %v3279 = vsel %vm1117, %v3264, %v3263
    %v3280 = vsel %vm1119, %v3265, %v3279
    %v3281 = vsel %vm1121, %v3266, %v3280
    %v3282 = vsel %vm1123, %v3267, %v3281
    %v3283 = vsel %vm1125, %v3268, %v3282
    %v3284 = vsel %vm1127, %v3269, %v3283
    %v3285 = vsel %vm1129, %v3270, %v3284
    %v3286 = vsel %vm1117, %v3272, %v3271
    %v3287 = vsel %vm1119, %v3273, %v3286
    %v3288 = vsel %vm1121, %v3274, %v3287
    %v3289 = vsel %vm1123, %v3275, %v3288
    %v3290 = vsel %vm1125, %v3276, %v3289
    %v3291 = vsel %vm1127, %v3277, %v3290
    %v3292 = vsel %vm1129, %v3278, %v3291
    %v3293 = vpack.c.b16 %v3292, %v3285
    %v3298 = vunpack.c.l.b16 %v3243
    %v3299 = vunpack.c.l.b16 %v3244
    %v3300 = vunpack.c.l.b16 %v3245
    %v3301 = vunpack.c.l.b16 %v3246
    %v3302 = vpack.c.b16 %v3299, %v3298
    %v3303 = vpack.c.b16 %v3301, %v3300
    %v3307 = vsel %vm306, %v3293, 0
    %3309 = vmatprep.subr.bf16.mxu0 0
    %3310 = vmatpush1.bf16.msra.mxu0 %v3302
    %3311 = vmatprep.subr.bf16.mxu0 0
    %3312 = vmatpush1.bf16.msra.mxu0 %v3303
    %3313 = vmatprep.subr.bf16.mxu0 0
    %3314 = vmatpush1.bf16.msra.mxu0 0
    %3315 = vmatprep.subr.bf16.mxu0 0
    %3316 = vmatpush1.bf16.msra.mxu0 0
    %3317 = vmatprep.subr.bf16.mxu0 0
    %3318 = vmatpush1.bf16.msra.mxu0 0
    %3319 = vmatprep.subr.bf16.mxu0 0
    %3320 = vmatpush1.bf16.msra.mxu0 0
    %3321 = vmatprep.subr.bf16.mxu0 0
    %3322 = vmatpush1.bf16.msra.mxu0 0
    %3323 = vmatprep.subr.bf16.mxu0 0
    %3324 = vmatpush1.bf16.msra.mxu0 0
    %3325 = vmatprep.subr.bf16.mxu0 0
    %3326 = vmatpush1.bf16.msra.mxu0 0
    %3327 = vmatprep.subr.bf16.mxu0 0
    %3328 = vmatpush1.bf16.msra.mxu0 0
    %3329 = vmatprep.subr.bf16.mxu0 0
    %3330 = vmatpush1.bf16.msra.mxu0 0
    %3331 = vmatprep.subr.bf16.mxu0 0
    %3332 = vmatpush1.bf16.msra.mxu0 0
    %3333 = vmatprep.subr.bf16.mxu0 0
    %3334 = vmatpush1.bf16.msra.mxu0 0
    %3335 = vmatprep.subr.bf16.mxu0 0
    %3336 = vmatpush1.bf16.msra.mxu0 0
    %3337 = vmatprep.subr.bf16.mxu0 0
    %3338 = vmatpush1.bf16.msra.mxu0 0
    %3339 = vmatprep.subr.bf16.mxu0 0
    %3340 = vmatpush1.bf16.msra.mxu0 0
    %3341 = vmatprep.mubr.bf16.mxu0 0
    %3342 = vmatmul.mubr.bf16.gmra.mrb[0].mxu0 %v3307
    %v3343 = vpop.f32.mrb[0].mxu0
    %v3344 = vadd.f32 0.0, %v3343
    %v3345 = vpop.f32.mrb[0].mxu0
    %v3346 = vpop.f32.mrb[0].mxu0
    %v3347 = vadd.f32 0.0, %v3346
    %v3348 = vpop.f32.mrb[0].mxu0
    %3349 = vdwg.mxu0
    %v3366 = vunpack.c.l.b16 %v3207
    %v3367 = vunpack.c.l.b16 %v3208
    %v3368 = vunpack.c.l.b16 %v3209
    %v3369 = vunpack.c.l.b16 %v3210
    %v3370 = vunpack.c.l.b16 %v3211
    %v3371 = vunpack.c.l.b16 %v3212
    %v3372 = vunpack.c.l.b16 %v3213
    %v3373 = vunpack.c.l.b16 %v3214
    %v3374 = vunpack.c.l.b16 %v3215
    %v3375 = vunpack.c.l.b16 %v3216
    %v3376 = vunpack.c.l.b16 %v3217
    %v3377 = vunpack.c.l.b16 %v3218
    %v3378 = vunpack.c.l.b16 %v3219
    %v3379 = vunpack.c.l.b16 %v3220
    %v3380 = vunpack.c.l.b16 %v3221
    %v3381 = vunpack.c.l.b16 %v3222
    %v3382 = vsel %vm1117, %v3367, %v3366
    %v3383 = vsel %vm1119, %v3368, %v3382
    %v3384 = vsel %vm1121, %v3369, %v3383
    %v3385 = vsel %vm1123, %v3370, %v3384
    %v3386 = vsel %vm1125, %v3371, %v3385
    %v3387 = vsel %vm1127, %v3372, %v3386
    %v3388 = vsel %vm1129, %v3373, %v3387
    %v3389 = vsel %vm1117, %v3375, %v3374
    %v3390 = vsel %vm1119, %v3376, %v3389
    %v3391 = vsel %vm1121, %v3377, %v3390
    %v3392 = vsel %vm1123, %v3378, %v3391
    %v3393 = vsel %vm1125, %v3379, %v3392
    %v3394 = vsel %vm1127, %v3380, %v3393
    %v3395 = vsel %vm1129, %v3381, %v3394
    %v3396 = vpack.c.b16 %v3395, %v3388
    %v3401 = vunpack.c.l.b16 %v3223
    %v3402 = vunpack.c.l.b16 %v3224
    %v3403 = vunpack.c.l.b16 %v3225
    %v3404 = vunpack.c.l.b16 %v3226
    %v3405 = vpack.c.b16 %v3402, %v3401
    %v3406 = vpack.c.b16 %v3404, %v3403
    %v3410 = vsel %vm306, %v3396, 0
    %3412 = vmatprep.subr.bf16.mxu0 0
    %3413 = vmatpush1.bf16.msra.mxu0 %v3405
    %3414 = vmatprep.subr.bf16.mxu0 0
    %3415 = vmatpush1.bf16.msra.mxu0 %v3406
    %3416 = vmatprep.subr.bf16.mxu0 0
    %3417 = vmatpush1.bf16.msra.mxu0 0
    %3418 = vmatprep.subr.bf16.mxu0 0
    %3419 = vmatpush1.bf16.msra.mxu0 0
    %3420 = vmatprep.subr.bf16.mxu0 0
    %3421 = vmatpush1.bf16.msra.mxu0 0
    %3422 = vmatprep.subr.bf16.mxu0 0
    %3423 = vmatpush1.bf16.msra.mxu0 0
    %3424 = vmatprep.subr.bf16.mxu0 0
    %3425 = vmatpush1.bf16.msra.mxu0 0
    %3426 = vmatprep.subr.bf16.mxu0 0
    %3427 = vmatpush1.bf16.msra.mxu0 0
    %3428 = vmatprep.subr.bf16.mxu0 0
    %3429 = vmatpush1.bf16.msra.mxu0 0
    %3430 = vmatprep.subr.bf16.mxu0 0
    %3431 = vmatpush1.bf16.msra.mxu0 0
    %3432 = vmatprep.subr.bf16.mxu0 0
    %3433 = vmatpush1.bf16.msra.mxu0 0
    %3434 = vmatprep.subr.bf16.mxu0 0
    %3435 = vmatpush1.bf16.msra.mxu0 0
    %3436 = vmatprep.subr.bf16.mxu0 0
    %3437 = vmatpush1.bf16.msra.mxu0 0
    %3438 = vmatprep.subr.bf16.mxu0 0
    %3439 = vmatpush1.bf16.msra.mxu0 0
    %3440 = vmatprep.subr.bf16.mxu0 0
    %3441 = vmatpush1.bf16.msra.mxu0 0
    %3442 = vmatprep.subr.bf16.mxu0 0
    %3443 = vmatpush1.bf16.msra.mxu0 0
    %3444 = vmatprep.mubr.bf16.mxu0 0
    %3445 = vmatmul.mubr.bf16.gmra.mrb[0].mxu0 %v3410
    %v3446 = vpop.f32.mrb[0].mxu0
    %v3447 = vadd.f32 %v3344, %v3446
    %v3448 = vpop.f32.mrb[0].mxu0
    %v3449 = vpop.f32.mrb[0].mxu0
    %v3450 = vadd.f32 %v3347, %v3449
    %v3451 = vpop.f32.mrb[0].mxu0
    %3452 = vdwg.mxu0
    %v3453 = vld [vmem:[%s6 + $0x3] sm:$0x1]
    %v3454 = vlaneseq
    %v3455 = vshrl.u32 %v3454, 7
    %v3456 = vsub.s32 0, %v3455
    %v3457 = vrot.slane %v3453, %v3456
    %v3458 = vadd.f32 %v3447, %v3457
    %v3459 = vadd.f32 %v3450, %v3457
    %v3460 = vmax.f32 %v3458, 0.0
    %v3461 = vmax.f32 %v3459, 0.0
    %v3462 = vpack.c.bf16 %v3461, %v3460
    %v3463 = vld [vmem:[%s5 + $0x80] sm:$0xf]
    %v3464 = vld [vmem:[%s5 + $0x84] sm:$0xf]
    %v3465 = vld [vmem:[%s5 + $0x88] sm:$0xf]
    %v3466 = vld [vmem:[%s5 + $0x8c] sm:$0xf]
    %v3467 = vld [vmem:[%s5 + $0x90] sm:$0xf]
    %v3468 = vld [vmem:[%s5 + $0x94] sm:$0xf]
    %v3469 = vld [vmem:[%s5 + $0x98] sm:$0xf]
    %v3470 = vld [vmem:[%s5 + $0x9c] sm:$0xf]
    %v3475 = vunpack.c.l.b16 %v3467
    %v3476 = vunpack.c.l.b16 %v3468
    %v3477 = vunpack.c.l.b16 %v3469
    %v3478 = vunpack.c.l.b16 %v3470
    %v3479 = vpack.c.b16 %v3476, %v3475
    %v3480 = vpack.c.b16 %v3478, %v3477
    %3483 = vmatprep.subr.bf16.mxu0 0
    %3484 = vmatpush1.bf16.msra.mxu0 %v3479
    %3485 = vmatprep.subr.bf16.mxu0 0
    %3486 = vmatpush1.bf16.msra.mxu0 %v3480
    %3487 = vmatprep.subr.bf16.mxu0 0
    %3488 = vmatpush1.bf16.msra.mxu0 0
    %3489 = vmatprep.subr.bf16.mxu0 0
    %3490 = vmatpush1.bf16.msra.mxu0 0
    %3491 = vmatprep.subr.bf16.mxu0 0
    %3492 = vmatpush1.bf16.msra.mxu0 0
    %3493 = vmatprep.subr.bf16.mxu0 0
    %3494 = vmatpush1.bf16.msra.mxu0 0
    %3495 = vmatprep.subr.bf16.mxu0 0
    %3496 = vmatpush1.bf16.msra.mxu0 0
    %3497 = vmatprep.subr.bf16.mxu0 0
    %3498 = vmatpush1.bf16.msra.mxu0 0
    %3499 = vmatprep.subr.bf16.mxu0 0
    %3500 = vmatpush1.bf16.msra.mxu0 0
    %3501 = vmatprep.subr.bf16.mxu0 0
    %3502 = vmatpush1.bf16.msra.mxu0 0
    %3503 = vmatprep.subr.bf16.mxu0 0
    %3504 = vmatpush1.bf16.msra.mxu0 0
    %3505 = vmatprep.subr.bf16.mxu0 0
    %3506 = vmatpush1.bf16.msra.mxu0 0
    %3507 = vmatprep.subr.bf16.mxu0 0
    %3508 = vmatpush1.bf16.msra.mxu0 0
    %3509 = vmatprep.subr.bf16.mxu0 0
    %3510 = vmatpush1.bf16.msra.mxu0 0
    %3511 = vmatprep.subr.bf16.mxu0 0
    %3512 = vmatpush1.bf16.msra.mxu0 0
    %3513 = vmatprep.subr.bf16.mxu0 0
    %3514 = vmatpush1.bf16.msra.mxu0 0
    %3515 = vmatprep.mubr.bf16.mxu0 0
    %3516 = vmatmul.mubr.bf16.gmra.mrb[0].mxu0 %v308
    %v3517 = vpop.f32.mrb[0].mxu0
    %v3518 = vadd.f32 0.0, %v3517
    %v3519 = vpop.f32.mrb[0].mxu0
    %v3520 = vpop.f32.mrb[0].mxu0
    %v3521 = vadd.f32 0.0, %v3520
    %v3522 = vpop.f32.mrb[0].mxu0
    %3523 = vdwg.mxu0
    %v3528 = vunpack.c.l.b16 %v3463
    %v3529 = vunpack.c.l.b16 %v3464
    %v3530 = vunpack.c.l.b16 %v3465
    %v3531 = vunpack.c.l.b16 %v3466
    %v3532 = vpack.c.b16 %v3529, %v3528
    %v3533 = vpack.c.b16 %v3531, %v3530
    %v3537 = vsel %vm306, %v3462, 0
    %3539 = vmatprep.subr.bf16.mxu0 0
    %3540 = vmatpush1.bf16.msra.mxu0 %v3532
    %3541 = vmatprep.subr.bf16.mxu0 0
    %3542 = vmatpush1.bf16.msra.mxu0 %v3533
    %3543 = vmatprep.subr.bf16.mxu0 0
    %3544 = vmatpush1.bf16.msra.mxu0 0
    %3545 = vmatprep.subr.bf16.mxu0 0
    %3546 = vmatpush1.bf16.msra.mxu0 0
    %3547 = vmatprep.subr.bf16.mxu0 0
    %3548 = vmatpush1.bf16.msra.mxu0 0
    %3549 = vmatprep.subr.bf16.mxu0 0
    %3550 = vmatpush1.bf16.msra.mxu0 0
    %3551 = vmatprep.subr.bf16.mxu0 0
    %3552 = vmatpush1.bf16.msra.mxu0 0
    %3553 = vmatprep.subr.bf16.mxu0 0
    %3554 = vmatpush1.bf16.msra.mxu0 0
    %3555 = vmatprep.subr.bf16.mxu0 0
    %3556 = vmatpush1.bf16.msra.mxu0 0
    %3557 = vmatprep.subr.bf16.mxu0 0
    %3558 = vmatpush1.bf16.msra.mxu0 0
    %3559 = vmatprep.subr.bf16.mxu0 0
    %3560 = vmatpush1.bf16.msra.mxu0 0
    %3561 = vmatprep.subr.bf16.mxu0 0
    %3562 = vmatpush1.bf16.msra.mxu0 0
    %3563 = vmatprep.subr.bf16.mxu0 0
    %3564 = vmatpush1.bf16.msra.mxu0 0
    %3565 = vmatprep.subr.bf16.mxu0 0
    %3566 = vmatpush1.bf16.msra.mxu0 0
    %3567 = vmatprep.subr.bf16.mxu0 0
    %3568 = vmatpush1.bf16.msra.mxu0 0
    %3569 = vmatprep.subr.bf16.mxu0 0
    %3570 = vmatpush1.bf16.msra.mxu0 0
    %3571 = vmatprep.mubr.bf16.mxu0 0
    %3572 = vmatmul.mubr.bf16.gmra.mrb[0].mxu0 %v3537
    %v3573 = vpop.f32.mrb[0].mxu0
    %v3574 = vadd.f32 %v3518, %v3573
    %v3575 = vpop.f32.mrb[0].mxu0
    %v3576 = vpop.f32.mrb[0].mxu0
    %v3577 = vadd.f32 %v3521, %v3576
    %v3578 = vpop.f32.mrb[0].mxu0
    %3579 = vdwg.mxu0
    %v3580 = vld [vmem:[%s6 + $0x4] sm:$0x1]
    %v3581 = vlaneseq
    %v3582 = vshrl.u32 %v3581, 7
    %v3583 = vsub.s32 0, %v3582
    %v3584 = vrot.slane %v3580, %v3583
    %v3585 = vadd.f32 %v3574, %v3584
    %v3586 = vadd.f32 %v3577, %v3584
    %3587 = vst.msk [vmem:[%s8] sm:$0xff] %vm306, %v3585
    %3588 = vst.msk [vmem:[%s8 + $0x8] sm:$0xff] %vm306, %v3586
    // Predicated region
    $region38: #{user_encoder_rate.1} parent=1 // pred_check
      _
    $region39: #{user_encoder_rate.1} parent=1 // pred_check_branch
      %3590 = sbr.rel (0) target = $region41
    $region40: #{user_encoder_rate.1} parent=1 // pred_region
      _
    $region41: #{user_encoder_rate.1} parent=1 // pred_fallthru
      _
    // Predicated region
    $region42: #{user_encoder_rate.1} parent=1 // pred_check
      _
    $region43: #{user_encoder_rate.1} parent=1 // pred_check_branch
      %3592 = sbr.rel (0) target = $region45
    $region44: #{user_encoder_rate.1} parent=1 // pred_region
      _
    $region45: #{user_encoder_rate.1} parent=1 // pred_fallthru
      _
    %3593 = vsyncpa [#allocation3], 1

</llo_original>
